<compile_context>
chip_gen: v7x
topology: tpu7x:2x2x1
jax: 0.10.0
libtpu: 0.0.40
codegen_flags: <defaults>
</compile_context>

<pallas_src>
import functools

import numpy as np
import jax
import jax.numpy as jnp
from jax import lax
from jax.experimental import pallas as pl
from jax.experimental.pallas import tpu as pltpu

EPS = 1e-5
NEG_SLOPE = 0.01            # nn.LeakyReLU() default
KSIZE, STRIDE, PAD = 4, 2, 1
N_TAPS = KSIZE * KSIZE
C_IN, C1, C2, C3 = 3, 64, 32, 16   # channel plan fixed by the module
OUT_LANES = 128             # final conv padded to 128 channels -> lane-dense store


# ----------------------------------------------------------------------------
# In-kernel helpers
# ----------------------------------------------------------------------------
def _bn_lrelu(y, gamma, beta):
    """Training-mode BatchNorm2d (batch stats over rows == N*H*W, biased var,
    eps=1e-5) + LeakyReLU(0.01).  Single-pass stats; gamma*rsqrt folded into
    one scale so normalization is one FMA over [P, C]."""
    inv_p = 1.0 / y.shape[0]
    s1 = jnp.sum(y, axis=0, keepdims=True)
    s2 = jnp.sum(y * y, axis=0, keepdims=True)
    mean = s1 * inv_p
    var = jnp.maximum(s2 * inv_p - mean * mean, 0.0)
    scale = gamma * lax.rsqrt(var + EPS)
    shift = beta - mean * scale
    z = y * scale + shift
    return jnp.where(z >= 0, z, NEG_SLOPE * z)


def _gather_patches(n_batch, a_prev, sel_ref, patch_ref):
    """Build the column-expanded im2col patch matrix for a 4x4/s2/p1 conv.

    a_prev   : [n_batch*Pin, Cin] bf16 activation (row = flat n,h,w position)
    sel_ref  : [N_TAPS*Pout, Pin] bf16 per-image 0/1 tap-selection matrix
               (all-zero rows realize the conv zero padding)
    patch_ref: [n_batch*Pout, N_TAPS*Cin] bf16 VMEM scratch (fully written).

    One MXU matmul per image gathers all 16 taps at once; 16 static
    column-block stores lay the tap-major rows out in long-K form.  Pure
    VMEM ld/st -- no in-kernel reshape/transpose needed.
    """
    pout = sel_ref.shape[0] // N_TAPS
    pin = sel_ref.shape[1]
    cin = a_prev.shape[1]
    sel = sel_ref[...]
    for b in range(n_batch):                       # static, unrolled at trace
        a_b = a_prev[b * pin:(b + 1) * pin, :]
        q = jnp.dot(sel, a_b, preferred_element_type=jnp.float32)
        q = q.astype(jnp.bfloat16)                 # exact: q is a 0/1 gather of bf16
        for t in range(N_TAPS):
            patch_ref[b * pout:(b + 1) * pout, t * cin:(t + 1) * cin] = \
                q[t * pout:(t + 1) * pout, :]


def _fused_kernel(n_batch,
                  p1_ref, w1_ref, g1_ref, b1_ref,
                  sel2_ref, w2_ref, g2_ref, b2_ref,
                  sel3_ref, w3_ref, g3_ref, b3_ref,
                  o_ref, patch2_ref, patch3_ref):
    # Layer 1: host-side im2col patches -> one long-K MXU matmul (bf16, f32 acc).
    y1 = jnp.dot(p1_ref[...], w1_ref[...], preferred_element_type=jnp.float32)
    a1 = _bn_lrelu(y1, g1_ref[...], b1_ref[...]).astype(jnp.bfloat16)

    # Layer 2: in-VMEM gather + one [P2, 16*C1] @ [16*C1, C2] matmul.
    _gather_patches(n_batch, a1, sel2_ref, patch2_ref)
    y2 = jnp.dot(patch2_ref[...], w2_ref[...], preferred_element_type=jnp.float32)
    a2 = _bn_lrelu(y2, g2_ref[...], b2_ref[...]).astype(jnp.bfloat16)

    # Layer 3: same scheme; output channels padded to 128 lanes so the final
    # store is a full-lane unmasked vst.
    _gather_patches(n_batch, a2, sel3_ref, patch3_ref)
    y3 = jnp.dot(patch3_ref[...], w3_ref[...], preferred_element_type=jnp.float32)
    o_ref[...] = _bn_lrelu(y3, g3_ref[...], b3_ref[...])


def _full_spec(shape):
    return pl.BlockSpec(shape, lambda i: (0,) * len(shape))


# ----------------------------------------------------------------------------
# Host-side glue (one-time param repack + im2col on the external input)
# ----------------------------------------------------------------------------
def extract_patches(x_nhwc):
    """(N,H,W,C) -> ([N*Ho*Wo, 16*C], (N,Ho,Wo)) im2col for a 4x4/s2/p1 conv."""
    x = jnp.pad(x_nhwc, ((0, 0), (PAD, PAD), (PAD, PAD), (0, 0)))
    n, hp, wp, c = x.shape
    ho = (hp - KSIZE) // STRIDE + 1
    wo = (wp - KSIZE) // STRIDE + 1
    pieces = []
    for i in range(KSIZE):
        for j in range(KSIZE):
            pieces.append(x[:, i:i + ho * STRIDE:STRIDE,
                            j:j + wo * STRIDE:STRIDE, :])
    p = jnp.stack(pieces, axis=3)                         # (N,Ho,Wo,16,C)
    return p.reshape(n * ho * wo, KSIZE * KSIZE * c), (n, ho, wo)


def _make_selection_matrix(hi, wi):
    """Per-image 0/1 matrix [N_TAPS*Ho*Wo, Hi*Wi]: row (t*Pout + po) selects
    the input row feeding tap t of output position po (all-zero row where the
    tap falls in the conv zero padding)."""
    ho, wo = hi // STRIDE, wi // STRIDE
    p_out, p_in = ho * wo, hi * wi
    s = np.zeros((N_TAPS * p_out, p_in), np.float32)
    for oh in range(ho):
        for ow in range(wo):
            po = oh * wo + ow
            for kh in range(KSIZE):
                for kw in range(KSIZE):
                    ih = oh * STRIDE - PAD + kh
                    iw = ow * STRIDE - PAD + kw
                    if 0 <= ih < hi and 0 <= iw < wi:
                        s[(kh * KSIZE + kw) * p_out + po, ih * wi + iw] = 1.0
    return s


def _repack_w_matmul(w_oihw):
    cout, cin, kh, kw = w_oihw.shape
    return jnp.transpose(w_oihw, (2, 3, 1, 0)).reshape(kh * kw * cin, cout)


def prepare_params(params, spatial_hw):
    """One-time repack of PyTorch-layout params (batch-size independent).
    Conv biases are dropped: exact under training-mode BatchNorm (batch
    statistics).  If eval-mode / running-stats BN is ever needed, keep them."""
    h, w = spatial_hw
    (w1, _b1, g1, be1), (w2, _b2, g2, be2), (w3, _b3, g3, be3) = params
    row = lambda v: v.reshape(1, -1).astype(jnp.float32)
    bf = lambda a: a.astype(jnp.bfloat16)

    w3m = _repack_w_matmul(w3)                               # [16*C2, C3]
    pad = OUT_LANES - w3m.shape[1]
    w3m = jnp.pad(w3m, ((0, 0), (0, pad)))                   # zero channels
    g3p = jnp.pad(row(g3), ((0, 0), (0, pad)))
    be3p = jnp.pad(row(be3), ((0, 0), (0, pad)))

    return (bf(_repack_w_matmul(w1)), row(g1), row(be1),
            jnp.asarray(_make_selection_matrix(h // 2, w // 2), jnp.bfloat16),
            bf(_repack_w_matmul(w2)), row(g2), row(be2),
            jnp.asarray(_make_selection_matrix(h // 4, w // 4), jnp.bfloat16),
            bf(w3m), g3p, be3p)


# ----------------------------------------------------------------------------
# Full discriminator forward (single fused pallas_call)
# ----------------------------------------------------------------------------
@jax.jit
def dcgan_sn_discriminator(x_nchw, packed):
    (w1m, g1, b1, sel2, w2m, g2, b2, sel3, w3m, g3, b3) = packed
    n, _, h, w = x_nchw.shape
    x = jnp.transpose(x_nchw, (0, 2, 3, 1))                  # NCHW -> NHWC
    patches1, _ = extract_patches(x)                         # [N*(H/2)*(W/2), 48]
    patches1 = patches1.astype(jnp.bfloat16)

    p2 = n * (h // 4) * (w // 4)                             # layer-2 output rows
    p3 = n * (h // 8) * (w // 8)                             # layer-3 output rows
    operands = (patches1, w1m, g1, b1, sel2, w2m, g2, b2, sel3, w3m, g3, b3)

    mm = lambda m, k, nn: 2 * m * k * nn
    flops = (mm(patches1.shape[0], patches1.shape[1], C1)
             + n * mm(sel2.shape[0], sel2.shape[1], C1) + mm(p2, N_TAPS * C1, C2)
             + n * mm(sel3.shape[0], sel3.shape[1], C2) + mm(p3, N_TAPS * C2, OUT_LANES))
    bytes_accessed = (sum(op.size * op.dtype.itemsize for op in operands)
                      + p3 * OUT_LANES * 4)

    out_pad = pl.pallas_call(
        functools.partial(_fused_kernel, n),
        out_shape=jax.ShapeDtypeStruct((p3, OUT_LANES), jnp.float32),
        grid=(1,),
        in_specs=[_full_spec(op.shape) for op in operands],
        out_specs=_full_spec((p3, OUT_LANES)),
        scratch_shapes=[pltpu.VMEM((p2, N_TAPS * C1), jnp.bfloat16),
                        pltpu.VMEM((p3, N_TAPS * C2), jnp.bfloat16)],
        # Total footprint < 1 MiB; if batch/resolution grow, set
        # vmem_limit_bytes explicitly (v7x scoped default is 32 MiB).
        compiler_params=pltpu.CompilerParams(
            dimension_semantics=("arbitrary",)),
        cost_estimate=pl.CostEstimate(flops=flops,
                                      transcendentals=C1 + C2 + OUT_LANES,
                                      bytes_accessed=bytes_accessed),
    )(*operands)

    hf, wf = h // 8, w // 8
    out = out_pad[:, :C3]                                    # drop lane padding
    return jnp.transpose(out.reshape(n, hf, wf, C3), (0, 3, 1, 2))


# ----------------------------------------------------------------------------
# Pure-JAX reference (mirrors PyTorch; optional bf16 matmul operands)
# ----------------------------------------------------------------------------
def reference_forward(x_nchw, params, matmul_dtype=jnp.float32):
    x = x_nchw
    for (w, b, g, be) in params:
        y = lax.conv_general_dilated(
            x.astype(matmul_dtype), w.astype(matmul_dtype),
            window_strides=(2, 2), padding=((1, 1), (1, 1)),
            dimension_numbers=("NCHW", "OIHW", "NCHW"),
            preferred_element_type=jnp.float32)
        y = y + b.reshape(1, -1, 1, 1)
        mean = jnp.mean(y, axis=(0, 2, 3), keepdims=True)
        var = jnp.mean((y - mean) ** 2, axis=(0, 2, 3), keepdims=True)
        y = (y - mean) * lax.rsqrt(var + EPS)
        y = y * g.reshape(1, -1, 1, 1) + be.reshape(1, -1, 1, 1)
        x = jnp.where(y >= 0, y, NEG_SLOPE * y)
    return x


def init_params(key):
    """Deterministic parameter init matching the module's shapes."""
    layer_defs = [(C_IN, C1), (C1, C2), (C2, C3)]
    params = []
    for idx, (cin, cout) in enumerate(layer_defs):
        k_w, k_b, k_g, k_be, key = jax.random.split(
            jax.random.fold_in(key, idx), 5)
        w = jax.random.normal(k_w, (cout, cin, 4, 4), jnp.float32) * 0.05
        b = jax.random.normal(k_b, (cout,), jnp.float32) * 0.01
        g = 1.0 + 0.1 * jax.random.normal(k_g, (cout,), jnp.float32)
        be = 0.1 * jax.random.normal(k_be, (cout,), jnp.float32)
        params.append((w, b, g, be))
    return params


if __name__ == "__main__":
    key = jax.random.PRNGKey(0)
    params = init_params(key)
    x = jax.random.normal(jax.random.fold_in(key, 123), (2, 3, 16, 16),
                          jnp.float32)

    packed = prepare_params(params, (16, 16))     # one-time repack
    out = jax.block_until_ready(dcgan_sn_discriminator(x, packed))
    assert out.shape == (2, 16, 2, 2), out.shape

    # Apples-to-apples check: reference with the same bf16 matmul operands.
    ref_bf16 = jax.block_until_ready(
        reference_forward(x, params, matmul_dtype=jnp.bfloat16))
    assert jnp.allclose(out, ref_bf16, atol=2e-2, rtol=2e-2), \
        float(jnp.max(jnp.abs(out - ref_bf16)))

    # Loose sanity check against the exact f32 PyTorch-semantics forward
    # (the remaining difference is bf16 matmul-operand rounding only).
    ref_f32 = jax.block_until_ready(reference_forward(x, params))
    assert jnp.allclose(out, ref_f32, atol=0.3, rtol=0.1), \
        float(jnp.max(jnp.abs(out - ref_f32)))

    print("KERNEL_OK")
</pallas_src>

<mosaic_0001>
module attributes {stable_mosaic.version = 11 : i64} {
  func.func @_fused_kernel(%arg0: i32, %arg1: memref<128x48xbf16, #tpu.memory_space<vmem>>, %arg2: memref<48x64xbf16, #tpu.memory_space<vmem>>, %arg3: memref<1x64xf32, #tpu.memory_space<vmem>>, %arg4: memref<1x64xf32, #tpu.memory_space<vmem>>, %arg5: memref<256x64xbf16, #tpu.memory_space<vmem>>, %arg6: memref<1024x32xbf16, #tpu.memory_space<vmem>>, %arg7: memref<1x32xf32, #tpu.memory_space<vmem>>, %arg8: memref<1x32xf32, #tpu.memory_space<vmem>>, %arg9: memref<64x16xbf16, #tpu.memory_space<vmem>>, %arg10: memref<512x128xbf16, #tpu.memory_space<vmem>>, %arg11: memref<1x128xf32, #tpu.memory_space<vmem>>, %arg12: memref<1x128xf32, #tpu.memory_space<vmem>>, %arg13: memref<8x128xf32, #tpu.memory_space<vmem>>, %arg14: memref<32x1024xbf16, #tpu.memory_space<vmem>>, %arg15: memref<8x512xbf16, #tpu.memory_space<vmem>>) attributes {dimension_semantics = [#tpu.dimension_semantics<arbitrary>], iteration_bounds = array<i64: 1>, scalar_prefetch = 0 : i64, scratch_operands = 2 : i64, tpu.core_type = #tpu.core_type<tc>, window_params = [{pipeline_mode = #tpu.pipeline_mode<synchronous>, transform_indices = @transform_0, window_bounds = array<i64: 128, 48>}, {pipeline_mode = #tpu.pipeline_mode<synchronous>, transform_indices = @transform_1, window_bounds = array<i64: 48, 64>}, {pipeline_mode = #tpu.pipeline_mode<synchronous>, transform_indices = @transform_2, window_bounds = array<i64: 1, 64>}, {pipeline_mode = #tpu.pipeline_mode<synchronous>, transform_indices = @transform_3, window_bounds = array<i64: 1, 64>}, {pipeline_mode = #tpu.pipeline_mode<synchronous>, transform_indices = @transform_4, window_bounds = array<i64: 256, 64>}, {pipeline_mode = #tpu.pipeline_mode<synchronous>, transform_indices = @transform_5, window_bounds = array<i64: 1024, 32>}, {pipeline_mode = #tpu.pipeline_mode<synchronous>, transform_indices = @transform_6, window_bounds = array<i64: 1, 32>}, {pipeline_mode = #tpu.pipeline_mode<synchronous>, transform_indices = @transform_7, window_bounds = array<i64: 1, 32>}, {pipeline_mode = #tpu.pipeline_mode<synchronous>, transform_indices = @transform_8, window_bounds = array<i64: 64, 16>}, {pipeline_mode = #tpu.pipeline_mode<synchronous>, transform_indices = @transform_9, window_bounds = array<i64: 512, 128>}, {pipeline_mode = #tpu.pipeline_mode<synchronous>, transform_indices = @transform_10, window_bounds = array<i64: 1, 128>}, {pipeline_mode = #tpu.pipeline_mode<synchronous>, transform_indices = @transform_11, window_bounds = array<i64: 1, 128>}, {pipeline_mode = #tpu.pipeline_mode<synchronous>, transform_indices = @transform_12, window_bounds = array<i64: 8, 128>}]} {
    %c0 = arith.constant 0 : index
    %c0_0 = arith.constant 0 : index
    %0 = vector.load %arg1[%c0, %c0_0] : memref<128x48xbf16, #tpu.memory_space<vmem>>, vector<128x48xbf16>
    %c0_1 = arith.constant 0 : index
    %c0_2 = arith.constant 0 : index
    %1 = vector.load %arg2[%c0_1, %c0_2] : memref<48x64xbf16, #tpu.memory_space<vmem>>, vector<48x64xbf16>
    %cst = arith.constant dense<0.000000e+00> : vector<128x64xf32>
    %2 = tpu.matmul %0, %1, %cst {dimension_numbers = #tpu.dot_dimension_numbers<[1], [0], [0], [1], [0, 0, 1, 1], [], []>} : vector<128x48xbf16>, vector<48x64xbf16>, vector<128x64xf32> -> vector<128x64xf32>
    %c0_3 = arith.constant 0 : index
    %c0_4 = arith.constant 0 : index
    %3 = vector.load %arg3[%c0_3, %c0_4] : memref<1x64xf32, #tpu.memory_space<vmem>>, vector<1x64xf32>
    %c0_5 = arith.constant 0 : index
    %c0_6 = arith.constant 0 : index
    %4 = vector.load %arg4[%c0_5, %c0_6] : memref<1x64xf32, #tpu.memory_space<vmem>>, vector<1x64xf32>
    %cst_7 = arith.constant dense<0.000000e+00> : vector<64xf32>
    %5 = vector.multi_reduction <add>, %2, %cst_7 [0] : vector<128x64xf32> to vector<64xf32>
    %6 = vector.shape_cast %5 : vector<64xf32> to vector<1x64xf32>
    %7 = arith.mulf %2, %2 : vector<128x64xf32>
    %cst_8 = arith.constant dense<0.000000e+00> : vector<64xf32>
    %8 = vector.multi_reduction <add>, %7, %cst_8 [0] : vector<128x64xf32> to vector<64xf32>
    %9 = vector.shape_cast %8 : vector<64xf32> to vector<1x64xf32>
    %cst_9 = arith.constant 7.812500e-03 : f32
    %10 = vector.broadcast %cst_9 : f32 to vector<1x64xf32>
    %11 = arith.mulf %6, %10 : vector<1x64xf32>
    %cst_10 = arith.constant 7.812500e-03 : f32
    %12 = vector.broadcast %cst_10 : f32 to vector<1x64xf32>
    %13 = arith.mulf %9, %12 : vector<1x64xf32>
    %14 = arith.mulf %11, %11 : vector<1x64xf32>
    %15 = arith.subf %13, %14 : vector<1x64xf32>
    %cst_11 = arith.constant 0.000000e+00 : f32
    %16 = vector.broadcast %cst_11 : f32 to vector<1x64xf32>
    %17 = arith.maximumf %15, %16 : vector<1x64xf32>
    %cst_12 = arith.constant 9.99999974E-6 : f32
    %18 = vector.broadcast %cst_12 : f32 to vector<1x64xf32>
    %19 = arith.addf %17, %18 : vector<1x64xf32>
    %20 = math.rsqrt %19 : vector<1x64xf32>
    %21 = arith.mulf %3, %20 : vector<1x64xf32>
    %22 = arith.mulf %11, %21 : vector<1x64xf32>
    %23 = arith.subf %4, %22 : vector<1x64xf32>
    %24 = vector.broadcast %21 : vector<1x64xf32> to vector<128x64xf32>
    %25 = arith.mulf %2, %24 : vector<128x64xf32>
    %26 = vector.broadcast %23 : vector<1x64xf32> to vector<128x64xf32>
    %27 = arith.addf %25, %26 : vector<128x64xf32>
    %cst_13 = arith.constant 0.000000e+00 : f32
    %28 = vector.broadcast %cst_13 : f32 to vector<128x64xf32>
    %29 = arith.cmpf oge, %27, %28 : vector<128x64xf32>
    %cst_14 = arith.constant 0.00999999977 : f32
    %30 = vector.broadcast %cst_14 : f32 to vector<128x64xf32>
    %31 = arith.mulf %30, %27 : vector<128x64xf32>
    %32 = arith.select %29, %27, %31 : vector<128x64xi1>, vector<128x64xf32>
    %33 = arith.truncf %32 : vector<128x64xf32> to vector<128x64xbf16>
    %c0_15 = arith.constant 0 : index
    %c0_16 = arith.constant 0 : index
    %34 = vector.load %arg5[%c0_15, %c0_16] : memref<256x64xbf16, #tpu.memory_space<vmem>>, vector<256x64xbf16>
    %35 = vector.extract_strided_slice %33 {offsets = [0, 0], sizes = [64, 64], strides = [1, 1]} : vector<128x64xbf16> to vector<64x64xbf16>
    %cst_17 = arith.constant dense<0.000000e+00> : vector<256x64xf32>
    %36 = tpu.matmul %34, %35, %cst_17 {dimension_numbers = #tpu.dot_dimension_numbers<[1], [0], [0], [1], [0, 0, 1, 1], [], []>} : vector<256x64xbf16>, vector<64x64xbf16>, vector<256x64xf32> -> vector<256x64xf32>
    %37 = arith.truncf %36 : vector<256x64xf32> to vector<256x64xbf16>
    %38 = vector.extract_strided_slice %37 {offsets = [0, 0], sizes = [16, 64], strides = [1, 1]} : vector<256x64xbf16> to vector<16x64xbf16>
    %c0_18 = arith.constant 0 : index
    %c0_19 = arith.constant 0 : index
    %39 = vector.load %arg14[%c0_18, %c0_19] : memref<32x1024xbf16, #tpu.memory_space<vmem>>, vector<16x64xbf16>
    tpu.vector_store %arg14[%c0_18, %c0_19], %38 {strides = array<i32>} : memref<32x1024xbf16, #tpu.memory_space<vmem>>, vector<16x64xbf16>,
    %40 = vector.extract_strided_slice %37 {offsets = [16, 0], sizes = [16, 64], strides = [1, 1]} : vector<256x64xbf16> to vector<16x64xbf16>
    %c0_20 = arith.constant 0 : index
    %c64 = arith.constant 64 : index
    %41 = vector.load %arg14[%c0_20, %c64] : memref<32x1024xbf16, #tpu.memory_space<vmem>>, vector<16x64xbf16>
    tpu.vector_store %arg14[%c0_20, %c64], %40 {strides = array<i32>} : memref<32x1024xbf16, #tpu.memory_space<vmem>>, vector<16x64xbf16>,
    %42 = vector.extract_strided_slice %37 {offsets = [32, 0], sizes = [16, 64], strides = [1, 1]} : vector<256x64xbf16> to vector<16x64xbf16>
    %c0_21 = arith.constant 0 : index
    %c128 = arith.constant 128 : index
    %43 = vector.load %arg14[%c0_21, %c128] : memref<32x1024xbf16, #tpu.memory_space<vmem>>, vector<16x64xbf16>
    tpu.vector_store %arg14[%c0_21, %c128], %42 {strides = array<i32>} : memref<32x1024xbf16, #tpu.memory_space<vmem>>, vector<16x64xbf16>,
    %44 = vector.extract_strided_slice %37 {offsets = [48, 0], sizes = [16, 64], strides = [1, 1]} : vector<256x64xbf16> to vector<16x64xbf16>
    %c0_22 = arith.constant 0 : index
    %c192 = arith.constant 192 : index
    %45 = vector.load %arg14[%c0_22, %c192] : memref<32x1024xbf16, #tpu.memory_space<vmem>>, vector<16x64xbf16>
    tpu.vector_store %arg14[%c0_22, %c192], %44 {strides = array<i32>} : memref<32x1024xbf16, #tpu.memory_space<vmem>>, vector<16x64xbf16>,
    %46 = vector.extract_strided_slice %37 {offsets = [64, 0], sizes = [16, 64], strides = [1, 1]} : vector<256x64xbf16> to vector<16x64xbf16>
    %c0_23 = arith.constant 0 : index
    %c256 = arith.constant 256 : index
    %47 = vector.load %arg14[%c0_23, %c256] : memref<32x1024xbf16, #tpu.memory_space<vmem>>, vector<16x64xbf16>
    tpu.vector_store %arg14[%c0_23, %c256], %46 {strides = array<i32>} : memref<32x1024xbf16, #tpu.memory_space<vmem>>, vector<16x64xbf16>,
    %48 = vector.extract_strided_slice %37 {offsets = [80, 0], sizes = [16, 64], strides = [1, 1]} : vector<256x64xbf16> to vector<16x64xbf16>
    %c0_24 = arith.constant 0 : index
    %c320 = arith.constant 320 : index
    %49 = vector.load %arg14[%c0_24, %c320] : memref<32x1024xbf16, #tpu.memory_space<vmem>>, vector<16x64xbf16>
    tpu.vector_store %arg14[%c0_24, %c320], %48 {strides = array<i32>} : memref<32x1024xbf16, #tpu.memory_space<vmem>>, vector<16x64xbf16>,
    %50 = vector.extract_strided_slice %37 {offsets = [96, 0], sizes = [16, 64], strides = [1, 1]} : vector<256x64xbf16> to vector<16x64xbf16>
    %c0_25 = arith.constant 0 : index
    %c384 = arith.constant 384 : index
    %51 = vector.load %arg14[%c0_25, %c384] : memref<32x1024xbf16, #tpu.memory_space<vmem>>, vector<16x64xbf16>
    tpu.vector_store %arg14[%c0_25, %c384], %50 {strides = array<i32>} : memref<32x1024xbf16, #tpu.memory_space<vmem>>, vector<16x64xbf16>,
    %52 = vector.extract_strided_slice %37 {offsets = [112, 0], sizes = [16, 64], strides = [1, 1]} : vector<256x64xbf16> to vector<16x64xbf16>
    %c0_26 = arith.constant 0 : index
    %c448 = arith.constant 448 : index
    %53 = vector.load %arg14[%c0_26, %c448] : memref<32x1024xbf16, #tpu.memory_space<vmem>>, vector<16x64xbf16>
    tpu.vector_store %arg14[%c0_26, %c448], %52 {strides = array<i32>} : memref<32x1024xbf16, #tpu.memory_space<vmem>>, vector<16x64xbf16>,
    %54 = vector.extract_strided_slice %37 {offsets = [128, 0], sizes = [16, 64], strides = [1, 1]} : vector<256x64xbf16> to vector<16x64xbf16>
    %c0_27 = arith.constant 0 : index
    %c512 = arith.constant 512 : index
    %55 = vector.load %arg14[%c0_27, %c512] : memref<32x1024xbf16, #tpu.memory_space<vmem>>, vector<16x64xbf16>
    tpu.vector_store %arg14[%c0_27, %c512], %54 {strides = array<i32>} : memref<32x1024xbf16, #tpu.memory_space<vmem>>, vector<16x64xbf16>,
    %56 = vector.extract_strided_slice %37 {offsets = [144, 0], sizes = [16, 64], strides = [1, 1]} : vector<256x64xbf16> to vector<16x64xbf16>
    %c0_28 = arith.constant 0 : index
    %c576 = arith.constant 576 : index
    %57 = vector.load %arg14[%c0_28, %c576] : memref<32x1024xbf16, #tpu.memory_space<vmem>>, vector<16x64xbf16>
    tpu.vector_store %arg14[%c0_28, %c576], %56 {strides = array<i32>} : memref<32x1024xbf16, #tpu.memory_space<vmem>>, vector<16x64xbf16>,
    %58 = vector.extract_strided_slice %37 {offsets = [160, 0], sizes = [16, 64], strides = [1, 1]} : vector<256x64xbf16> to vector<16x64xbf16>
    %c0_29 = arith.constant 0 : index
    %c640 = arith.constant 640 : index
    %59 = vector.load %arg14[%c0_29, %c640] : memref<32x1024xbf16, #tpu.memory_space<vmem>>, vector<16x64xbf16>
    tpu.vector_store %arg14[%c0_29, %c640], %58 {strides = array<i32>} : memref<32x1024xbf16, #tpu.memory_space<vmem>>, vector<16x64xbf16>,
    %60 = vector.extract_strided_slice %37 {offsets = [176, 0], sizes = [16, 64], strides = [1, 1]} : vector<256x64xbf16> to vector<16x64xbf16>
    %c0_30 = arith.constant 0 : index
    %c704 = arith.constant 704 : index
    %61 = vector.load %arg14[%c0_30, %c704] : memref<32x1024xbf16, #tpu.memory_space<vmem>>, vector<16x64xbf16>
    tpu.vector_store %arg14[%c0_30, %c704], %60 {strides = array<i32>} : memref<32x1024xbf16, #tpu.memory_space<vmem>>, vector<16x64xbf16>,
    %62 = vector.extract_strided_slice %37 {offsets = [192, 0], sizes = [16, 64], strides = [1, 1]} : vector<256x64xbf16> to vector<16x64xbf16>
    %c0_31 = arith.constant 0 : index
    %c768 = arith.constant 768 : index
    %63 = vector.load %arg14[%c0_31, %c768] : memref<32x1024xbf16, #tpu.memory_space<vmem>>, vector<16x64xbf16>
    tpu.vector_store %arg14[%c0_31, %c768], %62 {strides = array<i32>} : memref<32x1024xbf16, #tpu.memory_space<vmem>>, vector<16x64xbf16>,
    %64 = vector.extract_strided_slice %37 {offsets = [208, 0], sizes = [16, 64], strides = [1, 1]} : vector<256x64xbf16> to vector<16x64xbf16>
    %c0_32 = arith.constant 0 : index
    %c832 = arith.constant 832 : index
    %65 = vector.load %arg14[%c0_32, %c832] : memref<32x1024xbf16, #tpu.memory_space<vmem>>, vector<16x64xbf16>
    tpu.vector_store %arg14[%c0_32, %c832], %64 {strides = array<i32>} : memref<32x1024xbf16, #tpu.memory_space<vmem>>, vector<16x64xbf16>,
    %66 = vector.extract_strided_slice %37 {offsets = [224, 0], sizes = [16, 64], strides = [1, 1]} : vector<256x64xbf16> to vector<16x64xbf16>
    %c0_33 = arith.constant 0 : index
    %c896 = arith.constant 896 : index
    %67 = vector.load %arg14[%c0_33, %c896] : memref<32x1024xbf16, #tpu.memory_space<vmem>>, vector<16x64xbf16>
    tpu.vector_store %arg14[%c0_33, %c896], %66 {strides = array<i32>} : memref<32x1024xbf16, #tpu.memory_space<vmem>>, vector<16x64xbf16>,
    %68 = vector.extract_strided_slice %37 {offsets = [240, 0], sizes = [16, 64], strides = [1, 1]} : vector<256x64xbf16> to vector<16x64xbf16>
    %c0_34 = arith.constant 0 : index
    %c960 = arith.constant 960 : index
    %69 = vector.load %arg14[%c0_34, %c960] : memref<32x1024xbf16, #tpu.memory_space<vmem>>, vector<16x64xbf16>
    tpu.vector_store %arg14[%c0_34, %c960], %68 {strides = array<i32>} : memref<32x1024xbf16, #tpu.memory_space<vmem>>, vector<16x64xbf16>,
    %70 = vector.extract_strided_slice %33 {offsets = [64, 0], sizes = [64, 64], strides = [1, 1]} : vector<128x64xbf16> to vector<64x64xbf16>
    %cst_35 = arith.constant dense<0.000000e+00> : vector<256x64xf32>
    %71 = tpu.matmul %34, %70, %cst_35 {dimension_numbers = #tpu.dot_dimension_numbers<[1], [0], [0], [1], [0, 0, 1, 1], [], []>} : vector<256x64xbf16>, vector<64x64xbf16>, vector<256x64xf32> -> vector<256x64xf32>
    %72 = arith.truncf %71 : vector<256x64xf32> to vector<256x64xbf16>
    %73 = vector.extract_strided_slice %72 {offsets = [0, 0], sizes = [16, 64], strides = [1, 1]} : vector<256x64xbf16> to vector<16x64xbf16>
    %c16 = arith.constant 16 : index
    %c0_36 = arith.constant 0 : index
    %74 = vector.load %arg14[%c16, %c0_36] : memref<32x1024xbf16, #tpu.memory_space<vmem>>, vector<16x64xbf16>
    tpu.vector_store %arg14[%c16, %c0_36], %73 {strides = array<i32>} : memref<32x1024xbf16, #tpu.memory_space<vmem>>, vector<16x64xbf16>,
    %75 = vector.extract_strided_slice %72 {offsets = [16, 0], sizes = [16, 64], strides = [1, 1]} : vector<256x64xbf16> to vector<16x64xbf16>
    %c16_37 = arith.constant 16 : index
    %c64_38 = arith.constant 64 : index
    %76 = vector.load %arg14[%c16_37, %c64_38] : memref<32x1024xbf16, #tpu.memory_space<vmem>>, vector<16x64xbf16>
    tpu.vector_store %arg14[%c16_37, %c64_38], %75 {strides = array<i32>} : memref<32x1024xbf16, #tpu.memory_space<vmem>>, vector<16x64xbf16>,
    %77 = vector.extract_strided_slice %72 {offsets = [32, 0], sizes = [16, 64], strides = [1, 1]} : vector<256x64xbf16> to vector<16x64xbf16>
    %c16_39 = arith.constant 16 : index
    %c128_40 = arith.constant 128 : index
    %78 = vector.load %arg14[%c16_39, %c128_40] : memref<32x1024xbf16, #tpu.memory_space<vmem>>, vector<16x64xbf16>
    tpu.vector_store %arg14[%c16_39, %c128_40], %77 {strides = array<i32>} : memref<32x1024xbf16, #tpu.memory_space<vmem>>, vector<16x64xbf16>,
    %79 = vector.extract_strided_slice %72 {offsets = [48, 0], sizes = [16, 64], strides = [1, 1]} : vector<256x64xbf16> to vector<16x64xbf16>
    %c16_41 = arith.constant 16 : index
    %c192_42 = arith.constant 192 : index
    %80 = vector.load %arg14[%c16_41, %c192_42] : memref<32x1024xbf16, #tpu.memory_space<vmem>>, vector<16x64xbf16>
    tpu.vector_store %arg14[%c16_41, %c192_42], %79 {strides = array<i32>} : memref<32x1024xbf16, #tpu.memory_space<vmem>>, vector<16x64xbf16>,
    %81 = vector.extract_strided_slice %72 {offsets = [64, 0], sizes = [16, 64], strides = [1, 1]} : vector<256x64xbf16> to vector<16x64xbf16>
    %c16_43 = arith.constant 16 : index
    %c256_44 = arith.constant 256 : index
    %82 = vector.load %arg14[%c16_43, %c256_44] : memref<32x1024xbf16, #tpu.memory_space<vmem>>, vector<16x64xbf16>
    tpu.vector_store %arg14[%c16_43, %c256_44], %81 {strides = array<i32>} : memref<32x1024xbf16, #tpu.memory_space<vmem>>, vector<16x64xbf16>,
    %83 = vector.extract_strided_slice %72 {offsets = [80, 0], sizes = [16, 64], strides = [1, 1]} : vector<256x64xbf16> to vector<16x64xbf16>
    %c16_45 = arith.constant 16 : index
    %c320_46 = arith.constant 320 : index
    %84 = vector.load %arg14[%c16_45, %c320_46] : memref<32x1024xbf16, #tpu.memory_space<vmem>>, vector<16x64xbf16>
    tpu.vector_store %arg14[%c16_45, %c320_46], %83 {strides = array<i32>} : memref<32x1024xbf16, #tpu.memory_space<vmem>>, vector<16x64xbf16>,
    %85 = vector.extract_strided_slice %72 {offsets = [96, 0], sizes = [16, 64], strides = [1, 1]} : vector<256x64xbf16> to vector<16x64xbf16>
    %c16_47 = arith.constant 16 : index
    %c384_48 = arith.constant 384 : index
    %86 = vector.load %arg14[%c16_47, %c384_48] : memref<32x1024xbf16, #tpu.memory_space<vmem>>, vector<16x64xbf16>
    tpu.vector_store %arg14[%c16_47, %c384_48], %85 {strides = array<i32>} : memref<32x1024xbf16, #tpu.memory_space<vmem>>, vector<16x64xbf16>,
    %87 = vector.extract_strided_slice %72 {offsets = [112, 0], sizes = [16, 64], strides = [1, 1]} : vector<256x64xbf16> to vector<16x64xbf16>
    %c16_49 = arith.constant 16 : index
    %c448_50 = arith.constant 448 : index
    %88 = vector.load %arg14[%c16_49, %c448_50] : memref<32x1024xbf16, #tpu.memory_space<vmem>>, vector<16x64xbf16>
    tpu.vector_store %arg14[%c16_49, %c448_50], %87 {strides = array<i32>} : memref<32x1024xbf16, #tpu.memory_space<vmem>>, vector<16x64xbf16>,
    %89 = vector.extract_strided_slice %72 {offsets = [128, 0], sizes = [16, 64], strides = [1, 1]} : vector<256x64xbf16> to vector<16x64xbf16>
    %c16_51 = arith.constant 16 : index
    %c512_52 = arith.constant 512 : index
    %90 = vector.load %arg14[%c16_51, %c512_52] : memref<32x1024xbf16, #tpu.memory_space<vmem>>, vector<16x64xbf16>
    tpu.vector_store %arg14[%c16_51, %c512_52], %89 {strides = array<i32>} : memref<32x1024xbf16, #tpu.memory_space<vmem>>, vector<16x64xbf16>,
    %91 = vector.extract_strided_slice %72 {offsets = [144, 0], sizes = [16, 64], strides = [1, 1]} : vector<256x64xbf16> to vector<16x64xbf16>
    %c16_53 = arith.constant 16 : index
    %c576_54 = arith.constant 576 : index
    %92 = vector.load %arg14[%c16_53, %c576_54] : memref<32x1024xbf16, #tpu.memory_space<vmem>>, vector<16x64xbf16>
    tpu.vector_store %arg14[%c16_53, %c576_54], %91 {strides = array<i32>} : memref<32x1024xbf16, #tpu.memory_space<vmem>>, vector<16x64xbf16>,
    %93 = vector.extract_strided_slice %72 {offsets = [160, 0], sizes = [16, 64], strides = [1, 1]} : vector<256x64xbf16> to vector<16x64xbf16>
    %c16_55 = arith.constant 16 : index
    %c640_56 = arith.constant 640 : index
    %94 = vector.load %arg14[%c16_55, %c640_56] : memref<32x1024xbf16, #tpu.memory_space<vmem>>, vector<16x64xbf16>
    tpu.vector_store %arg14[%c16_55, %c640_56], %93 {strides = array<i32>} : memref<32x1024xbf16, #tpu.memory_space<vmem>>, vector<16x64xbf16>,
    %95 = vector.extract_strided_slice %72 {offsets = [176, 0], sizes = [16, 64], strides = [1, 1]} : vector<256x64xbf16> to vector<16x64xbf16>
    %c16_57 = arith.constant 16 : index
    %c704_58 = arith.constant 704 : index
    %96 = vector.load %arg14[%c16_57, %c704_58] : memref<32x1024xbf16, #tpu.memory_space<vmem>>, vector<16x64xbf16>
    tpu.vector_store %arg14[%c16_57, %c704_58], %95 {strides = array<i32>} : memref<32x1024xbf16, #tpu.memory_space<vmem>>, vector<16x64xbf16>,
    %97 = vector.extract_strided_slice %72 {offsets = [192, 0], sizes = [16, 64], strides = [1, 1]} : vector<256x64xbf16> to vector<16x64xbf16>
    %c16_59 = arith.constant 16 : index
    %c768_60 = arith.constant 768 : index
    %98 = vector.load %arg14[%c16_59, %c768_60] : memref<32x1024xbf16, #tpu.memory_space<vmem>>, vector<16x64xbf16>
    tpu.vector_store %arg14[%c16_59, %c768_60], %97 {strides = array<i32>} : memref<32x1024xbf16, #tpu.memory_space<vmem>>, vector<16x64xbf16>,
    %99 = vector.extract_strided_slice %72 {offsets = [208, 0], sizes = [16, 64], strides = [1, 1]} : vector<256x64xbf16> to vector<16x64xbf16>
    %c16_61 = arith.constant 16 : index
    %c832_62 = arith.constant 832 : index
    %100 = vector.load %arg14[%c16_61, %c832_62] : memref<32x1024xbf16, #tpu.memory_space<vmem>>, vector<16x64xbf16>
    tpu.vector_store %arg14[%c16_61, %c832_62], %99 {strides = array<i32>} : memref<32x1024xbf16, #tpu.memory_space<vmem>>, vector<16x64xbf16>,
    %101 = vector.extract_strided_slice %72 {offsets = [224, 0], sizes = [16, 64], strides = [1, 1]} : vector<256x64xbf16> to vector<16x64xbf16>
    %c16_63 = arith.constant 16 : index
    %c896_64 = arith.constant 896 : index
    %102 = vector.load %arg14[%c16_63, %c896_64] : memref<32x1024xbf16, #tpu.memory_space<vmem>>, vector<16x64xbf16>
    tpu.vector_store %arg14[%c16_63, %c896_64], %101 {strides = array<i32>} : memref<32x1024xbf16, #tpu.memory_space<vmem>>, vector<16x64xbf16>,
    %103 = vector.extract_strided_slice %72 {offsets = [240, 0], sizes = [16, 64], strides = [1, 1]} : vector<256x64xbf16> to vector<16x64xbf16>
    %c16_65 = arith.constant 16 : index
    %c960_66 = arith.constant 960 : index
    %104 = vector.load %arg14[%c16_65, %c960_66] : memref<32x1024xbf16, #tpu.memory_space<vmem>>, vector<16x64xbf16>
    tpu.vector_store %arg14[%c16_65, %c960_66], %103 {strides = array<i32>} : memref<32x1024xbf16, #tpu.memory_space<vmem>>, vector<16x64xbf16>,
    %c0_67 = arith.constant 0 : index
    %c0_68 = arith.constant 0 : index
    %105 = vector.load %arg14[%c0_67, %c0_68] : memref<32x1024xbf16, #tpu.memory_space<vmem>>, vector<32x1024xbf16>
    %c0_69 = arith.constant 0 : index
    %c0_70 = arith.constant 0 : index
    %106 = vector.load %arg6[%c0_69, %c0_70] : memref<1024x32xbf16, #tpu.memory_space<vmem>>, vector<1024x32xbf16>
    %cst_71 = arith.constant dense<0.000000e+00> : vector<32x32xf32>
    %107 = tpu.matmul %105, %106, %cst_71 {dimension_numbers = #tpu.dot_dimension_numbers<[1], [0], [0], [1], [0, 0, 1, 1], [], []>} : vector<32x1024xbf16>, vector<1024x32xbf16>, vector<32x32xf32> -> vector<32x32xf32>
    %c0_72 = arith.constant 0 : index
    %c0_73 = arith.constant 0 : index
    %108 = vector.load %arg7[%c0_72, %c0_73] : memref<1x32xf32, #tpu.memory_space<vmem>>, vector<1x32xf32>
    %c0_74 = arith.constant 0 : index
    %c0_75 = arith.constant 0 : index
    %109 = vector.load %arg8[%c0_74, %c0_75] : memref<1x32xf32, #tpu.memory_space<vmem>>, vector<1x32xf32>
    %cst_76 = arith.constant dense<0.000000e+00> : vector<32xf32>
    %110 = vector.multi_reduction <add>, %107, %cst_76 [0] : vector<32x32xf32> to vector<32xf32>
    %111 = vector.shape_cast %110 : vector<32xf32> to vector<1x32xf32>
    %112 = arith.mulf %107, %107 : vector<32x32xf32>
    %cst_77 = arith.constant dense<0.000000e+00> : vector<32xf32>
    %113 = vector.multi_reduction <add>, %112, %cst_77 [0] : vector<32x32xf32> to vector<32xf32>
    %114 = vector.shape_cast %113 : vector<32xf32> to vector<1x32xf32>
    %cst_78 = arith.constant 3.125000e-02 : f32
    %115 = vector.broadcast %cst_78 : f32 to vector<1x32xf32>
    %116 = arith.mulf %111, %115 : vector<1x32xf32>
    %cst_79 = arith.constant 3.125000e-02 : f32
    %117 = vector.broadcast %cst_79 : f32 to vector<1x32xf32>
    %118 = arith.mulf %114, %117 : vector<1x32xf32>
    %119 = arith.mulf %116, %116 : vector<1x32xf32>
    %120 = arith.subf %118, %119 : vector<1x32xf32>
    %cst_80 = arith.constant 0.000000e+00 : f32
    %121 = vector.broadcast %cst_80 : f32 to vector<1x32xf32>
    %122 = arith.maximumf %120, %121 : vector<1x32xf32>
    %cst_81 = arith.constant 9.99999974E-6 : f32
    %123 = vector.broadcast %cst_81 : f32 to vector<1x32xf32>
    %124 = arith.addf %122, %123 : vector<1x32xf32>
    %125 = math.rsqrt %124 : vector<1x32xf32>
    %126 = arith.mulf %108, %125 : vector<1x32xf32>
    %127 = arith.mulf %116, %126 : vector<1x32xf32>
    %128 = arith.subf %109, %127 : vector<1x32xf32>
    %129 = vector.broadcast %126 : vector<1x32xf32> to vector<32x32xf32>
    %130 = arith.mulf %107, %129 : vector<32x32xf32>
    %131 = vector.broadcast %128 : vector<1x32xf32> to vector<32x32xf32>
    %132 = arith.addf %130, %131 : vector<32x32xf32>
    %cst_82 = arith.constant 0.000000e+00 : f32
    %133 = vector.broadcast %cst_82 : f32 to vector<32x32xf32>
    %134 = arith.cmpf oge, %132, %133 : vector<32x32xf32>
    %cst_83 = arith.constant 0.00999999977 : f32
    %135 = vector.broadcast %cst_83 : f32 to vector<32x32xf32>
    %136 = arith.mulf %135, %132 : vector<32x32xf32>
    %137 = arith.select %134, %132, %136 : vector<32x32xi1>, vector<32x32xf32>
    %138 = arith.truncf %137 : vector<32x32xf32> to vector<32x32xbf16>
    %c0_84 = arith.constant 0 : index
    %c0_85 = arith.constant 0 : index
    %139 = vector.load %arg9[%c0_84, %c0_85] : memref<64x16xbf16, #tpu.memory_space<vmem>>, vector<64x16xbf16>
    %140 = vector.extract_strided_slice %138 {offsets = [0, 0], sizes = [16, 32], strides = [1, 1]} : vector<32x32xbf16> to vector<16x32xbf16>
    %cst_86 = arith.constant dense<0.000000e+00> : vector<64x32xf32>
    %141 = tpu.matmul %139, %140, %cst_86 {dimension_numbers = #tpu.dot_dimension_numbers<[1], [0], [0], [1], [0, 0, 1, 1], [], []>} : vector<64x16xbf16>, vector<16x32xbf16>, vector<64x32xf32> -> vector<64x32xf32>
    %142 = arith.truncf %141 : vector<64x32xf32> to vector<64x32xbf16>
    %143 = vector.extract_strided_slice %142 {offsets = [0, 0], sizes = [4, 32], strides = [1, 1]} : vector<64x32xbf16> to vector<4x32xbf16>
    %c0_87 = arith.constant 0 : index
    %c0_88 = arith.constant 0 : index
    %144 = vector.load %arg15[%c0_87, %c0_88] : memref<8x512xbf16, #tpu.memory_space<vmem>>, vector<4x32xbf16>
    tpu.vector_store %arg15[%c0_87, %c0_88], %143 {strides = array<i32>} : memref<8x512xbf16, #tpu.memory_space<vmem>>, vector<4x32xbf16>,
    %145 = vector.extract_strided_slice %142 {offsets = [4, 0], sizes = [4, 32], strides = [1, 1]} : vector<64x32xbf16> to vector<4x32xbf16>
    %c0_89 = arith.constant 0 : index
    %c32 = arith.constant 32 : index
    %146 = vector.load %arg15[%c0_89, %c32] : memref<8x512xbf16, #tpu.memory_space<vmem>>, vector<4x32xbf16>
    tpu.vector_store %arg15[%c0_89, %c32], %145 {strides = array<i32>} : memref<8x512xbf16, #tpu.memory_space<vmem>>, vector<4x32xbf16>,
    %147 = vector.extract_strided_slice %142 {offsets = [8, 0], sizes = [4, 32], strides = [1, 1]} : vector<64x32xbf16> to vector<4x32xbf16>
    %c0_90 = arith.constant 0 : index
    %c64_91 = arith.constant 64 : index
    %148 = vector.load %arg15[%c0_90, %c64_91] : memref<8x512xbf16, #tpu.memory_space<vmem>>, vector<4x32xbf16>
    tpu.vector_store %arg15[%c0_90, %c64_91], %147 {strides = array<i32>} : memref<8x512xbf16, #tpu.memory_space<vmem>>, vector<4x32xbf16>,
    %149 = vector.extract_strided_slice %142 {offsets = [12, 0], sizes = [4, 32], strides = [1, 1]} : vector<64x32xbf16> to vector<4x32xbf16>
    %c0_92 = arith.constant 0 : index
    %c96 = arith.constant 96 : index
    %150 = vector.load %arg15[%c0_92, %c96] : memref<8x512xbf16, #tpu.memory_space<vmem>>, vector<4x32xbf16>
    tpu.vector_store %arg15[%c0_92, %c96], %149 {strides = array<i32>} : memref<8x512xbf16, #tpu.memory_space<vmem>>, vector<4x32xbf16>,
    %151 = vector.extract_strided_slice %142 {offsets = [16, 0], sizes = [4, 32], strides = [1, 1]} : vector<64x32xbf16> to vector<4x32xbf16>
    %c0_93 = arith.constant 0 : index
    %c128_94 = arith.constant 128 : index
    %152 = vector.load %arg15[%c0_93, %c128_94] : memref<8x512xbf16, #tpu.memory_space<vmem>>, vector<4x32xbf16>
    tpu.vector_store %arg15[%c0_93, %c128_94], %151 {strides = array<i32>} : memref<8x512xbf16, #tpu.memory_space<vmem>>, vector<4x32xbf16>,
    %153 = vector.extract_strided_slice %142 {offsets = [20, 0], sizes = [4, 32], strides = [1, 1]} : vector<64x32xbf16> to vector<4x32xbf16>
    %c0_95 = arith.constant 0 : index
    %c160 = arith.constant 160 : index
    %154 = vector.load %arg15[%c0_95, %c160] : memref<8x512xbf16, #tpu.memory_space<vmem>>, vector<4x32xbf16>
    tpu.vector_store %arg15[%c0_95, %c160], %153 {strides = array<i32>} : memref<8x512xbf16, #tpu.memory_space<vmem>>, vector<4x32xbf16>,
    %155 = vector.extract_strided_slice %142 {offsets = [24, 0], sizes = [4, 32], strides = [1, 1]} : vector<64x32xbf16> to vector<4x32xbf16>
    %c0_96 = arith.constant 0 : index
    %c192_97 = arith.constant 192 : index
    %156 = vector.load %arg15[%c0_96, %c192_97] : memref<8x512xbf16, #tpu.memory_space<vmem>>, vector<4x32xbf16>
    tpu.vector_store %arg15[%c0_96, %c192_97], %155 {strides = array<i32>} : memref<8x512xbf16, #tpu.memory_space<vmem>>, vector<4x32xbf16>,
    %157 = vector.extract_strided_slice %142 {offsets = [28, 0], sizes = [4, 32], strides = [1, 1]} : vector<64x32xbf16> to vector<4x32xbf16>
    %c0_98 = arith.constant 0 : index
    %c224 = arith.constant 224 : index
    %158 = vector.load %arg15[%c0_98, %c224] : memref<8x512xbf16, #tpu.memory_space<vmem>>, vector<4x32xbf16>
    tpu.vector_store %arg15[%c0_98, %c224], %157 {strides = array<i32>} : memref<8x512xbf16, #tpu.memory_space<vmem>>, vector<4x32xbf16>,
    %159 = vector.extract_strided_slice %142 {offsets = [32, 0], sizes = [4, 32], strides = [1, 1]} : vector<64x32xbf16> to vector<4x32xbf16>
    %c0_99 = arith.constant 0 : index
    %c256_100 = arith.constant 256 : index
    %160 = vector.load %arg15[%c0_99, %c256_100] : memref<8x512xbf16, #tpu.memory_space<vmem>>, vector<4x32xbf16>
    tpu.vector_store %arg15[%c0_99, %c256_100], %159 {strides = array<i32>} : memref<8x512xbf16, #tpu.memory_space<vmem>>, vector<4x32xbf16>,
    %161 = vector.extract_strided_slice %142 {offsets = [36, 0], sizes = [4, 32], strides = [1, 1]} : vector<64x32xbf16> to vector<4x32xbf16>
    %c0_101 = arith.constant 0 : index
    %c288 = arith.constant 288 : index
    %162 = vector.load %arg15[%c0_101, %c288] : memref<8x512xbf16, #tpu.memory_space<vmem>>, vector<4x32xbf16>
    tpu.vector_store %arg15[%c0_101, %c288], %161 {strides = array<i32>} : memref<8x512xbf16, #tpu.memory_space<vmem>>, vector<4x32xbf16>,
    %163 = vector.extract_strided_slice %142 {offsets = [40, 0], sizes = [4, 32], strides = [1, 1]} : vector<64x32xbf16> to vector<4x32xbf16>
    %c0_102 = arith.constant 0 : index
    %c320_103 = arith.constant 320 : index
    %164 = vector.load %arg15[%c0_102, %c320_103] : memref<8x512xbf16, #tpu.memory_space<vmem>>, vector<4x32xbf16>
    tpu.vector_store %arg15[%c0_102, %c320_103], %163 {strides = array<i32>} : memref<8x512xbf16, #tpu.memory_space<vmem>>, vector<4x32xbf16>,
    %165 = vector.extract_strided_slice %142 {offsets = [44, 0], sizes = [4, 32], strides = [1, 1]} : vector<64x32xbf16> to vector<4x32xbf16>
    %c0_104 = arith.constant 0 : index
    %c352 = arith.constant 352 : index
    %166 = vector.load %arg15[%c0_104, %c352] : memref<8x512xbf16, #tpu.memory_space<vmem>>, vector<4x32xbf16>
    tpu.vector_store %arg15[%c0_104, %c352], %165 {strides = array<i32>} : memref<8x512xbf16, #tpu.memory_space<vmem>>, vector<4x32xbf16>,
    %167 = vector.extract_strided_slice %142 {offsets = [48, 0], sizes = [4, 32], strides = [1, 1]} : vector<64x32xbf16> to vector<4x32xbf16>
    %c0_105 = arith.constant 0 : index
    %c384_106 = arith.constant 384 : index
    %168 = vector.load %arg15[%c0_105, %c384_106] : memref<8x512xbf16, #tpu.memory_space<vmem>>, vector<4x32xbf16>
    tpu.vector_store %arg15[%c0_105, %c384_106], %167 {strides = array<i32>} : memref<8x512xbf16, #tpu.memory_space<vmem>>, vector<4x32xbf16>,
    %169 = vector.extract_strided_slice %142 {offsets = [52, 0], sizes = [4, 32], strides = [1, 1]} : vector<64x32xbf16> to vector<4x32xbf16>
    %c0_107 = arith.constant 0 : index
    %c416 = arith.constant 416 : index
    %170 = vector.load %arg15[%c0_107, %c416] : memref<8x512xbf16, #tpu.memory_space<vmem>>, vector<4x32xbf16>
    tpu.vector_store %arg15[%c0_107, %c416], %169 {strides = array<i32>} : memref<8x512xbf16, #tpu.memory_space<vmem>>, vector<4x32xbf16>,
    %171 = vector.extract_strided_slice %142 {offsets = [56, 0], sizes = [4, 32], strides = [1, 1]} : vector<64x32xbf16> to vector<4x32xbf16>
    %c0_108 = arith.constant 0 : index
    %c448_109 = arith.constant 448 : index
    %172 = vector.load %arg15[%c0_108, %c448_109] : memref<8x512xbf16, #tpu.memory_space<vmem>>, vector<4x32xbf16>
    tpu.vector_store %arg15[%c0_108, %c448_109], %171 {strides = array<i32>} : memref<8x512xbf16, #tpu.memory_space<vmem>>, vector<4x32xbf16>,
    %173 = vector.extract_strided_slice %142 {offsets = [60, 0], sizes = [4, 32], strides = [1, 1]} : vector<64x32xbf16> to vector<4x32xbf16>
    %c0_110 = arith.constant 0 : index
    %c480 = arith.constant 480 : index
    %174 = vector.load %arg15[%c0_110, %c480] : memref<8x512xbf16, #tpu.memory_space<vmem>>, vector<4x32xbf16>
    tpu.vector_store %arg15[%c0_110, %c480], %173 {strides = array<i32>} : memref<8x512xbf16, #tpu.memory_space<vmem>>, vector<4x32xbf16>,
    %175 = vector.extract_strided_slice %138 {offsets = [16, 0], sizes = [16, 32], strides = [1, 1]} : vector<32x32xbf16> to vector<16x32xbf16>
    %cst_111 = arith.constant dense<0.000000e+00> : vector<64x32xf32>
    %176 = tpu.matmul %139, %175, %cst_111 {dimension_numbers = #tpu.dot_dimension_numbers<[1], [0], [0], [1], [0, 0, 1, 1], [], []>} : vector<64x16xbf16>, vector<16x32xbf16>, vector<64x32xf32> -> vector<64x32xf32>
    %177 = arith.truncf %176 : vector<64x32xf32> to vector<64x32xbf16>
    %178 = vector.extract_strided_slice %177 {offsets = [0, 0], sizes = [4, 32], strides = [1, 1]} : vector<64x32xbf16> to vector<4x32xbf16>
    %c4 = arith.constant 4 : index
    %c0_112 = arith.constant 0 : index
    %179 = vector.load %arg15[%c4, %c0_112] : memref<8x512xbf16, #tpu.memory_space<vmem>>, vector<4x32xbf16>
    tpu.vector_store %arg15[%c4, %c0_112], %178 {strides = array<i32>} : memref<8x512xbf16, #tpu.memory_space<vmem>>, vector<4x32xbf16>,
    %180 = vector.extract_strided_slice %177 {offsets = [4, 0], sizes = [4, 32], strides = [1, 1]} : vector<64x32xbf16> to vector<4x32xbf16>
    %c4_113 = arith.constant 4 : index
    %c32_114 = arith.constant 32 : index
    %181 = vector.load %arg15[%c4_113, %c32_114] : memref<8x512xbf16, #tpu.memory_space<vmem>>, vector<4x32xbf16>
    tpu.vector_store %arg15[%c4_113, %c32_114], %180 {strides = array<i32>} : memref<8x512xbf16, #tpu.memory_space<vmem>>, vector<4x32xbf16>,
    %182 = vector.extract_strided_slice %177 {offsets = [8, 0], sizes = [4, 32], strides = [1, 1]} : vector<64x32xbf16> to vector<4x32xbf16>
    %c4_115 = arith.constant 4 : index
    %c64_116 = arith.constant 64 : index
    %183 = vector.load %arg15[%c4_115, %c64_116] : memref<8x512xbf16, #tpu.memory_space<vmem>>, vector<4x32xbf16>
    tpu.vector_store %arg15[%c4_115, %c64_116], %182 {strides = array<i32>} : memref<8x512xbf16, #tpu.memory_space<vmem>>, vector<4x32xbf16>,
    %184 = vector.extract_strided_slice %177 {offsets = [12, 0], sizes = [4, 32], strides = [1, 1]} : vector<64x32xbf16> to vector<4x32xbf16>
    %c4_117 = arith.constant 4 : index
    %c96_118 = arith.constant 96 : index
    %185 = vector.load %arg15[%c4_117, %c96_118] : memref<8x512xbf16, #tpu.memory_space<vmem>>, vector<4x32xbf16>
    tpu.vector_store %arg15[%c4_117, %c96_118], %184 {strides = array<i32>} : memref<8x512xbf16, #tpu.memory_space<vmem>>, vector<4x32xbf16>,
    %186 = vector.extract_strided_slice %177 {offsets = [16, 0], sizes = [4, 32], strides = [1, 1]} : vector<64x32xbf16> to vector<4x32xbf16>
    %c4_119 = arith.constant 4 : index
    %c128_120 = arith.constant 128 : index
    %187 = vector.load %arg15[%c4_119, %c128_120] : memref<8x512xbf16, #tpu.memory_space<vmem>>, vector<4x32xbf16>
    tpu.vector_store %arg15[%c4_119, %c128_120], %186 {strides = array<i32>} : memref<8x512xbf16, #tpu.memory_space<vmem>>, vector<4x32xbf16>,
    %188 = vector.extract_strided_slice %177 {offsets = [20, 0], sizes = [4, 32], strides = [1, 1]} : vector<64x32xbf16> to vector<4x32xbf16>
    %c4_121 = arith.constant 4 : index
    %c160_122 = arith.constant 160 : index
    %189 = vector.load %arg15[%c4_121, %c160_122] : memref<8x512xbf16, #tpu.memory_space<vmem>>, vector<4x32xbf16>
    tpu.vector_store %arg15[%c4_121, %c160_122], %188 {strides = array<i32>} : memref<8x512xbf16, #tpu.memory_space<vmem>>, vector<4x32xbf16>,
    %190 = vector.extract_strided_slice %177 {offsets = [24, 0], sizes = [4, 32], strides = [1, 1]} : vector<64x32xbf16> to vector<4x32xbf16>
    %c4_123 = arith.constant 4 : index
    %c192_124 = arith.constant 192 : index
    %191 = vector.load %arg15[%c4_123, %c192_124] : memref<8x512xbf16, #tpu.memory_space<vmem>>, vector<4x32xbf16>
    tpu.vector_store %arg15[%c4_123, %c192_124], %190 {strides = array<i32>} : memref<8x512xbf16, #tpu.memory_space<vmem>>, vector<4x32xbf16>,
    %192 = vector.extract_strided_slice %177 {offsets = [28, 0], sizes = [4, 32], strides = [1, 1]} : vector<64x32xbf16> to vector<4x32xbf16>
    %c4_125 = arith.constant 4 : index
    %c224_126 = arith.constant 224 : index
    %193 = vector.load %arg15[%c4_125, %c224_126] : memref<8x512xbf16, #tpu.memory_space<vmem>>, vector<4x32xbf16>
    tpu.vector_store %arg15[%c4_125, %c224_126], %192 {strides = array<i32>} : memref<8x512xbf16, #tpu.memory_space<vmem>>, vector<4x32xbf16>,
    %194 = vector.extract_strided_slice %177 {offsets = [32, 0], sizes = [4, 32], strides = [1, 1]} : vector<64x32xbf16> to vector<4x32xbf16>
    %c4_127 = arith.constant 4 : index
    %c256_128 = arith.constant 256 : index
    %195 = vector.load %arg15[%c4_127, %c256_128] : memref<8x512xbf16, #tpu.memory_space<vmem>>, vector<4x32xbf16>
    tpu.vector_store %arg15[%c4_127, %c256_128], %194 {strides = array<i32>} : memref<8x512xbf16, #tpu.memory_space<vmem>>, vector<4x32xbf16>,
    %196 = vector.extract_strided_slice %177 {offsets = [36, 0], sizes = [4, 32], strides = [1, 1]} : vector<64x32xbf16> to vector<4x32xbf16>
    %c4_129 = arith.constant 4 : index
    %c288_130 = arith.constant 288 : index
    %197 = vector.load %arg15[%c4_129, %c288_130] : memref<8x512xbf16, #tpu.memory_space<vmem>>, vector<4x32xbf16>
    tpu.vector_store %arg15[%c4_129, %c288_130], %196 {strides = array<i32>} : memref<8x512xbf16, #tpu.memory_space<vmem>>, vector<4x32xbf16>,
    %198 = vector.extract_strided_slice %177 {offsets = [40, 0], sizes = [4, 32], strides = [1, 1]} : vector<64x32xbf16> to vector<4x32xbf16>
    %c4_131 = arith.constant 4 : index
    %c320_132 = arith.constant 320 : index
    %199 = vector.load %arg15[%c4_131, %c320_132] : memref<8x512xbf16, #tpu.memory_space<vmem>>, vector<4x32xbf16>
    tpu.vector_store %arg15[%c4_131, %c320_132], %198 {strides = array<i32>} : memref<8x512xbf16, #tpu.memory_space<vmem>>, vector<4x32xbf16>,
    %200 = vector.extract_strided_slice %177 {offsets = [44, 0], sizes = [4, 32], strides = [1, 1]} : vector<64x32xbf16> to vector<4x32xbf16>
    %c4_133 = arith.constant 4 : index
    %c352_134 = arith.constant 352 : index
    %201 = vector.load %arg15[%c4_133, %c352_134] : memref<8x512xbf16, #tpu.memory_space<vmem>>, vector<4x32xbf16>
    tpu.vector_store %arg15[%c4_133, %c352_134], %200 {strides = array<i32>} : memref<8x512xbf16, #tpu.memory_space<vmem>>, vector<4x32xbf16>,
    %202 = vector.extract_strided_slice %177 {offsets = [48, 0], sizes = [4, 32], strides = [1, 1]} : vector<64x32xbf16> to vector<4x32xbf16>
    %c4_135 = arith.constant 4 : index
    %c384_136 = arith.constant 384 : index
    %203 = vector.load %arg15[%c4_135, %c384_136] : memref<8x512xbf16, #tpu.memory_space<vmem>>, vector<4x32xbf16>
    tpu.vector_store %arg15[%c4_135, %c384_136], %202 {strides = array<i32>} : memref<8x512xbf16, #tpu.memory_space<vmem>>, vector<4x32xbf16>,
    %204 = vector.extract_strided_slice %177 {offsets = [52, 0], sizes = [4, 32], strides = [1, 1]} : vector<64x32xbf16> to vector<4x32xbf16>
    %c4_137 = arith.constant 4 : index
    %c416_138 = arith.constant 416 : index
    %205 = vector.load %arg15[%c4_137, %c416_138] : memref<8x512xbf16, #tpu.memory_space<vmem>>, vector<4x32xbf16>
    tpu.vector_store %arg15[%c4_137, %c416_138], %204 {strides = array<i32>} : memref<8x512xbf16, #tpu.memory_space<vmem>>, vector<4x32xbf16>,
    %206 = vector.extract_strided_slice %177 {offsets = [56, 0], sizes = [4, 32], strides = [1, 1]} : vector<64x32xbf16> to vector<4x32xbf16>
    %c4_139 = arith.constant 4 : index
    %c448_140 = arith.constant 448 : index
    %207 = vector.load %arg15[%c4_139, %c448_140] : memref<8x512xbf16, #tpu.memory_space<vmem>>, vector<4x32xbf16>
    tpu.vector_store %arg15[%c4_139, %c448_140], %206 {strides = array<i32>} : memref<8x512xbf16, #tpu.memory_space<vmem>>, vector<4x32xbf16>,
    %208 = vector.extract_strided_slice %177 {offsets = [60, 0], sizes = [4, 32], strides = [1, 1]} : vector<64x32xbf16> to vector<4x32xbf16>
    %c4_141 = arith.constant 4 : index
    %c480_142 = arith.constant 480 : index
    %209 = vector.load %arg15[%c4_141, %c480_142] : memref<8x512xbf16, #tpu.memory_space<vmem>>, vector<4x32xbf16>
    tpu.vector_store %arg15[%c4_141, %c480_142], %208 {strides = array<i32>} : memref<8x512xbf16, #tpu.memory_space<vmem>>, vector<4x32xbf16>,
    %c0_143 = arith.constant 0 : index
    %c0_144 = arith.constant 0 : index
    %210 = vector.load %arg15[%c0_143, %c0_144] : memref<8x512xbf16, #tpu.memory_space<vmem>>, vector<8x512xbf16>
    %c0_145 = arith.constant 0 : index
    %c0_146 = arith.constant 0 : index
    %211 = vector.load %arg10[%c0_145, %c0_146] : memref<512x128xbf16, #tpu.memory_space<vmem>>, vector<512x128xbf16>
    %cst_147 = arith.constant dense<0.000000e+00> : vector<8x128xf32>
    %212 = tpu.matmul %210, %211, %cst_147 {dimension_numbers = #tpu.dot_dimension_numbers<[1], [0], [0], [1], [0, 0, 1, 1], [], []>} : vector<8x512xbf16>, vector<512x128xbf16>, vector<8x128xf32> -> vector<8x128xf32>
    %c0_148 = arith.constant 0 : index
    %c0_149 = arith.constant 0 : index
    %213 = vector.load %arg11[%c0_148, %c0_149] : memref<1x128xf32, #tpu.memory_space<vmem>>, vector<1x128xf32>
    %c0_150 = arith.constant 0 : index
    %c0_151 = arith.constant 0 : index
    %214 = vector.load %arg12[%c0_150, %c0_151] : memref<1x128xf32, #tpu.memory_space<vmem>>, vector<1x128xf32>
    %cst_152 = arith.constant dense<0.000000e+00> : vector<128xf32>
    %215 = vector.multi_reduction <add>, %212, %cst_152 [0] : vector<8x128xf32> to vector<128xf32>
    %216 = vector.shape_cast %215 : vector<128xf32> to vector<1x128xf32>
    %217 = arith.mulf %212, %212 : vector<8x128xf32>
    %cst_153 = arith.constant dense<0.000000e+00> : vector<128xf32>
    %218 = vector.multi_reduction <add>, %217, %cst_153 [0] : vector<8x128xf32> to vector<128xf32>
    %219 = vector.shape_cast %218 : vector<128xf32> to vector<1x128xf32>
    %cst_154 = arith.constant 1.250000e-01 : f32
    %220 = vector.broadcast %cst_154 : f32 to vector<1x128xf32>
    %221 = arith.mulf %216, %220 : vector<1x128xf32>
    %cst_155 = arith.constant 1.250000e-01 : f32
    %222 = vector.broadcast %cst_155 : f32 to vector<1x128xf32>
    %223 = arith.mulf %219, %222 : vector<1x128xf32>
    %224 = arith.mulf %221, %221 : vector<1x128xf32>
    %225 = arith.subf %223, %224 : vector<1x128xf32>
    %cst_156 = arith.constant 0.000000e+00 : f32
    %226 = vector.broadcast %cst_156 : f32 to vector<1x128xf32>
    %227 = arith.maximumf %225, %226 : vector<1x128xf32>
    %cst_157 = arith.constant 9.99999974E-6 : f32
    %228 = vector.broadcast %cst_157 : f32 to vector<1x128xf32>
    %229 = arith.addf %227, %228 : vector<1x128xf32>
    %230 = math.rsqrt %229 : vector<1x128xf32>
    %231 = arith.mulf %213, %230 : vector<1x128xf32>
    %232 = arith.mulf %221, %231 : vector<1x128xf32>
    %233 = arith.subf %214, %232 : vector<1x128xf32>
    %234 = vector.broadcast %231 : vector<1x128xf32> to vector<8x128xf32>
    %235 = arith.mulf %212, %234 : vector<8x128xf32>
    %236 = vector.broadcast %233 : vector<1x128xf32> to vector<8x128xf32>
    %237 = arith.addf %235, %236 : vector<8x128xf32>
    %cst_158 = arith.constant 0.000000e+00 : f32
    %238 = vector.broadcast %cst_158 : f32 to vector<8x128xf32>
    %239 = arith.cmpf oge, %237, %238 : vector<8x128xf32>
    %cst_159 = arith.constant 0.00999999977 : f32
    %240 = vector.broadcast %cst_159 : f32 to vector<8x128xf32>
    %241 = arith.mulf %240, %237 : vector<8x128xf32>
    %242 = arith.select %239, %237, %241 : vector<8x128xi1>, vector<8x128xf32>
    %c0_160 = arith.constant 0 : index
    %c0_161 = arith.constant 0 : index
    %243 = vector.load %arg13[%c0_160, %c0_161] : memref<8x128xf32, #tpu.memory_space<vmem>>, vector<8x128xf32>
    tpu.vector_store %arg13[%c0_160, %c0_161], %242 {strides = array<i32>} : memref<8x128xf32, #tpu.memory_space<vmem>>, vector<8x128xf32>,
    return
  }
  func.func @transform_0(%arg0: i32) -> (i32, i32) {
    %c0_i32 = arith.constant 0 : i32
    %c0_i32_0 = arith.constant 0 : i32
    %c0_i32_1 = arith.constant 0 : i32
    return %c0_i32, %c0_i32_0 : i32, i32
  }
  func.func @transform_1(%arg0: i32) -> (i32, i32) {
    %c0_i32 = arith.constant 0 : i32
    %c0_i32_0 = arith.constant 0 : i32
    %c0_i32_1 = arith.constant 0 : i32
    return %c0_i32, %c0_i32_0 : i32, i32
  }
  func.func @transform_2(%arg0: i32) -> (i32, i32) {
    %c0_i32 = arith.constant 0 : i32
    %c0_i32_0 = arith.constant 0 : i32
    %c0_i32_1 = arith.constant 0 : i32
    return %c0_i32, %c0_i32_0 : i32, i32
  }
  func.func @transform_3(%arg0: i32) -> (i32, i32) {
    %c0_i32 = arith.constant 0 : i32
    %c0_i32_0 = arith.constant 0 : i32
    %c0_i32_1 = arith.constant 0 : i32
    return %c0_i32, %c0_i32_0 : i32, i32
  }
  func.func @transform_4(%arg0: i32) -> (i32, i32) {
    %c0_i32 = arith.constant 0 : i32
    %c0_i32_0 = arith.constant 0 : i32
    %c0_i32_1 = arith.constant 0 : i32
    return %c0_i32, %c0_i32_0 : i32, i32
  }
  func.func @transform_5(%arg0: i32) -> (i32, i32) {
    %c0_i32 = arith.constant 0 : i32
    %c0_i32_0 = arith.constant 0 : i32
    %c0_i32_1 = arith.constant 0 : i32
    return %c0_i32, %c0_i32_0 : i32, i32
  }
  func.func @transform_6(%arg0: i32) -> (i32, i32) {
    %c0_i32 = arith.constant 0 : i32
    %c0_i32_0 = arith.constant 0 : i32
    %c0_i32_1 = arith.constant 0 : i32
    return %c0_i32, %c0_i32_0 : i32, i32
  }
  func.func @transform_7(%arg0: i32) -> (i32, i32) {
    %c0_i32 = arith.constant 0 : i32
    %c0_i32_0 = arith.constant 0 : i32
    %c0_i32_1 = arith.constant 0 : i32
    return %c0_i32, %c0_i32_0 : i32, i32
  }
  func.func @transform_8(%arg0: i32) -> (i32, i32) {
    %c0_i32 = arith.constant 0 : i32
    %c0_i32_0 = arith.constant 0 : i32
    %c0_i32_1 = arith.constant 0 : i32
    return %c0_i32, %c0_i32_0 : i32, i32
  }
  func.func @transform_9(%arg0: i32) -> (i32, i32) {
    %c0_i32 = arith.constant 0 : i32
    %c0_i32_0 = arith.constant 0 : i32
    %c0_i32_1 = arith.constant 0 : i32
    return %c0_i32, %c0_i32_0 : i32, i32
  }
  func.func @transform_10(%arg0: i32) -> (i32, i32) {
    %c0_i32 = arith.constant 0 : i32
    %c0_i32_0 = arith.constant 0 : i32
    %c0_i32_1 = arith.constant 0 : i32
    return %c0_i32, %c0_i32_0 : i32, i32
  }
  func.func @transform_11(%arg0: i32) -> (i32, i32) {
    %c0_i32 = arith.constant 0 : i32
    %c0_i32_0 = arith.constant 0 : i32
    %c0_i32_1 = arith.constant 0 : i32
    return %c0_i32, %c0_i32_0 : i32, i32
  }
  func.func @transform_12(%arg0: i32) -> (i32, i32) {
    %c0_i32 = arith.constant 0 : i32
    %c0_i32_0 = arith.constant 0 : i32
    %c0_i32_1 = arith.constant 0 : i32
    return %c0_i32, %c0_i32_0 : i32, i32
  }
}

</mosaic_0001>

<llo_original>
// kernel: dcgan_sn_discriminator.1
$region0: #{dcgan_sn_discriminator.1}
  #allocation0 [shape = 'u32[]', space=smem, size = 0x4, offset = 0x4, fixed_abs, tag = 'smem constant byte address 0x4 - core index']
  #allocation1 [shape = 'u32[144,128]{1,0:T(1,128)}', space=vmem, size = 0x12000, scoped, tag = 'internal scratch']
  #allocation2 [shape = 'bf16[32,1024]{1,0:T(16,128)(2,1)}', space=vmem, size = 0x10000, scoped, tag = 'scratch operand']
  #allocation3 [shape = 'bf16[8,512]{1,0:T(8,128)(2,1)}', space=vmem, size = 0x2000, scoped, tag = 'scratch operand']
  %s0 = inlined_call_operand.vmem [shape: bf16[128,48], index: 0, kind: input, shape index: {}]
  %s1 = inlined_call_operand.vmem [shape: bf16[48,64], index: 1, kind: input, shape index: {}]
  %s2 = inlined_call_operand.vmem [shape: f32[1,64], index: 2, kind: input, shape index: {}]
  %s3 = inlined_call_operand.vmem [shape: f32[1,64], index: 3, kind: input, shape index: {}]
  %s4 = inlined_call_operand.vmem [shape: bf16[256,64], index: 4, kind: input, shape index: {}]
  %s5 = inlined_call_operand.vmem [shape: bf16[1024,32], index: 5, kind: input, shape index: {}]
  %s6 = inlined_call_operand.vmem [shape: f32[1,32], index: 6, kind: input, shape index: {}]
  %s7 = inlined_call_operand.vmem [shape: f32[1,32], index: 7, kind: input, shape index: {}]
  %s8 = inlined_call_operand.vmem [shape: bf16[64,16], index: 8, kind: input, shape index: {}]
  %s9 = inlined_call_operand.vmem [shape: bf16[512,128], index: 9, kind: input, shape index: {}]
  %s10 = inlined_call_operand.vmem [shape: f32[1,128], index: 10, kind: input, shape index: {}]
  %s11 = inlined_call_operand.vmem [shape: f32[1,128], index: 11, kind: input, shape index: {}]
  %s12 = inlined_call_operand.hbm [shape: f32[8,128], index: 12, kind: output, shape index: {}]
  %s13 = sld [smem:[#allocation0]]
  $region58: #{dcgan_sn_discriminator.1} parent=0
    _
  %s15 = ssub.s32 1, %s13
  %s16 = scalar_select 0, %s15, %s13
  $region1: #{dcgan_sn_discriminator.1} parent=0
    #allocation4 [shape = 'u8[4096]{0}', space=vmem, size = 0x1000, scoped, tag = 'output window, operand 0, single buffered']
    #allocation5 [shape = 's32[1]{0}', space=sflag, size = 0x4, scoped, tag = 'scoped memory for dcgan_sn_discriminator.1']
    %17 = vsyncpa [#allocation5], 0
    // Predicated region
    $region2: #{dcgan_sn_discriminator.1} parent=1 // pred_check
      _
    $region3: #{dcgan_sn_discriminator.1} parent=1 // pred_check_branch
      %19 = sbr.rel (0) target = $region5
    $region4: #{dcgan_sn_discriminator.1} parent=1 // pred_region
      _
    $region5: #{dcgan_sn_discriminator.1} parent=1 // pred_fallthru
      _
    // Predicated region
    $region6: #{dcgan_sn_discriminator.1} parent=1 // pred_check
      _
    $region7: #{dcgan_sn_discriminator.1} parent=1 // pred_check_branch
      %21 = sbr.rel (0) target = $region9
    $region8: #{dcgan_sn_discriminator.1} parent=1 // pred_region
      _
    $region9: #{dcgan_sn_discriminator.1} parent=1 // pred_fallthru
      _
    // Predicated region
    $region10: #{dcgan_sn_discriminator.1} parent=1 // pred_check
      _
    $region11: #{dcgan_sn_discriminator.1} parent=1 // pred_check_branch
      %23 = sbr.rel (0) target = $region13
    $region12: #{dcgan_sn_discriminator.1} parent=1 // pred_region
      _
    $region13: #{dcgan_sn_discriminator.1} parent=1 // pred_fallthru
      _
    // Predicated region
    $region14: #{dcgan_sn_discriminator.1} parent=1 // pred_check
      _
    $region15: #{dcgan_sn_discriminator.1} parent=1 // pred_check_branch
      %25 = sbr.rel (0) target = $region17
    $region16: #{dcgan_sn_discriminator.1} parent=1 // pred_region
      _
    $region17: #{dcgan_sn_discriminator.1} parent=1 // pred_fallthru
      _
    // Predicated region
    $region18: #{dcgan_sn_discriminator.1} parent=1 // pred_check
      _
    $region19: #{dcgan_sn_discriminator.1} parent=1 // pred_check_branch
      %27 = sbr.rel (0) target = $region21
    $region20: #{dcgan_sn_discriminator.1} parent=1 // pred_region
      _
    $region21: #{dcgan_sn_discriminator.1} parent=1 // pred_fallthru
      _
    // Predicated region
    $region22: #{dcgan_sn_discriminator.1} parent=1 // pred_check
      _
    $region23: #{dcgan_sn_discriminator.1} parent=1 // pred_check_branch
      %29 = sbr.rel (0) target = $region25
    $region24: #{dcgan_sn_discriminator.1} parent=1 // pred_region
      _
    $region25: #{dcgan_sn_discriminator.1} parent=1 // pred_fallthru
      _
    // Predicated region
    $region26: #{dcgan_sn_discriminator.1} parent=1 // pred_check
      _
    $region27: #{dcgan_sn_discriminator.1} parent=1 // pred_check_branch
      %31 = sbr.rel (0) target = $region29
    $region28: #{dcgan_sn_discriminator.1} parent=1 // pred_region
      _
    $region29: #{dcgan_sn_discriminator.1} parent=1 // pred_fallthru
      _
    // Predicated region
    $region30: #{dcgan_sn_discriminator.1} parent=1 // pred_check
      _
    $region31: #{dcgan_sn_discriminator.1} parent=1 // pred_check_branch
      %33 = sbr.rel (0) target = $region33
    $region32: #{dcgan_sn_discriminator.1} parent=1 // pred_region
      _
    $region33: #{dcgan_sn_discriminator.1} parent=1 // pred_fallthru
      _
    // Predicated region
    $region34: #{dcgan_sn_discriminator.1} parent=1 // pred_check
      _
    $region35: #{dcgan_sn_discriminator.1} parent=1 // pred_check_branch
      %35 = sbr.rel (0) target = $region37
    $region36: #{dcgan_sn_discriminator.1} parent=1 // pred_region
      _
    $region37: #{dcgan_sn_discriminator.1} parent=1 // pred_fallthru
      _
    // Predicated region
    $region38: #{dcgan_sn_discriminator.1} parent=1 // pred_check
      _
    $region39: #{dcgan_sn_discriminator.1} parent=1 // pred_check_branch
      %37 = sbr.rel (0) target = $region41
    $region40: #{dcgan_sn_discriminator.1} parent=1 // pred_region
      _
    $region41: #{dcgan_sn_discriminator.1} parent=1 // pred_fallthru
      _
    // Predicated region
    $region42: #{dcgan_sn_discriminator.1} parent=1 // pred_check
      _
    $region43: #{dcgan_sn_discriminator.1} parent=1 // pred_check_branch
      %39 = sbr.rel (0) target = $region45
    $region44: #{dcgan_sn_discriminator.1} parent=1 // pred_region
      _
    $region45: #{dcgan_sn_discriminator.1} parent=1 // pred_fallthru
      _
    // Predicated region
    $region46: #{dcgan_sn_discriminator.1} parent=1 // pred_check
      _
    $region47: #{dcgan_sn_discriminator.1} parent=1 // pred_check_branch
      %41 = sbr.rel (0) target = $region49
    $region48: #{dcgan_sn_discriminator.1} parent=1 // pred_region
      _
    $region49: #{dcgan_sn_discriminator.1} parent=1 // pred_fallthru
      _
    %v43 = vld [vmem:[%s0] sm:$0xf]
    %v44 = vld [vmem:[%s0 + $0x4] sm:$0xf]
    %v45 = vld [vmem:[%s0 + $0x8] sm:$0xf]
    %v46 = vld [vmem:[%s0 + $0xc] sm:$0xf]
    %v47 = vld [vmem:[%s0 + $0x10] sm:$0xf]
    %v48 = vld [vmem:[%s0 + $0x14] sm:$0xf]
    %v49 = vld [vmem:[%s0 + $0x18] sm:$0xf]
    %v50 = vld [vmem:[%s0 + $0x1c] sm:$0xf]
    %v51 = vld [vmem:[%s0 + $0x20] sm:$0xf]
    %v52 = vld [vmem:[%s0 + $0x24] sm:$0xf]
    %v53 = vld [vmem:[%s0 + $0x28] sm:$0xf]
    %v54 = vld [vmem:[%s0 + $0x2c] sm:$0xf]
    %v55 = vld [vmem:[%s0 + $0x30] sm:$0xf]
    %v56 = vld [vmem:[%s0 + $0x34] sm:$0xf]
    %v57 = vld [vmem:[%s0 + $0x38] sm:$0xf]
    %v58 = vld [vmem:[%s0 + $0x3c] sm:$0xf]
    %v59 = vld [vmem:[%s1] sm:$0xf]
    %v60 = vld [vmem:[%s1 + $0x4] sm:$0xf]
    %v61 = vld [vmem:[%s1 + $0x8] sm:$0xf]
    %v62 = vld [vmem:[%s1 + $0xc] sm:$0xf]
    %v63 = vld [vmem:[%s1 + $0x10] sm:$0xf]
    %v64 = vld [vmem:[%s1 + $0x14] sm:$0xf]
    %v81 = vunpack.c.l.b16 %v43
    %v82 = vunpack.c.l.b16 %v44
    %v83 = vunpack.c.l.b16 %v45
    %v84 = vunpack.c.l.b16 %v46
    %v85 = vunpack.c.l.b16 %v47
    %v86 = vunpack.c.l.b16 %v48
    %v87 = vunpack.c.l.b16 %v49
    %v88 = vunpack.c.l.b16 %v50
    %v89 = vunpack.c.l.b16 %v51
    %v90 = vunpack.c.l.b16 %v52
    %v91 = vunpack.c.l.b16 %v53
    %v92 = vunpack.c.l.b16 %v54
    %v93 = vunpack.c.l.b16 %v55
    %v94 = vunpack.c.l.b16 %v56
    %v95 = vunpack.c.l.b16 %v57
    %v96 = vunpack.c.l.b16 %v58
    %v97 = vpack.c.b16 %v82, %v81
    %v98 = vpack.c.b16 %v84, %v83
    %v99 = vpack.c.b16 %v86, %v85
    %v100 = vpack.c.b16 %v88, %v87
    %v101 = vpack.c.b16 %v90, %v89
    %v102 = vpack.c.b16 %v92, %v91
    %v103 = vpack.c.b16 %v94, %v93
    %v104 = vpack.c.b16 %v96, %v95
    %v111 = vunpack.c.l.b16 %v59
    %v112 = vunpack.c.l.b16 %v60
    %v113 = vunpack.c.l.b16 %v61
    %v114 = vunpack.c.l.b16 %v62
    %v115 = vunpack.c.l.b16 %v63
    %v116 = vunpack.c.l.b16 %v64
    %v117 = vpack.c.b16 %v112, %v111
    %v118 = vpack.c.b16 %v114, %v113
    %v119 = vpack.c.b16 %v116, %v115
    %vm123 = vcmask 392192
    %v125 = vsel %vm123, %v97, 0
    %v128 = vsel %vm123, %v98, 0
    %v131 = vsel %vm123, %v99, 0
    %v134 = vsel %vm123, %v100, 0
    %v137 = vsel %vm123, %v101, 0
    %v140 = vsel %vm123, %v102, 0
    %v143 = vsel %vm123, %v103, 0
    %v146 = vsel %vm123, %v104, 0
    %148 = vmatprep.subr.bf16.mxu0 0
    %149 = vmatpush1.bf16.msra.mxu0 %v117
    %150 = vmatprep.subr.bf16.mxu0 0
    %151 = vmatpush1.bf16.msra.mxu0 %v118
    %152 = vmatprep.subr.bf16.mxu0 0
    %153 = vmatpush1.bf16.msra.mxu0 %v119
    %154 = vmatprep.subr.bf16.mxu0 0
    %155 = vmatpush1.bf16.msra.mxu0 0
    %156 = vmatprep.subr.bf16.mxu0 0
    %157 = vmatpush1.bf16.msra.mxu0 0
    %158 = vmatprep.subr.bf16.mxu0 0
    %159 = vmatpush1.bf16.msra.mxu0 0
    %160 = vmatprep.subr.bf16.mxu0 0
    %161 = vmatpush1.bf16.msra.mxu0 0
    %162 = vmatprep.subr.bf16.mxu0 0
    %163 = vmatpush1.bf16.msra.mxu0 0
    %164 = vmatprep.subr.bf16.mxu0 0
    %165 = vmatpush1.bf16.msra.mxu0 0
    %166 = vmatprep.subr.bf16.mxu0 0
    %167 = vmatpush1.bf16.msra.mxu0 0
    %168 = vmatprep.subr.bf16.mxu0 0
    %169 = vmatpush1.bf16.msra.mxu0 0
    %170 = vmatprep.subr.bf16.mxu0 0
    %171 = vmatpush1.bf16.msra.mxu0 0
    %172 = vmatprep.subr.bf16.mxu0 0
    %173 = vmatpush1.bf16.msra.mxu0 0
    %174 = vmatprep.subr.bf16.mxu0 0
    %175 = vmatpush1.bf16.msra.mxu0 0
    %176 = vmatprep.subr.bf16.mxu0 0
    %177 = vmatpush1.bf16.msra.mxu0 0
    %178 = vmatprep.subr.bf16.mxu0 0
    %179 = vmatpush1.bf16.msra.mxu0 0
    %180 = vmatprep.mubr.bf16.mxu0 0
    %181 = vmatmul.mubr.bf16.gmra.mrb[0].mxu0 %v125
    %v182 = vpop.f32.mrb[0].mxu0
    %v183 = vadd.f32 0.0, %v182
    %v184 = vpop.f32.mrb[0].mxu0
    %v185 = vpop.f32.mrb[0].mxu0
    %v186 = vadd.f32 0.0, %v185
    %v187 = vpop.f32.mrb[0].mxu0
    %188 = vmatprep.mubr.bf16.mxu0 0
    %189 = vmatmul.mubr.bf16.gmra.mrb[0].mxu0 %v128
    %v190 = vpop.f32.mrb[0].mxu0
    %v191 = vadd.f32 0.0, %v190
    %v192 = vpop.f32.mrb[0].mxu0
    %v193 = vpop.f32.mrb[0].mxu0
    %v194 = vadd.f32 0.0, %v193
    %v195 = vpop.f32.mrb[0].mxu0
    %196 = vmatprep.mubr.bf16.mxu0 0
    %197 = vmatmul.mubr.bf16.gmra.mrb[0].mxu0 %v131
    %v198 = vpop.f32.mrb[0].mxu0
    %v199 = vadd.f32 0.0, %v198
    %v200 = vpop.f32.mrb[0].mxu0
    %v201 = vpop.f32.mrb[0].mxu0
    %v202 = vadd.f32 0.0, %v201
    %v203 = vpop.f32.mrb[0].mxu0
    %204 = vmatprep.mubr.bf16.mxu0 0
    %205 = vmatmul.mubr.bf16.gmra.mrb[0].mxu0 %v134
    %v206 = vpop.f32.mrb[0].mxu0
    %v207 = vadd.f32 0.0, %v206
    %v208 = vpop.f32.mrb[0].mxu0
    %v209 = vpop.f32.mrb[0].mxu0
    %v210 = vadd.f32 0.0, %v209
    %v211 = vpop.f32.mrb[0].mxu0
    %212 = vmatprep.mubr.bf16.mxu0 0
    %213 = vmatmul.mubr.bf16.gmra.mrb[0].mxu0 %v137
    %v214 = vpop.f32.mrb[0].mxu0
    %v215 = vadd.f32 0.0, %v214
    %v216 = vpop.f32.mrb[0].mxu0
    %v217 = vpop.f32.mrb[0].mxu0
    %v218 = vadd.f32 0.0, %v217
    %v219 = vpop.f32.mrb[0].mxu0
    %220 = vmatprep.mubr.bf16.mxu0 0
    %221 = vmatmul.mubr.bf16.gmra.mrb[0].mxu0 %v140
    %v222 = vpop.f32.mrb[0].mxu0
    %v223 = vadd.f32 0.0, %v222
    %v224 = vpop.f32.mrb[0].mxu0
    %v225 = vpop.f32.mrb[0].mxu0
    %v226 = vadd.f32 0.0, %v225
    %v227 = vpop.f32.mrb[0].mxu0
    %228 = vmatprep.mubr.bf16.mxu0 0
    %229 = vmatmul.mubr.bf16.gmra.mrb[0].mxu0 %v143
    %v230 = vpop.f32.mrb[0].mxu0
    %v231 = vadd.f32 0.0, %v230
    %v232 = vpop.f32.mrb[0].mxu0
    %v233 = vpop.f32.mrb[0].mxu0
    %v234 = vadd.f32 0.0, %v233
    %v235 = vpop.f32.mrb[0].mxu0
    %236 = vmatprep.mubr.bf16.mxu0 0
    %237 = vmatmul.mubr.bf16.gmra.mrb[0].mxu0 %v146
    %v238 = vpop.f32.mrb[0].mxu0
    %v239 = vadd.f32 0.0, %v238
    %v240 = vpop.f32.mrb[0].mxu0
    %v241 = vpop.f32.mrb[0].mxu0
    %v242 = vadd.f32 0.0, %v241
    %v243 = vpop.f32.mrb[0].mxu0
    %244 = vdwg.mxu0
    %v245 = vld [vmem:[%s2] sm:$0x1]
    %v246 = vld [vmem:[%s3] sm:$0x1]
    %vm247 = vcmask 523264
    %v248 = vsel %vm247, %v183, 0.0
    %v249 = vsel %vm247, %v186, 0.0
    %v250 = vadd.f32 %v248, %v249
    %v251 = vsel %vm247, %v191, 0.0
    %v252 = vadd.f32 %v250, %v251
    %v253 = vsel %vm247, %v194, 0.0
    %v254 = vadd.f32 %v252, %v253
    %v255 = vsel %vm247, %v199, 0.0
    %v256 = vadd.f32 %v254, %v255
    %v257 = vsel %vm247, %v202, 0.0
    %v258 = vadd.f32 %v256, %v257
    %v259 = vsel %vm247, %v207, 0.0
    %v260 = vadd.f32 %v258, %v259
    %v261 = vsel %vm247, %v210, 0.0
    %v262 = vadd.f32 %v260, %v261
    %v263 = vsel %vm247, %v215, 0.0
    %v264 = vadd.f32 %v262, %v263
    %v265 = vsel %vm247, %v218, 0.0
    %v266 = vadd.f32 %v264, %v265
    %v267 = vsel %vm247, %v223, 0.0
    %v268 = vadd.f32 %v266, %v267
    %v269 = vsel %vm247, %v226, 0.0
    %v270 = vadd.f32 %v268, %v269
    %v271 = vsel %vm247, %v231, 0.0
    %v272 = vadd.f32 %v270, %v271
    %v273 = vsel %vm247, %v234, 0.0
    %v274 = vadd.f32 %v272, %v273
    %v275 = vsel %vm247, %v239, 0.0
    %v276 = vadd.f32 %v274, %v275
    %v277 = vsel %vm247, %v242, 0.0
    %v278 = vadd.f32 %v276, %v277
    %v279 = vrot.slane %v278, 4
    %v280 = vadd.f32 %v278, %v279
    %v281 = vrot.slane %v280, 2
    %v282 = vadd.f32 %v280, %v281
    %v283 = vrot.slane %v282, 1
    %v284 = vadd.f32 %v282, %v283
    %v285 = vmul.f32 %v183, %v183
    %v286 = vmul.f32 %v186, %v186
    %v287 = vmul.f32 %v191, %v191
    %v288 = vmul.f32 %v194, %v194
    %v289 = vmul.f32 %v199, %v199
    %v290 = vmul.f32 %v202, %v202
    %v291 = vmul.f32 %v207, %v207
    %v292 = vmul.f32 %v210, %v210
    %v293 = vmul.f32 %v215, %v215
    %v294 = vmul.f32 %v218, %v218
    %v295 = vmul.f32 %v223, %v223
    %v296 = vmul.f32 %v226, %v226
    %v297 = vmul.f32 %v231, %v231
    %v298 = vmul.f32 %v234, %v234
    %v299 = vmul.f32 %v239, %v239
    %v300 = vmul.f32 %v242, %v242
    %v301 = vsel %vm247, %v285, 0.0
    %v302 = vsel %vm247, %v286, 0.0
    %v303 = vadd.f32 %v301, %v302
    %v304 = vsel %vm247, %v287, 0.0
    %v305 = vadd.f32 %v303, %v304
    %v306 = vsel %vm247, %v288, 0.0
    %v307 = vadd.f32 %v305, %v306
    %v308 = vsel %vm247, %v289, 0.0
    %v309 = vadd.f32 %v307, %v308
    %v310 = vsel %vm247, %v290, 0.0
    %v311 = vadd.f32 %v309, %v310
    %v312 = vsel %vm247, %v291, 0.0
    %v313 = vadd.f32 %v311, %v312
    %v314 = vsel %vm247, %v292, 0.0
    %v315 = vadd.f32 %v313, %v314
    %v316 = vsel %vm247, %v293, 0.0
    %v317 = vadd.f32 %v315, %v316
    %v318 = vsel %vm247, %v294, 0.0
    %v319 = vadd.f32 %v317, %v318
    %v320 = vsel %vm247, %v295, 0.0
    %v321 = vadd.f32 %v319, %v320
    %v322 = vsel %vm247, %v296, 0.0
    %v323 = vadd.f32 %v321, %v322
    %v324 = vsel %vm247, %v297, 0.0
    %v325 = vadd.f32 %v323, %v324
    %v326 = vsel %vm247, %v298, 0.0
    %v327 = vadd.f32 %v325, %v326
    %v328 = vsel %vm247, %v299, 0.0
    %v329 = vadd.f32 %v327, %v328
    %v330 = vsel %vm247, %v300, 0.0
    %v331 = vadd.f32 %v329, %v330
    %v332 = vrot.slane %v331, 4
    %v333 = vadd.f32 %v331, %v332
    %v334 = vrot.slane %v333, 2
    %v335 = vadd.f32 %v333, %v334
    %v336 = vrot.slane %v335, 1
    %v337 = vadd.f32 %v335, %v336
    %v338 = vmul.f32 %v284, 0.0078125
    %v339 = vmul.f32 %v337, 0.0078125
    %v340 = vmul.f32 %v338, %v338
    %v341 = vsub.f32 %v339, %v340
    %v342 = vmax.f32 %v341, 0.0
    %v343 = vadd.f32 %v342, 1e-05
    %v344 = vrsqrt.pop %v343
    %v345 = vmul.f32 %v245, %v344
    %v346 = vmul.f32 %v338, %v345
    %v347 = vsub.f32 %v246, %v346
    %v349 = vlaneseq
    %v350 = vshrl.u32 %v349, 7
    %v351 = vsub.s32 0, %v350
    %v352 = vrot.slane %v345, %v351
    %v354 = vmul.f32 %v183, %v352
    %v355 = vmul.f32 %v186, %v352
    %v356 = vmul.f32 %v191, %v352
    %v357 = vmul.f32 %v194, %v352
    %v358 = vmul.f32 %v199, %v352
    %v359 = vmul.f32 %v202, %v352
    %v360 = vmul.f32 %v207, %v352
    %v361 = vmul.f32 %v210, %v352
    %v362 = vmul.f32 %v215, %v352
    %v363 = vmul.f32 %v218, %v352
    %v364 = vmul.f32 %v223, %v352
    %v365 = vmul.f32 %v226, %v352
    %v366 = vmul.f32 %v231, %v352
    %v367 = vmul.f32 %v234, %v352
    %v368 = vmul.f32 %v239, %v352
    %v369 = vmul.f32 %v242, %v352
    %v371 = vlaneseq
    %v372 = vshrl.u32 %v371, 7
    %v373 = vsub.s32 0, %v372
    %v374 = vrot.slane %v347, %v373
    %v376 = vadd.f32 %v354, %v374
    %v377 = vadd.f32 %v355, %v374
    %v378 = vadd.f32 %v356, %v374
    %v379 = vadd.f32 %v357, %v374
    %v380 = vadd.f32 %v358, %v374
    %v381 = vadd.f32 %v359, %v374
    %v382 = vadd.f32 %v360, %v374
    %v383 = vadd.f32 %v361, %v374
    %v384 = vadd.f32 %v362, %v374
    %v385 = vadd.f32 %v363, %v374
    %v386 = vadd.f32 %v364, %v374
    %v387 = vadd.f32 %v365, %v374
    %v388 = vadd.f32 %v366, %v374
    %v389 = vadd.f32 %v367, %v374
    %v390 = vadd.f32 %v368, %v374
    %v391 = vadd.f32 %v369, %v374
    %vm392 = vcmp.ge.f32.partialorder %v376, 0.0
    %vm393 = vcmp.ge.f32.partialorder %v377, 0.0
    %vm394 = vcmp.ge.f32.partialorder %v378, 0.0
    %vm395 = vcmp.ge.f32.partialorder %v379, 0.0
    %vm396 = vcmp.ge.f32.partialorder %v380, 0.0
    %vm397 = vcmp.ge.f32.partialorder %v381, 0.0
    %vm398 = vcmp.ge.f32.partialorder %v382, 0.0
    %vm399 = vcmp.ge.f32.partialorder %v383, 0.0
    %vm400 = vcmp.ge.f32.partialorder %v384, 0.0
    %vm401 = vcmp.ge.f32.partialorder %v385, 0.0
    %vm402 = vcmp.ge.f32.partialorder %v386, 0.0
    %vm403 = vcmp.ge.f32.partialorder %v387, 0.0
    %vm404 = vcmp.ge.f32.partialorder %v388, 0.0
    %vm405 = vcmp.ge.f32.partialorder %v389, 0.0
    %vm406 = vcmp.ge.f32.partialorder %v390, 0.0
    %vm407 = vcmp.ge.f32.partialorder %v391, 0.0
    %v408 = vmul.f32 %v376, 0.01
    %v409 = vmul.f32 %v377, 0.01
    %v410 = vmul.f32 %v378, 0.01
    %v411 = vmul.f32 %v379, 0.01
    %v412 = vmul.f32 %v380, 0.01
    %v413 = vmul.f32 %v381, 0.01
    %v414 = vmul.f32 %v382, 0.01
    %v415 = vmul.f32 %v383, 0.01
    %v416 = vmul.f32 %v384, 0.01
    %v417 = vmul.f32 %v385, 0.01
    %v418 = vmul.f32 %v386, 0.01
    %v419 = vmul.f32 %v387, 0.01
    %v420 = vmul.f32 %v388, 0.01
    %v421 = vmul.f32 %v389, 0.01
    %v422 = vmul.f32 %v390, 0.01
    %v423 = vmul.f32 %v391, 0.01
    %v424 = vsel %vm392, %v376, %v408
    %v425 = vsel %vm393, %v377, %v409
    %v426 = vsel %vm394, %v378, %v410
    %v427 = vsel %vm395, %v379, %v411
    %v428 = vsel %vm396, %v380, %v412
    %v429 = vsel %vm397, %v381, %v413
    %v430 = vsel %vm398, %v382, %v414
    %v431 = vsel %vm399, %v383, %v415
    %v432 = vsel %vm400, %v384, %v416
    %v433 = vsel %vm401, %v385, %v417
    %v434 = vsel %vm402, %v386, %v418
    %v435 = vsel %vm403, %v387, %v419
    %v436 = vsel %vm404, %v388, %v420
    %v437 = vsel %vm405, %v389, %v421
    %v438 = vsel %vm406, %v390, %v422
    %v439 = vsel %vm407, %v391, %v423
    %v440 = vpack.c.bf16 %v425, %v424
    %v441 = vpack.c.bf16 %v427, %v426
    %v442 = vpack.c.bf16 %v429, %v428
    %v443 = vpack.c.bf16 %v431, %v430
    %v444 = vpack.c.bf16 %v433, %v432
    %v445 = vpack.c.bf16 %v435, %v434
    %v446 = vpack.c.bf16 %v437, %v436
    %v447 = vpack.c.bf16 %v439, %v438
    %v448 = vld [vmem:[%s4] sm:$0xf]
    %v449 = vld [vmem:[%s4 + $0x4] sm:$0xf]
    %v450 = vld [vmem:[%s4 + $0x8] sm:$0xf]
    %v451 = vld [vmem:[%s4 + $0xc] sm:$0xf]
    %v452 = vld [vmem:[%s4 + $0x10] sm:$0xf]
    %v453 = vld [vmem:[%s4 + $0x14] sm:$0xf]
    %v454 = vld [vmem:[%s4 + $0x18] sm:$0xf]
    %v455 = vld [vmem:[%s4 + $0x1c] sm:$0xf]
    %v456 = vld [vmem:[%s4 + $0x20] sm:$0xf]
    %v457 = vld [vmem:[%s4 + $0x24] sm:$0xf]
    %v458 = vld [vmem:[%s4 + $0x28] sm:$0xf]
    %v459 = vld [vmem:[%s4 + $0x2c] sm:$0xf]
    %v460 = vld [vmem:[%s4 + $0x30] sm:$0xf]
    %v461 = vld [vmem:[%s4 + $0x34] sm:$0xf]
    %v462 = vld [vmem:[%s4 + $0x38] sm:$0xf]
    %v463 = vld [vmem:[%s4 + $0x3c] sm:$0xf]
    %v464 = vld [vmem:[%s4 + $0x40] sm:$0xf]
    %v465 = vld [vmem:[%s4 + $0x44] sm:$0xf]
    %v466 = vld [vmem:[%s4 + $0x48] sm:$0xf]
    %v467 = vld [vmem:[%s4 + $0x4c] sm:$0xf]
    %v468 = vld [vmem:[%s4 + $0x50] sm:$0xf]
    %v469 = vld [vmem:[%s4 + $0x54] sm:$0xf]
    %v470 = vld [vmem:[%s4 + $0x58] sm:$0xf]
    %v471 = vld [vmem:[%s4 + $0x5c] sm:$0xf]
    %v472 = vld [vmem:[%s4 + $0x60] sm:$0xf]
    %v473 = vld [vmem:[%s4 + $0x64] sm:$0xf]
    %v474 = vld [vmem:[%s4 + $0x68] sm:$0xf]
    %v475 = vld [vmem:[%s4 + $0x6c] sm:$0xf]
    %v476 = vld [vmem:[%s4 + $0x70] sm:$0xf]
    %v477 = vld [vmem:[%s4 + $0x74] sm:$0xf]
    %v478 = vld [vmem:[%s4 + $0x78] sm:$0xf]
    %v479 = vld [vmem:[%s4 + $0x7c] sm:$0xf]
    %v512 = vunpack.c.l.b16 %v448
    %v513 = vunpack.c.l.b16 %v449
    %v514 = vunpack.c.l.b16 %v450
    %v515 = vunpack.c.l.b16 %v451
    %v516 = vunpack.c.l.b16 %v452
    %v517 = vunpack.c.l.b16 %v453
    %v518 = vunpack.c.l.b16 %v454
    %v519 = vunpack.c.l.b16 %v455
    %v520 = vunpack.c.l.b16 %v456
    %v521 = vunpack.c.l.b16 %v457
    %v522 = vunpack.c.l.b16 %v458
    %v523 = vunpack.c.l.b16 %v459
    %v524 = vunpack.c.l.b16 %v460
    %v525 = vunpack.c.l.b16 %v461
    %v526 = vunpack.c.l.b16 %v462
    %v527 = vunpack.c.l.b16 %v463
    %v528 = vunpack.c.l.b16 %v464
    %v529 = vunpack.c.l.b16 %v465
    %v530 = vunpack.c.l.b16 %v466
    %v531 = vunpack.c.l.b16 %v467
    %v532 = vunpack.c.l.b16 %v468
    %v533 = vunpack.c.l.b16 %v469
    %v534 = vunpack.c.l.b16 %v470
    %v535 = vunpack.c.l.b16 %v471
    %v536 = vunpack.c.l.b16 %v472
    %v537 = vunpack.c.l.b16 %v473
    %v538 = vunpack.c.l.b16 %v474
    %v539 = vunpack.c.l.b16 %v475
    %v540 = vunpack.c.l.b16 %v476
    %v541 = vunpack.c.l.b16 %v477
    %v542 = vunpack.c.l.b16 %v478
    %v543 = vunpack.c.l.b16 %v479
    %v544 = vpack.c.b16 %v513, %v512
    %v545 = vpack.c.b16 %v515, %v514
    %v546 = vpack.c.b16 %v517, %v516
    %v547 = vpack.c.b16 %v519, %v518
    %v548 = vpack.c.b16 %v521, %v520
    %v549 = vpack.c.b16 %v523, %v522
    %v550 = vpack.c.b16 %v525, %v524
    %v551 = vpack.c.b16 %v527, %v526
    %v552 = vpack.c.b16 %v529, %v528
    %v553 = vpack.c.b16 %v531, %v530
    %v554 = vpack.c.b16 %v533, %v532
    %v555 = vpack.c.b16 %v535, %v534
    %v556 = vpack.c.b16 %v537, %v536
    %v557 = vpack.c.b16 %v539, %v538
    %v558 = vpack.c.b16 %v541, %v540
    %v559 = vpack.c.b16 %v543, %v542
    %v561 = vsel %vm247, %v544, 0
    %v564 = vsel %vm247, %v545, 0
    %v567 = vsel %vm247, %v546, 0
    %v570 = vsel %vm247, %v547, 0
    %v573 = vsel %vm247, %v548, 0
    %v576 = vsel %vm247, %v549, 0
    %v579 = vsel %vm247, %v550, 0
    %v582 = vsel %vm247, %v551, 0
    %v585 = vsel %vm247, %v552, 0
    %v588 = vsel %vm247, %v553, 0
    %v591 = vsel %vm247, %v554, 0
    %v594 = vsel %vm247, %v555, 0
    %v597 = vsel %vm247, %v556, 0
    %v600 = vsel %vm247, %v557, 0
    %v603 = vsel %vm247, %v558, 0
    %v606 = vsel %vm247, %v559, 0
    %608 = vmatprep.subr.bf16.mxu0 0
    %609 = vmatpush1.bf16.msra.mxu0 %v440
    %610 = vmatprep.subr.bf16.mxu0 0
    %611 = vmatpush1.bf16.msra.mxu0 %v441
    %612 = vmatprep.subr.bf16.mxu0 0
    %613 = vmatpush1.bf16.msra.mxu0 %v442
    %614 = vmatprep.subr.bf16.mxu0 0
    %615 = vmatpush1.bf16.msra.mxu0 %v443
    %616 = vmatprep.subr.bf16.mxu0 0
    %617 = vmatpush1.bf16.msra.mxu0 0
    %618 = vmatprep.subr.bf16.mxu0 0
    %619 = vmatpush1.bf16.msra.mxu0 0
    %620 = vmatprep.subr.bf16.mxu0 0
    %621 = vmatpush1.bf16.msra.mxu0 0
    %622 = vmatprep.subr.bf16.mxu0 0
    %623 = vmatpush1.bf16.msra.mxu0 0
    %624 = vmatprep.subr.bf16.mxu0 0
    %625 = vmatpush1.bf16.msra.mxu0 0
    %626 = vmatprep.subr.bf16.mxu0 0
    %627 = vmatpush1.bf16.msra.mxu0 0
    %628 = vmatprep.subr.bf16.mxu0 0
    %629 = vmatpush1.bf16.msra.mxu0 0
    %630 = vmatprep.subr.bf16.mxu0 0
    %631 = vmatpush1.bf16.msra.mxu0 0
    %632 = vmatprep.subr.bf16.mxu0 0
    %633 = vmatpush1.bf16.msra.mxu0 0
    %634 = vmatprep.subr.bf16.mxu0 0
    %635 = vmatpush1.bf16.msra.mxu0 0
    %636 = vmatprep.subr.bf16.mxu0 0
    %637 = vmatpush1.bf16.msra.mxu0 0
    %638 = vmatprep.subr.bf16.mxu0 0
    %639 = vmatpush1.bf16.msra.mxu0 0
    %640 = vmatprep.mubr.bf16.mxu0 0
    %641 = vmatmul.mubr.bf16.gmra.mrb[0].mxu0 %v561
    %v642 = vpop.f32.mrb[0].mxu0
    %v643 = vadd.f32 0.0, %v642
    %v644 = vpop.f32.mrb[0].mxu0
    %v645 = vpop.f32.mrb[0].mxu0
    %v646 = vadd.f32 0.0, %v645
    %v647 = vpop.f32.mrb[0].mxu0
    %648 = vmatprep.mubr.bf16.mxu0 0
    %649 = vmatmul.mubr.bf16.gmra.mrb[0].mxu0 %v564
    %v650 = vpop.f32.mrb[0].mxu0
    %v651 = vadd.f32 0.0, %v650
    %v652 = vpop.f32.mrb[0].mxu0
    %v653 = vpop.f32.mrb[0].mxu0
    %v654 = vadd.f32 0.0, %v653
    %v655 = vpop.f32.mrb[0].mxu0
    %656 = vmatprep.mubr.bf16.mxu0 0
    %657 = vmatmul.mubr.bf16.gmra.mrb[0].mxu0 %v567
    %v658 = vpop.f32.mrb[0].mxu0
    %v659 = vadd.f32 0.0, %v658
    %v660 = vpop.f32.mrb[0].mxu0
    %v661 = vpop.f32.mrb[0].mxu0
    %v662 = vadd.f32 0.0, %v661
    %v663 = vpop.f32.mrb[0].mxu0
    %664 = vmatprep.mubr.bf16.mxu0 0
    %665 = vmatmul.mubr.bf16.gmra.mrb[0].mxu0 %v570
    %v666 = vpop.f32.mrb[0].mxu0
    %v667 = vadd.f32 0.0, %v666
    %v668 = vpop.f32.mrb[0].mxu0
    %v669 = vpop.f32.mrb[0].mxu0
    %v670 = vadd.f32 0.0, %v669
    %v671 = vpop.f32.mrb[0].mxu0
    %672 = vmatprep.mubr.bf16.mxu0 0
    %673 = vmatmul.mubr.bf16.gmra.mrb[0].mxu0 %v573
    %v674 = vpop.f32.mrb[0].mxu0
    %v675 = vadd.f32 0.0, %v674
    %v676 = vpop.f32.mrb[0].mxu0
    %v677 = vpop.f32.mrb[0].mxu0
    %v678 = vadd.f32 0.0, %v677
    %v679 = vpop.f32.mrb[0].mxu0
    %680 = vmatprep.mubr.bf16.mxu0 0
    %681 = vmatmul.mubr.bf16.gmra.mrb[0].mxu0 %v576
    %v682 = vpop.f32.mrb[0].mxu0
    %v683 = vadd.f32 0.0, %v682
    %v684 = vpop.f32.mrb[0].mxu0
    %v685 = vpop.f32.mrb[0].mxu0
    %v686 = vadd.f32 0.0, %v685
    %v687 = vpop.f32.mrb[0].mxu0
    %688 = vmatprep.mubr.bf16.mxu0 0
    %689 = vmatmul.mubr.bf16.gmra.mrb[0].mxu0 %v579
    %v690 = vpop.f32.mrb[0].mxu0
    %v691 = vadd.f32 0.0, %v690
    %v692 = vpop.f32.mrb[0].mxu0
    %v693 = vpop.f32.mrb[0].mxu0
    %v694 = vadd.f32 0.0, %v693
    %v695 = vpop.f32.mrb[0].mxu0
    %696 = vmatprep.mubr.bf16.mxu0 0
    %697 = vmatmul.mubr.bf16.gmra.mrb[0].mxu0 %v582
    %v698 = vpop.f32.mrb[0].mxu0
    %v699 = vadd.f32 0.0, %v698
    %v700 = vpop.f32.mrb[0].mxu0
    %v701 = vpop.f32.mrb[0].mxu0
    %v702 = vadd.f32 0.0, %v701
    %v703 = vpop.f32.mrb[0].mxu0
    %704 = vmatprep.mubr.bf16.mxu0 0
    %705 = vmatmul.mubr.bf16.gmra.mrb[0].mxu0 %v585
    %v706 = vpop.f32.mrb[0].mxu0
    %v707 = vadd.f32 0.0, %v706
    %v708 = vpop.f32.mrb[0].mxu0
    %v709 = vpop.f32.mrb[0].mxu0
    %v710 = vadd.f32 0.0, %v709
    %v711 = vpop.f32.mrb[0].mxu0
    %712 = vmatprep.mubr.bf16.mxu0 0
    %713 = vmatmul.mubr.bf16.gmra.mrb[0].mxu0 %v588
    %v714 = vpop.f32.mrb[0].mxu0
    %v715 = vadd.f32 0.0, %v714
    %v716 = vpop.f32.mrb[0].mxu0
    %v717 = vpop.f32.mrb[0].mxu0
    %v718 = vadd.f32 0.0, %v717
    %v719 = vpop.f32.mrb[0].mxu0
    %720 = vmatprep.mubr.bf16.mxu0 0
    %721 = vmatmul.mubr.bf16.gmra.mrb[0].mxu0 %v591
    %v722 = vpop.f32.mrb[0].mxu0
    %v723 = vadd.f32 0.0, %v722
    %v724 = vpop.f32.mrb[0].mxu0
    %v725 = vpop.f32.mrb[0].mxu0
    %v726 = vadd.f32 0.0, %v725
    %v727 = vpop.f32.mrb[0].mxu0
    %728 = vmatprep.mubr.bf16.mxu0 0
    %729 = vmatmul.mubr.bf16.gmra.mrb[0].mxu0 %v594
    %v730 = vpop.f32.mrb[0].mxu0
    %v731 = vadd.f32 0.0, %v730
    %v732 = vpop.f32.mrb[0].mxu0
    %v733 = vpop.f32.mrb[0].mxu0
    %v734 = vadd.f32 0.0, %v733
    %v735 = vpop.f32.mrb[0].mxu0
    %736 = vmatprep.mubr.bf16.mxu0 0
    %737 = vmatmul.mubr.bf16.gmra.mrb[0].mxu0 %v597
    %v738 = vpop.f32.mrb[0].mxu0
    %v739 = vadd.f32 0.0, %v738
    %v740 = vpop.f32.mrb[0].mxu0
    %v741 = vpop.f32.mrb[0].mxu0
    %v742 = vadd.f32 0.0, %v741
    %v743 = vpop.f32.mrb[0].mxu0
    %744 = vmatprep.mubr.bf16.mxu0 0
    %745 = vmatmul.mubr.bf16.gmra.mrb[0].mxu0 %v600
    %v746 = vpop.f32.mrb[0].mxu0
    %v747 = vadd.f32 0.0, %v746
    %v748 = vpop.f32.mrb[0].mxu0
    %v749 = vpop.f32.mrb[0].mxu0
    %v750 = vadd.f32 0.0, %v749
    %v751 = vpop.f32.mrb[0].mxu0
    %752 = vmatprep.mubr.bf16.mxu0 0
    %753 = vmatmul.mubr.bf16.gmra.mrb[0].mxu0 %v603
    %v754 = vpop.f32.mrb[0].mxu0
    %v755 = vadd.f32 0.0, %v754
    %v756 = vpop.f32.mrb[0].mxu0
    %v757 = vpop.f32.mrb[0].mxu0
    %v758 = vadd.f32 0.0, %v757
    %v759 = vpop.f32.mrb[0].mxu0
    %760 = vmatprep.mubr.bf16.mxu0 0
    %761 = vmatmul.mubr.bf16.gmra.mrb[0].mxu0 %v606
    %v762 = vpop.f32.mrb[0].mxu0
    %v763 = vadd.f32 0.0, %v762
    %v764 = vpop.f32.mrb[0].mxu0
    %v765 = vpop.f32.mrb[0].mxu0
    %v766 = vadd.f32 0.0, %v765
    %v767 = vpop.f32.mrb[0].mxu0
    %768 = vdwg.mxu0
    %v769 = vpack.c.bf16 %v646, %v643
    %v770 = vpack.c.bf16 %v654, %v651
    %v771 = vpack.c.bf16 %v662, %v659
    %v772 = vpack.c.bf16 %v670, %v667
    %v773 = vpack.c.bf16 %v678, %v675
    %v774 = vpack.c.bf16 %v686, %v683
    %v775 = vpack.c.bf16 %v694, %v691
    %v776 = vpack.c.bf16 %v702, %v699
    %v777 = vpack.c.bf16 %v710, %v707
    %v778 = vpack.c.bf16 %v718, %v715
    %v779 = vpack.c.bf16 %v726, %v723
    %v780 = vpack.c.bf16 %v734, %v731
    %v781 = vpack.c.bf16 %v742, %v739
    %v782 = vpack.c.bf16 %v750, %v747
    %v783 = vpack.c.bf16 %v758, %v755
    %v784 = vpack.c.bf16 %v766, %v763
    %785 = vst.msk [vmem:[#allocation2] sm:$0xff] %vm247, %v769
    %787 = vrot.lane.b32.xlu0 %v770, 64
    %v788 = vpop.permute.xlu0 %787
    %vm790 = vcmask 1048064
    %791 = vst.msk [vmem:[#allocation2] sm:$0xff] %vm790, %v788
    %792 = vst.msk [vmem:[#allocation2 + $0x8] sm:$0xff] %vm247, %v771
    %794 = vrot.lane.b32.xlu0 %v772, 64
    %v795 = vpop.permute.xlu0 %794
    %797 = vst.msk [vmem:[#allocation2 + $0x8] sm:$0xff] %vm790, %v795
    %798 = vst.msk [vmem:[#allocation2 + $0x10] sm:$0xff] %vm247, %v773
    %800 = vrot.lane.b32.xlu0 %v774, 64
    %v801 = vpop.permute.xlu0 %800
    %803 = vst.msk [vmem:[#allocation2 + $0x10] sm:$0xff] %vm790, %v801
    %804 = vst.msk [vmem:[#allocation2 + $0x18] sm:$0xff] %vm247, %v775
    %806 = vrot.lane.b32.xlu0 %v776, 64
    %v807 = vpop.permute.xlu0 %806
    %809 = vst.msk [vmem:[#allocation2 + $0x18] sm:$0xff] %vm790, %v807
    %810 = vst.msk [vmem:[#allocation2 + $0x20] sm:$0xff] %vm247, %v777
    %812 = vrot.lane.b32.xlu0 %v778, 64
    %v813 = vpop.permute.xlu0 %812
    %815 = vst.msk [vmem:[#allocation2 + $0x20] sm:$0xff] %vm790, %v813
    %816 = vst.msk [vmem:[#allocation2 + $0x28] sm:$0xff] %vm247, %v779
    %818 = vrot.lane.b32.xlu0 %v780, 64
    %v819 = vpop.permute.xlu0 %818
    %821 = vst.msk [vmem:[#allocation2 + $0x28] sm:$0xff] %vm790, %v819
    %822 = vst.msk [vmem:[#allocation2 + $0x30] sm:$0xff] %vm247, %v781
    %824 = vrot.lane.b32.xlu0 %v782, 64
    %v825 = vpop.permute.xlu0 %824
    %827 = vst.msk [vmem:[#allocation2 + $0x30] sm:$0xff] %vm790, %v825
    %828 = vst.msk [vmem:[#allocation2 + $0x38] sm:$0xff] %vm247, %v783
    %830 = vrot.lane.b32.xlu0 %v784, 64
    %v831 = vpop.permute.xlu0 %830
    %833 = vst.msk [vmem:[#allocation2 + $0x38] sm:$0xff] %vm790, %v831
    %834 = vmatprep.subr.bf16.mxu0 0
    %835 = vmatpush1.bf16.msra.mxu0 %v444
    %836 = vmatprep.subr.bf16.mxu0 0
    %837 = vmatpush1.bf16.msra.mxu0 %v445
    %838 = vmatprep.subr.bf16.mxu0 0
    %839 = vmatpush1.bf16.msra.mxu0 %v446
    %840 = vmatprep.subr.bf16.mxu0 0
    %841 = vmatpush1.bf16.msra.mxu0 %v447
    %842 = vmatprep.subr.bf16.mxu0 0
    %843 = vmatpush1.bf16.msra.mxu0 0
    %844 = vmatprep.subr.bf16.mxu0 0
    %845 = vmatpush1.bf16.msra.mxu0 0
    %846 = vmatprep.subr.bf16.mxu0 0
    %847 = vmatpush1.bf16.msra.mxu0 0
    %848 = vmatprep.subr.bf16.mxu0 0
    %849 = vmatpush1.bf16.msra.mxu0 0
    %850 = vmatprep.subr.bf16.mxu0 0
    %851 = vmatpush1.bf16.msra.mxu0 0
    %852 = vmatprep.subr.bf16.mxu0 0
    %853 = vmatpush1.bf16.msra.mxu0 0
    %854 = vmatprep.subr.bf16.mxu0 0
    %855 = vmatpush1.bf16.msra.mxu0 0
    %856 = vmatprep.subr.bf16.mxu0 0
    %857 = vmatpush1.bf16.msra.mxu0 0
    %858 = vmatprep.subr.bf16.mxu0 0
    %859 = vmatpush1.bf16.msra.mxu0 0
    %860 = vmatprep.subr.bf16.mxu0 0
    %861 = vmatpush1.bf16.msra.mxu0 0
    %862 = vmatprep.subr.bf16.mxu0 0
    %863 = vmatpush1.bf16.msra.mxu0 0
    %864 = vmatprep.subr.bf16.mxu0 0
    %865 = vmatpush1.bf16.msra.mxu0 0
    %866 = vmatprep.mubr.bf16.mxu0 0
    %867 = vmatmul.mubr.bf16.gmra.mrb[0].mxu0 %v561
    %v868 = vpop.f32.mrb[0].mxu0
    %v869 = vadd.f32 0.0, %v868
    %v870 = vpop.f32.mrb[0].mxu0
    %v871 = vpop.f32.mrb[0].mxu0
    %v872 = vadd.f32 0.0, %v871
    %v873 = vpop.f32.mrb[0].mxu0
    %874 = vmatprep.mubr.bf16.mxu0 0
    %875 = vmatmul.mubr.bf16.gmra.mrb[0].mxu0 %v564
    %v876 = vpop.f32.mrb[0].mxu0
    %v877 = vadd.f32 0.0, %v876
    %v878 = vpop.f32.mrb[0].mxu0
    %v879 = vpop.f32.mrb[0].mxu0
    %v880 = vadd.f32 0.0, %v879
    %v881 = vpop.f32.mrb[0].mxu0
    %882 = vmatprep.mubr.bf16.mxu0 0
    %883 = vmatmul.mubr.bf16.gmra.mrb[0].mxu0 %v567
    %v884 = vpop.f32.mrb[0].mxu0
    %v885 = vadd.f32 0.0, %v884
    %v886 = vpop.f32.mrb[0].mxu0
    %v887 = vpop.f32.mrb[0].mxu0
    %v888 = vadd.f32 0.0, %v887
    %v889 = vpop.f32.mrb[0].mxu0
    %890 = vmatprep.mubr.bf16.mxu0 0
    %891 = vmatmul.mubr.bf16.gmra.mrb[0].mxu0 %v570
    %v892 = vpop.f32.mrb[0].mxu0
    %v893 = vadd.f32 0.0, %v892
    %v894 = vpop.f32.mrb[0].mxu0
    %v895 = vpop.f32.mrb[0].mxu0
    %v896 = vadd.f32 0.0, %v895
    %v897 = vpop.f32.mrb[0].mxu0
    %898 = vmatprep.mubr.bf16.mxu0 0
    %899 = vmatmul.mubr.bf16.gmra.mrb[0].mxu0 %v573
    %v900 = vpop.f32.mrb[0].mxu0
    %v901 = vadd.f32 0.0, %v900
    %v902 = vpop.f32.mrb[0].mxu0
    %v903 = vpop.f32.mrb[0].mxu0
    %v904 = vadd.f32 0.0, %v903
    %v905 = vpop.f32.mrb[0].mxu0
    %906 = vmatprep.mubr.bf16.mxu0 0
    %907 = vmatmul.mubr.bf16.gmra.mrb[0].mxu0 %v576
    %v908 = vpop.f32.mrb[0].mxu0
    %v909 = vadd.f32 0.0, %v908
    %v910 = vpop.f32.mrb[0].mxu0
    %v911 = vpop.f32.mrb[0].mxu0
    %v912 = vadd.f32 0.0, %v911
    %v913 = vpop.f32.mrb[0].mxu0
    %914 = vmatprep.mubr.bf16.mxu0 0
    %915 = vmatmul.mubr.bf16.gmra.mrb[0].mxu0 %v579
    %v916 = vpop.f32.mrb[0].mxu0
    %v917 = vadd.f32 0.0, %v916
    %v918 = vpop.f32.mrb[0].mxu0
    %v919 = vpop.f32.mrb[0].mxu0
    %v920 = vadd.f32 0.0, %v919
    %v921 = vpop.f32.mrb[0].mxu0
    %922 = vmatprep.mubr.bf16.mxu0 0
    %923 = vmatmul.mubr.bf16.gmra.mrb[0].mxu0 %v582
    %v924 = vpop.f32.mrb[0].mxu0
    %v925 = vadd.f32 0.0, %v924
    %v926 = vpop.f32.mrb[0].mxu0
    %v927 = vpop.f32.mrb[0].mxu0
    %v928 = vadd.f32 0.0, %v927
    %v929 = vpop.f32.mrb[0].mxu0
    %930 = vmatprep.mubr.bf16.mxu0 0
    %931 = vmatmul.mubr.bf16.gmra.mrb[0].mxu0 %v585
    %v932 = vpop.f32.mrb[0].mxu0
    %v933 = vadd.f32 0.0, %v932
    %v934 = vpop.f32.mrb[0].mxu0
    %v935 = vpop.f32.mrb[0].mxu0
    %v936 = vadd.f32 0.0, %v935
    %v937 = vpop.f32.mrb[0].mxu0
    %938 = vmatprep.mubr.bf16.mxu0 0
    %939 = vmatmul.mubr.bf16.gmra.mrb[0].mxu0 %v588
    %v940 = vpop.f32.mrb[0].mxu0
    %v941 = vadd.f32 0.0, %v940
    %v942 = vpop.f32.mrb[0].mxu0
    %v943 = vpop.f32.mrb[0].mxu0
    %v944 = vadd.f32 0.0, %v943
    %v945 = vpop.f32.mrb[0].mxu0
    %946 = vmatprep.mubr.bf16.mxu0 0
    %947 = vmatmul.mubr.bf16.gmra.mrb[0].mxu0 %v591
    %v948 = vpop.f32.mrb[0].mxu0
    %v949 = vadd.f32 0.0, %v948
    %v950 = vpop.f32.mrb[0].mxu0
    %v951 = vpop.f32.mrb[0].mxu0
    %v952 = vadd.f32 0.0, %v951
    %v953 = vpop.f32.mrb[0].mxu0
    %954 = vmatprep.mubr.bf16.mxu0 0
    %955 = vmatmul.mubr.bf16.gmra.mrb[0].mxu0 %v594
    %v956 = vpop.f32.mrb[0].mxu0
    %v957 = vadd.f32 0.0, %v956
    %v958 = vpop.f32.mrb[0].mxu0
    %v959 = vpop.f32.mrb[0].mxu0
    %v960 = vadd.f32 0.0, %v959
    %v961 = vpop.f32.mrb[0].mxu0
    %962 = vmatprep.mubr.bf16.mxu0 0
    %963 = vmatmul.mubr.bf16.gmra.mrb[0].mxu0 %v597
    %v964 = vpop.f32.mrb[0].mxu0
    %v965 = vadd.f32 0.0, %v964
    %v966 = vpop.f32.mrb[0].mxu0
    %v967 = vpop.f32.mrb[0].mxu0
    %v968 = vadd.f32 0.0, %v967
    %v969 = vpop.f32.mrb[0].mxu0
    %970 = vmatprep.mubr.bf16.mxu0 0
    %971 = vmatmul.mubr.bf16.gmra.mrb[0].mxu0 %v600
    %v972 = vpop.f32.mrb[0].mxu0
    %v973 = vadd.f32 0.0, %v972
    %v974 = vpop.f32.mrb[0].mxu0
    %v975 = vpop.f32.mrb[0].mxu0
    %v976 = vadd.f32 0.0, %v975
    %v977 = vpop.f32.mrb[0].mxu0
    %978 = vmatprep.mubr.bf16.mxu0 0
    %979 = vmatmul.mubr.bf16.gmra.mrb[0].mxu0 %v603
    %v980 = vpop.f32.mrb[0].mxu0
    %v981 = vadd.f32 0.0, %v980
    %v982 = vpop.f32.mrb[0].mxu0
    %v983 = vpop.f32.mrb[0].mxu0
    %v984 = vadd.f32 0.0, %v983
    %v985 = vpop.f32.mrb[0].mxu0
    %986 = vmatprep.mubr.bf16.mxu0 0
    %987 = vmatmul.mubr.bf16.gmra.mrb[0].mxu0 %v606
    %v988 = vpop.f32.mrb[0].mxu0
    %v989 = vadd.f32 0.0, %v988
    %v990 = vpop.f32.mrb[0].mxu0
    %v991 = vpop.f32.mrb[0].mxu0
    %v992 = vadd.f32 0.0, %v991
    %v993 = vpop.f32.mrb[0].mxu0
    %994 = vdwg.mxu0
    %v995 = vpack.c.bf16 %v872, %v869
    %v996 = vpack.c.bf16 %v880, %v877
    %v997 = vpack.c.bf16 %v888, %v885
    %v998 = vpack.c.bf16 %v896, %v893
    %v999 = vpack.c.bf16 %v904, %v901
    %v1000 = vpack.c.bf16 %v912, %v909
    %v1001 = vpack.c.bf16 %v920, %v917
    %v1002 = vpack.c.bf16 %v928, %v925
    %v1003 = vpack.c.bf16 %v936, %v933
    %v1004 = vpack.c.bf16 %v944, %v941
    %v1005 = vpack.c.bf16 %v952, %v949
    %v1006 = vpack.c.bf16 %v960, %v957
    %v1007 = vpack.c.bf16 %v968, %v965
    %v1008 = vpack.c.bf16 %v976, %v973
    %v1009 = vpack.c.bf16 %v984, %v981
    %v1010 = vpack.c.bf16 %v992, %v989
    %1011 = vst.msk [vmem:[#allocation2 + $0x40] sm:$0xff] %vm247, %v995
    %1013 = vrot.lane.b32.xlu0 %v996, 64
    %v1014 = vpop.permute.xlu0 %1013
    %1016 = vst.msk [vmem:[#allocation2 + $0x40] sm:$0xff] %vm790, %v1014
    %1017 = vst.msk [vmem:[#allocation2 + $0x48] sm:$0xff] %vm247, %v997
    %1019 = vrot.lane.b32.xlu0 %v998, 64
    %v1020 = vpop.permute.xlu0 %1019
    %1022 = vst.msk [vmem:[#allocation2 + $0x48] sm:$0xff] %vm790, %v1020
    %1023 = vst.msk [vmem:[#allocation2 + $0x50] sm:$0xff] %vm247, %v999
    %1025 = vrot.lane.b32.xlu0 %v1000, 64
    %v1026 = vpop.permute.xlu0 %1025
    %1028 = vst.msk [vmem:[#allocation2 + $0x50] sm:$0xff] %vm790, %v1026
    %1029 = vst.msk [vmem:[#allocation2 + $0x58] sm:$0xff] %vm247, %v1001
    %1031 = vrot.lane.b32.xlu0 %v1002, 64
    %v1032 = vpop.permute.xlu0 %1031
    %1034 = vst.msk [vmem:[#allocation2 + $0x58] sm:$0xff] %vm790, %v1032
    %1035 = vst.msk [vmem:[#allocation2 + $0x60] sm:$0xff] %vm247, %v1003
    %1037 = vrot.lane.b32.xlu0 %v1004, 64
    %v1038 = vpop.permute.xlu0 %1037
    %1040 = vst.msk [vmem:[#allocation2 + $0x60] sm:$0xff] %vm790, %v1038
    %1041 = vst.msk [vmem:[#allocation2 + $0x68] sm:$0xff] %vm247, %v1005
    %1043 = vrot.lane.b32.xlu0 %v1006, 64
    %v1044 = vpop.permute.xlu0 %1043
    %1046 = vst.msk [vmem:[#allocation2 + $0x68] sm:$0xff] %vm790, %v1044
    %1047 = vst.msk [vmem:[#allocation2 + $0x70] sm:$0xff] %vm247, %v1007
    %1049 = vrot.lane.b32.xlu0 %v1008, 64
    %v1050 = vpop.permute.xlu0 %1049
    %1052 = vst.msk [vmem:[#allocation2 + $0x70] sm:$0xff] %vm790, %v1050
    %1053 = vst.msk [vmem:[#allocation2 + $0x78] sm:$0xff] %vm247, %v1009
    %1055 = vrot.lane.b32.xlu0 %v1010, 64
    %v1056 = vpop.permute.xlu0 %1055
    %1058 = vst.msk [vmem:[#allocation2 + $0x78] sm:$0xff] %vm790, %v1056
    %v1059 = vld [vmem:[#allocation2] sm:$0xff]
    %v1060 = vld [vmem:[#allocation2 + $0x8] sm:$0xff]
    %v1061 = vld [vmem:[#allocation2 + $0x10] sm:$0xff]
    %v1062 = vld [vmem:[#allocation2 + $0x18] sm:$0xff]
    %v1063 = vld [vmem:[#allocation2 + $0x20] sm:$0xff]
    %v1064 = vld [vmem:[#allocation2 + $0x28] sm:$0xff]
    %v1065 = vld [vmem:[#allocation2 + $0x30] sm:$0xff]
    %v1066 = vld [vmem:[#allocation2 + $0x38] sm:$0xff]
    %v1067 = vld [vmem:[#allocation2 + $0x40] sm:$0xff]
    %v1068 = vld [vmem:[#allocation2 + $0x48] sm:$0xff]
    %v1069 = vld [vmem:[#allocation2 + $0x50] sm:$0xff]
    %v1070 = vld [vmem:[#allocation2 + $0x58] sm:$0xff]
    %v1071 = vld [vmem:[#allocation2 + $0x60] sm:$0xff]
    %v1072 = vld [vmem:[#allocation2 + $0x68] sm:$0xff]
    %v1073 = vld [vmem:[#allocation2 + $0x70] sm:$0xff]
    %v1074 = vld [vmem:[#allocation2 + $0x78] sm:$0xff]
    %v1075 = vld [vmem:[%s5] sm:$0xf]
    %v1076 = vld [vmem:[%s5 + $0x4] sm:$0xf]
    %v1077 = vld [vmem:[%s5 + $0x8] sm:$0xf]
    %v1078 = vld [vmem:[%s5 + $0xc] sm:$0xf]
    %v1079 = vld [vmem:[%s5 + $0x10] sm:$0xf]
    %v1080 = vld [vmem:[%s5 + $0x14] sm:$0xf]
    %v1081 = vld [vmem:[%s5 + $0x18] sm:$0xf]
    %v1082 = vld [vmem:[%s5 + $0x1c] sm:$0xf]
    %v1083 = vld [vmem:[%s5 + $0x20] sm:$0xf]
    %v1084 = vld [vmem:[%s5 + $0x24] sm:$0xf]
    %v1085 = vld [vmem:[%s5 + $0x28] sm:$0xf]
    %v1086 = vld [vmem:[%s5 + $0x2c] sm:$0xf]
    %v1087 = vld [vmem:[%s5 + $0x30] sm:$0xf]
    %v1088 = vld [vmem:[%s5 + $0x34] sm:$0xf]
    %v1089 = vld [vmem:[%s5 + $0x38] sm:$0xf]
    %v1090 = vld [vmem:[%s5 + $0x3c] sm:$0xf]
    %v1091 = vld [vmem:[%s5 + $0x40] sm:$0xf]
    %v1092 = vld [vmem:[%s5 + $0x44] sm:$0xf]
    %v1093 = vld [vmem:[%s5 + $0x48] sm:$0xf]
    %v1094 = vld [vmem:[%s5 + $0x4c] sm:$0xf]
    %v1095 = vld [vmem:[%s5 + $0x50] sm:$0xf]
    %v1096 = vld [vmem:[%s5 + $0x54] sm:$0xf]
    %v1097 = vld [vmem:[%s5 + $0x58] sm:$0xf]
    %v1098 = vld [vmem:[%s5 + $0x5c] sm:$0xf]
    %v1099 = vld [vmem:[%s5 + $0x60] sm:$0xf]
    %v1100 = vld [vmem:[%s5 + $0x64] sm:$0xf]
    %v1101 = vld [vmem:[%s5 + $0x68] sm:$0xf]
    %v1102 = vld [vmem:[%s5 + $0x6c] sm:$0xf]
    %v1103 = vld [vmem:[%s5 + $0x70] sm:$0xf]
    %v1104 = vld [vmem:[%s5 + $0x74] sm:$0xf]
    %v1105 = vld [vmem:[%s5 + $0x78] sm:$0xf]
    %v1106 = vld [vmem:[%s5 + $0x7c] sm:$0xf]
    %v1107 = vld [vmem:[%s5 + $0x80] sm:$0xf]
    %v1108 = vld [vmem:[%s5 + $0x84] sm:$0xf]
    %v1109 = vld [vmem:[%s5 + $0x88] sm:$0xf]
    %v1110 = vld [vmem:[%s5 + $0x8c] sm:$0xf]
    %v1111 = vld [vmem:[%s5 + $0x90] sm:$0xf]
    %v1112 = vld [vmem:[%s5 + $0x94] sm:$0xf]
    %v1113 = vld [vmem:[%s5 + $0x98] sm:$0xf]
    %v1114 = vld [vmem:[%s5 + $0x9c] sm:$0xf]
    %v1115 = vld [vmem:[%s5 + $0xa0] sm:$0xf]
    %v1116 = vld [vmem:[%s5 + $0xa4] sm:$0xf]
    %v1117 = vld [vmem:[%s5 + $0xa8] sm:$0xf]
    %v1118 = vld [vmem:[%s5 + $0xac] sm:$0xf]
    %v1119 = vld [vmem:[%s5 + $0xb0] sm:$0xf]
    %v1120 = vld [vmem:[%s5 + $0xb4] sm:$0xf]
    %v1121 = vld [vmem:[%s5 + $0xb8] sm:$0xf]
    %v1122 = vld [vmem:[%s5 + $0xbc] sm:$0xf]
    %v1123 = vld [vmem:[%s5 + $0xc0] sm:$0xf]
    %v1124 = vld [vmem:[%s5 + $0xc4] sm:$0xf]
    %v1125 = vld [vmem:[%s5 + $0xc8] sm:$0xf]
    %v1126 = vld [vmem:[%s5 + $0xcc] sm:$0xf]
    %v1127 = vld [vmem:[%s5 + $0xd0] sm:$0xf]
    %v1128 = vld [vmem:[%s5 + $0xd4] sm:$0xf]
    %v1129 = vld [vmem:[%s5 + $0xd8] sm:$0xf]
    %v1130 = vld [vmem:[%s5 + $0xdc] sm:$0xf]
    %v1131 = vld [vmem:[%s5 + $0xe0] sm:$0xf]
    %v1132 = vld [vmem:[%s5 + $0xe4] sm:$0xf]
    %v1133 = vld [vmem:[%s5 + $0xe8] sm:$0xf]
    %v1134 = vld [vmem:[%s5 + $0xec] sm:$0xf]
    %v1135 = vld [vmem:[%s5 + $0xf0] sm:$0xf]
    %v1136 = vld [vmem:[%s5 + $0xf4] sm:$0xf]
    %v1137 = vld [vmem:[%s5 + $0xf8] sm:$0xf]
    %v1138 = vld [vmem:[%s5 + $0xfc] sm:$0xf]
    %v1139 = vld [vmem:[%s5 + $0x100] sm:$0xf]
    %v1140 = vld [vmem:[%s5 + $0x104] sm:$0xf]
    %v1141 = vld [vmem:[%s5 + $0x108] sm:$0xf]
    %v1142 = vld [vmem:[%s5 + $0x10c] sm:$0xf]
    %v1143 = vld [vmem:[%s5 + $0x110] sm:$0xf]
    %v1144 = vld [vmem:[%s5 + $0x114] sm:$0xf]
    %v1145 = vld [vmem:[%s5 + $0x118] sm:$0xf]
    %v1146 = vld [vmem:[%s5 + $0x11c] sm:$0xf]
    %v1147 = vld [vmem:[%s5 + $0x120] sm:$0xf]
    %v1148 = vld [vmem:[%s5 + $0x124] sm:$0xf]
    %v1149 = vld [vmem:[%s5 + $0x128] sm:$0xf]
    %v1150 = vld [vmem:[%s5 + $0x12c] sm:$0xf]
    %v1151 = vld [vmem:[%s5 + $0x130] sm:$0xf]
    %v1152 = vld [vmem:[%s5 + $0x134] sm:$0xf]
    %v1153 = vld [vmem:[%s5 + $0x138] sm:$0xf]
    %v1154 = vld [vmem:[%s5 + $0x13c] sm:$0xf]
    %v1155 = vld [vmem:[%s5 + $0x140] sm:$0xf]
    %v1156 = vld [vmem:[%s5 + $0x144] sm:$0xf]
    %v1157 = vld [vmem:[%s5 + $0x148] sm:$0xf]
    %v1158 = vld [vmem:[%s5 + $0x14c] sm:$0xf]
    %v1159 = vld [vmem:[%s5 + $0x150] sm:$0xf]
    %v1160 = vld [vmem:[%s5 + $0x154] sm:$0xf]
    %v1161 = vld [vmem:[%s5 + $0x158] sm:$0xf]
    %v1162 = vld [vmem:[%s5 + $0x15c] sm:$0xf]
    %v1163 = vld [vmem:[%s5 + $0x160] sm:$0xf]
    %v1164 = vld [vmem:[%s5 + $0x164] sm:$0xf]
    %v1165 = vld [vmem:[%s5 + $0x168] sm:$0xf]
    %v1166 = vld [vmem:[%s5 + $0x16c] sm:$0xf]
    %v1167 = vld [vmem:[%s5 + $0x170] sm:$0xf]
    %v1168 = vld [vmem:[%s5 + $0x174] sm:$0xf]
    %v1169 = vld [vmem:[%s5 + $0x178] sm:$0xf]
    %v1170 = vld [vmem:[%s5 + $0x17c] sm:$0xf]
    %v1171 = vld [vmem:[%s5 + $0x180] sm:$0xf]
    %v1172 = vld [vmem:[%s5 + $0x184] sm:$0xf]
    %v1173 = vld [vmem:[%s5 + $0x188] sm:$0xf]
    %v1174 = vld [vmem:[%s5 + $0x18c] sm:$0xf]
    %v1175 = vld [vmem:[%s5 + $0x190] sm:$0xf]
    %v1176 = vld [vmem:[%s5 + $0x194] sm:$0xf]
    %v1177 = vld [vmem:[%s5 + $0x198] sm:$0xf]
    %v1178 = vld [vmem:[%s5 + $0x19c] sm:$0xf]
    %v1179 = vld [vmem:[%s5 + $0x1a0] sm:$0xf]
    %v1180 = vld [vmem:[%s5 + $0x1a4] sm:$0xf]
    %v1181 = vld [vmem:[%s5 + $0x1a8] sm:$0xf]
    %v1182 = vld [vmem:[%s5 + $0x1ac] sm:$0xf]
    %v1183 = vld [vmem:[%s5 + $0x1b0] sm:$0xf]
    %v1184 = vld [vmem:[%s5 + $0x1b4] sm:$0xf]
    %v1185 = vld [vmem:[%s5 + $0x1b8] sm:$0xf]
    %v1186 = vld [vmem:[%s5 + $0x1bc] sm:$0xf]
    %v1187 = vld [vmem:[%s5 + $0x1c0] sm:$0xf]
    %v1188 = vld [vmem:[%s5 + $0x1c4] sm:$0xf]
    %v1189 = vld [vmem:[%s5 + $0x1c8] sm:$0xf]
    %v1190 = vld [vmem:[%s5 + $0x1cc] sm:$0xf]
    %v1191 = vld [vmem:[%s5 + $0x1d0] sm:$0xf]
    %v1192 = vld [vmem:[%s5 + $0x1d4] sm:$0xf]
    %v1193 = vld [vmem:[%s5 + $0x1d8] sm:$0xf]
    %v1194 = vld [vmem:[%s5 + $0x1dc] sm:$0xf]
    %v1195 = vld [vmem:[%s5 + $0x1e0] sm:$0xf]
    %v1196 = vld [vmem:[%s5 + $0x1e4] sm:$0xf]
    %v1197 = vld [vmem:[%s5 + $0x1e8] sm:$0xf]
    %v1198 = vld [vmem:[%s5 + $0x1ec] sm:$0xf]
    %v1199 = vld [vmem:[%s5 + $0x1f0] sm:$0xf]
    %v1200 = vld [vmem:[%s5 + $0x1f4] sm:$0xf]
    %v1201 = vld [vmem:[%s5 + $0x1f8] sm:$0xf]
    %v1202 = vld [vmem:[%s5 + $0x1fc] sm:$0xf]
    %v1331 = vunpack.c.l.b16 %v1075
    %v1332 = vunpack.c.l.b16 %v1076
    %v1333 = vunpack.c.l.b16 %v1077
    %v1334 = vunpack.c.l.b16 %v1078
    %v1335 = vunpack.c.l.b16 %v1079
    %v1336 = vunpack.c.l.b16 %v1080
    %v1337 = vunpack.c.l.b16 %v1081
    %v1338 = vunpack.c.l.b16 %v1082
    %v1339 = vunpack.c.l.b16 %v1083
    %v1340 = vunpack.c.l.b16 %v1084
    %v1341 = vunpack.c.l.b16 %v1085
    %v1342 = vunpack.c.l.b16 %v1086
    %v1343 = vunpack.c.l.b16 %v1087
    %v1344 = vunpack.c.l.b16 %v1088
    %v1345 = vunpack.c.l.b16 %v1089
    %v1346 = vunpack.c.l.b16 %v1090
    %v1347 = vunpack.c.l.b16 %v1091
    %v1348 = vunpack.c.l.b16 %v1092
    %v1349 = vunpack.c.l.b16 %v1093
    %v1350 = vunpack.c.l.b16 %v1094
    %v1351 = vunpack.c.l.b16 %v1095
    %v1352 = vunpack.c.l.b16 %v1096
    %v1353 = vunpack.c.l.b16 %v1097
    %v1354 = vunpack.c.l.b16 %v1098
    %v1355 = vunpack.c.l.b16 %v1099
    %v1356 = vunpack.c.l.b16 %v1100
    %v1357 = vunpack.c.l.b16 %v1101
    %v1358 = vunpack.c.l.b16 %v1102
    %v1359 = vunpack.c.l.b16 %v1103
    %v1360 = vunpack.c.l.b16 %v1104
    %v1361 = vunpack.c.l.b16 %v1105
    %v1362 = vunpack.c.l.b16 %v1106
    %v1363 = vunpack.c.l.b16 %v1107
    %v1364 = vunpack.c.l.b16 %v1108
    %v1365 = vunpack.c.l.b16 %v1109
    %v1366 = vunpack.c.l.b16 %v1110
    %v1367 = vunpack.c.l.b16 %v1111
    %v1368 = vunpack.c.l.b16 %v1112
    %v1369 = vunpack.c.l.b16 %v1113
    %v1370 = vunpack.c.l.b16 %v1114
    %v1371 = vunpack.c.l.b16 %v1115
    %v1372 = vunpack.c.l.b16 %v1116
    %v1373 = vunpack.c.l.b16 %v1117
    %v1374 = vunpack.c.l.b16 %v1118
    %v1375 = vunpack.c.l.b16 %v1119
    %v1376 = vunpack.c.l.b16 %v1120
    %v1377 = vunpack.c.l.b16 %v1121
    %v1378 = vunpack.c.l.b16 %v1122
    %v1379 = vunpack.c.l.b16 %v1123
    %v1380 = vunpack.c.l.b16 %v1124
    %v1381 = vunpack.c.l.b16 %v1125
    %v1382 = vunpack.c.l.b16 %v1126
    %v1383 = vunpack.c.l.b16 %v1127
    %v1384 = vunpack.c.l.b16 %v1128
    %v1385 = vunpack.c.l.b16 %v1129
    %v1386 = vunpack.c.l.b16 %v1130
    %v1387 = vunpack.c.l.b16 %v1131
    %v1388 = vunpack.c.l.b16 %v1132
    %v1389 = vunpack.c.l.b16 %v1133
    %v1390 = vunpack.c.l.b16 %v1134
    %v1391 = vunpack.c.l.b16 %v1135
    %v1392 = vunpack.c.l.b16 %v1136
    %v1393 = vunpack.c.l.b16 %v1137
    %v1394 = vunpack.c.l.b16 %v1138
    %v1395 = vunpack.c.l.b16 %v1139
    %v1396 = vunpack.c.l.b16 %v1140
    %v1397 = vunpack.c.l.b16 %v1141
    %v1398 = vunpack.c.l.b16 %v1142
    %v1399 = vunpack.c.l.b16 %v1143
    %v1400 = vunpack.c.l.b16 %v1144
    %v1401 = vunpack.c.l.b16 %v1145
    %v1402 = vunpack.c.l.b16 %v1146
    %v1403 = vunpack.c.l.b16 %v1147
    %v1404 = vunpack.c.l.b16 %v1148
    %v1405 = vunpack.c.l.b16 %v1149
    %v1406 = vunpack.c.l.b16 %v1150
    %v1407 = vunpack.c.l.b16 %v1151
    %v1408 = vunpack.c.l.b16 %v1152
    %v1409 = vunpack.c.l.b16 %v1153
    %v1410 = vunpack.c.l.b16 %v1154
    %v1411 = vunpack.c.l.b16 %v1155
    %v1412 = vunpack.c.l.b16 %v1156
    %v1413 = vunpack.c.l.b16 %v1157
    %v1414 = vunpack.c.l.b16 %v1158
    %v1415 = vunpack.c.l.b16 %v1159
    %v1416 = vunpack.c.l.b16 %v1160
    %v1417 = vunpack.c.l.b16 %v1161
    %v1418 = vunpack.c.l.b16 %v1162
    %v1419 = vunpack.c.l.b16 %v1163
    %v1420 = vunpack.c.l.b16 %v1164
    %v1421 = vunpack.c.l.b16 %v1165
    %v1422 = vunpack.c.l.b16 %v1166
    %v1423 = vunpack.c.l.b16 %v1167
    %v1424 = vunpack.c.l.b16 %v1168
    %v1425 = vunpack.c.l.b16 %v1169
    %v1426 = vunpack.c.l.b16 %v1170
    %v1427 = vunpack.c.l.b16 %v1171
    %v1428 = vunpack.c.l.b16 %v1172
    %v1429 = vunpack.c.l.b16 %v1173
    %v1430 = vunpack.c.l.b16 %v1174
    %v1431 = vunpack.c.l.b16 %v1175
    %v1432 = vunpack.c.l.b16 %v1176
    %v1433 = vunpack.c.l.b16 %v1177
    %v1434 = vunpack.c.l.b16 %v1178
    %v1435 = vunpack.c.l.b16 %v1179
    %v1436 = vunpack.c.l.b16 %v1180
    %v1437 = vunpack.c.l.b16 %v1181
    %v1438 = vunpack.c.l.b16 %v1182
    %v1439 = vunpack.c.l.b16 %v1183
    %v1440 = vunpack.c.l.b16 %v1184
    %v1441 = vunpack.c.l.b16 %v1185
    %v1442 = vunpack.c.l.b16 %v1186
    %v1443 = vunpack.c.l.b16 %v1187
    %v1444 = vunpack.c.l.b16 %v1188
    %v1445 = vunpack.c.l.b16 %v1189
    %v1446 = vunpack.c.l.b16 %v1190
    %v1447 = vunpack.c.l.b16 %v1191
    %v1448 = vunpack.c.l.b16 %v1192
    %v1449 = vunpack.c.l.b16 %v1193
    %v1450 = vunpack.c.l.b16 %v1194
    %v1451 = vunpack.c.l.b16 %v1195
    %v1452 = vunpack.c.l.b16 %v1196
    %v1453 = vunpack.c.l.b16 %v1197
    %v1454 = vunpack.c.l.b16 %v1198
    %v1455 = vunpack.c.l.b16 %v1199
    %v1456 = vunpack.c.l.b16 %v1200
    %v1457 = vunpack.c.l.b16 %v1201
    %v1458 = vunpack.c.l.b16 %v1202
    %v1459 = vpack.c.b16 %v1332, %v1331
    %v1460 = vpack.c.b16 %v1334, %v1333
    %v1461 = vpack.c.b16 %v1336, %v1335
    %v1462 = vpack.c.b16 %v1338, %v1337
    %v1463 = vpack.c.b16 %v1340, %v1339
    %v1464 = vpack.c.b16 %v1342, %v1341
    %v1465 = vpack.c.b16 %v1344, %v1343
    %v1466 = vpack.c.b16 %v1346, %v1345
    %v1467 = vpack.c.b16 %v1348, %v1347
    %v1468 = vpack.c.b16 %v1350, %v1349
    %v1469 = vpack.c.b16 %v1352, %v1351
    %v1470 = vpack.c.b16 %v1354, %v1353
    %v1471 = vpack.c.b16 %v1356, %v1355
    %v1472 = vpack.c.b16 %v1358, %v1357
    %v1473 = vpack.c.b16 %v1360, %v1359
    %v1474 = vpack.c.b16 %v1362, %v1361
    %v1475 = vpack.c.b16 %v1364, %v1363
    %v1476 = vpack.c.b16 %v1366, %v1365
    %v1477 = vpack.c.b16 %v1368, %v1367
    %v1478 = vpack.c.b16 %v1370, %v1369
    %v1479 = vpack.c.b16 %v1372, %v1371
    %v1480 = vpack.c.b16 %v1374, %v1373
    %v1481 = vpack.c.b16 %v1376, %v1375
    %v1482 = vpack.c.b16 %v1378, %v1377
    %v1483 = vpack.c.b16 %v1380, %v1379
    %v1484 = vpack.c.b16 %v1382, %v1381
    %v1485 = vpack.c.b16 %v1384, %v1383
    %v1486 = vpack.c.b16 %v1386, %v1385
    %v1487 = vpack.c.b16 %v1388, %v1387
    %v1488 = vpack.c.b16 %v1390, %v1389
    %v1489 = vpack.c.b16 %v1392, %v1391
    %v1490 = vpack.c.b16 %v1394, %v1393
    %v1491 = vpack.c.b16 %v1396, %v1395
    %v1492 = vpack.c.b16 %v1398, %v1397
    %v1493 = vpack.c.b16 %v1400, %v1399
    %v1494 = vpack.c.b16 %v1402, %v1401
    %v1495 = vpack.c.b16 %v1404, %v1403
    %v1496 = vpack.c.b16 %v1406, %v1405
    %v1497 = vpack.c.b16 %v1408, %v1407
    %v1498 = vpack.c.b16 %v1410, %v1409
    %v1499 = vpack.c.b16 %v1412, %v1411
    %v1500 = vpack.c.b16 %v1414, %v1413
    %v1501 = vpack.c.b16 %v1416, %v1415
    %v1502 = vpack.c.b16 %v1418, %v1417
    %v1503 = vpack.c.b16 %v1420, %v1419
    %v1504 = vpack.c.b16 %v1422, %v1421
    %v1505 = vpack.c.b16 %v1424, %v1423
    %v1506 = vpack.c.b16 %v1426, %v1425
    %v1507 = vpack.c.b16 %v1428, %v1427
    %v1508 = vpack.c.b16 %v1430, %v1429
    %v1509 = vpack.c.b16 %v1432, %v1431
    %v1510 = vpack.c.b16 %v1434, %v1433
    %v1511 = vpack.c.b16 %v1436, %v1435
    %v1512 = vpack.c.b16 %v1438, %v1437
    %v1513 = vpack.c.b16 %v1440, %v1439
    %v1514 = vpack.c.b16 %v1442, %v1441
    %v1515 = vpack.c.b16 %v1444, %v1443
    %v1516 = vpack.c.b16 %v1446, %v1445
    %v1517 = vpack.c.b16 %v1448, %v1447
    %v1518 = vpack.c.b16 %v1450, %v1449
    %v1519 = vpack.c.b16 %v1452, %v1451
    %v1520 = vpack.c.b16 %v1454, %v1453
    %v1521 = vpack.c.b16 %v1456, %v1455
    %v1522 = vpack.c.b16 %v1458, %v1457
    %1587 = vmatprep.subr.bf16.mxu0 0
    %1588 = vmatpush1.bf16.msra.mxu0 %v1459
    %1589 = vmatprep.subr.bf16.mxu0 0
    %1590 = vmatpush1.bf16.msra.mxu0 %v1460
    %1591 = vmatprep.subr.bf16.mxu0 0
    %1592 = vmatpush1.bf16.msra.mxu0 %v1461
    %1593 = vmatprep.subr.bf16.mxu0 0
    %1594 = vmatpush1.bf16.msra.mxu0 %v1462
    %1595 = vmatprep.subr.bf16.mxu0 0
    %1596 = vmatpush1.bf16.msra.mxu0 %v1463
    %1597 = vmatprep.subr.bf16.mxu0 0
    %1598 = vmatpush1.bf16.msra.mxu0 %v1464
    %1599 = vmatprep.subr.bf16.mxu0 0
    %1600 = vmatpush1.bf16.msra.mxu0 %v1465
    %1601 = vmatprep.subr.bf16.mxu0 0
    %1602 = vmatpush1.bf16.msra.mxu0 %v1466
    %1603 = vmatprep.subr.bf16.mxu0 0
    %1604 = vmatpush1.bf16.msra.mxu0 %v1467
    %1605 = vmatprep.subr.bf16.mxu0 0
    %1606 = vmatpush1.bf16.msra.mxu0 %v1468
    %1607 = vmatprep.subr.bf16.mxu0 0
    %1608 = vmatpush1.bf16.msra.mxu0 %v1469
    %1609 = vmatprep.subr.bf16.mxu0 0
    %1610 = vmatpush1.bf16.msra.mxu0 %v1470
    %1611 = vmatprep.subr.bf16.mxu0 0
    %1612 = vmatpush1.bf16.msra.mxu0 %v1471
    %1613 = vmatprep.subr.bf16.mxu0 0
    %1614 = vmatpush1.bf16.msra.mxu0 %v1472
    %1615 = vmatprep.subr.bf16.mxu0 0
    %1616 = vmatpush1.bf16.msra.mxu0 %v1473
    %1617 = vmatprep.subr.bf16.mxu0 0
    %1618 = vmatpush1.bf16.msra.mxu0 %v1474
    %1619 = vmatprep.mubr.bf16.mxu0 %v1060
    %1620 = vmatmul.mubr.bf16.gmra.mrb[0].mxu0 %v1059
    %v1621 = vpop.f32.mrb[0].mxu0
    %v1622 = vadd.f32 0.0, %v1621
    %v1623 = vpop.f32.mrb[0].mxu0
    %v1624 = vpop.f32.mrb[0].mxu0
    %v1625 = vadd.f32 0.0, %v1624
    %v1626 = vpop.f32.mrb[0].mxu0
    %1627 = vmatprep.mubr.bf16.mxu0 %v1068
    %1628 = vmatmul.mubr.bf16.gmra.mrb[0].mxu0 %v1067
    %v1629 = vpop.f32.mrb[0].mxu0
    %v1630 = vadd.f32 0.0, %v1629
    %v1631 = vpop.f32.mrb[0].mxu0
    %v1632 = vpop.f32.mrb[0].mxu0
    %v1633 = vadd.f32 0.0, %v1632
    %v1634 = vpop.f32.mrb[0].mxu0
    %1635 = vdwg.mxu0
    %1636 = vmatprep.subr.bf16.mxu0 0
    %1637 = vmatpush1.bf16.msra.mxu0 %v1475
    %1638 = vmatprep.subr.bf16.mxu0 0
    %1639 = vmatpush1.bf16.msra.mxu0 %v1476
    %1640 = vmatprep.subr.bf16.mxu0 0
    %1641 = vmatpush1.bf16.msra.mxu0 %v1477
    %1642 = vmatprep.subr.bf16.mxu0 0
    %1643 = vmatpush1.bf16.msra.mxu0 %v1478
    %1644 = vmatprep.subr.bf16.mxu0 0
    %1645 = vmatpush1.bf16.msra.mxu0 %v1479
    %1646 = vmatprep.subr.bf16.mxu0 0
    %1647 = vmatpush1.bf16.msra.mxu0 %v1480
    %1648 = vmatprep.subr.bf16.mxu0 0
    %1649 = vmatpush1.bf16.msra.mxu0 %v1481
    %1650 = vmatprep.subr.bf16.mxu0 0
    %1651 = vmatpush1.bf16.msra.mxu0 %v1482
    %1652 = vmatprep.subr.bf16.mxu0 0
    %1653 = vmatpush1.bf16.msra.mxu0 %v1483
    %1654 = vmatprep.subr.bf16.mxu0 0
    %1655 = vmatpush1.bf16.msra.mxu0 %v1484
    %1656 = vmatprep.subr.bf16.mxu0 0
    %1657 = vmatpush1.bf16.msra.mxu0 %v1485
    %1658 = vmatprep.subr.bf16.mxu0 0
    %1659 = vmatpush1.bf16.msra.mxu0 %v1486
    %1660 = vmatprep.subr.bf16.mxu0 0
    %1661 = vmatpush1.bf16.msra.mxu0 %v1487
    %1662 = vmatprep.subr.bf16.mxu0 0
    %1663 = vmatpush1.bf16.msra.mxu0 %v1488
    %1664 = vmatprep.subr.bf16.mxu0 0
    %1665 = vmatpush1.bf16.msra.mxu0 %v1489
    %1666 = vmatprep.subr.bf16.mxu0 0
    %1667 = vmatpush1.bf16.msra.mxu0 %v1490
    %1668 = vmatprep.mubr.bf16.mxu0 %v1062
    %1669 = vmatmul.mubr.bf16.gmra.mrb[0].mxu0 %v1061
    %v1670 = vpop.f32.mrb[0].mxu0
    %v1671 = vadd.f32 %v1622, %v1670
    %v1672 = vpop.f32.mrb[0].mxu0
    %v1673 = vpop.f32.mrb[0].mxu0
    %v1674 = vadd.f32 %v1625, %v1673
    %v1675 = vpop.f32.mrb[0].mxu0
    %1676 = vmatprep.mubr.bf16.mxu0 %v1070
    %1677 = vmatmul.mubr.bf16.gmra.mrb[0].mxu0 %v1069
    %v1678 = vpop.f32.mrb[0].mxu0
    %v1679 = vadd.f32 %v1630, %v1678
    %v1680 = vpop.f32.mrb[0].mxu0
    %v1681 = vpop.f32.mrb[0].mxu0
    %v1682 = vadd.f32 %v1633, %v1681
    %v1683 = vpop.f32.mrb[0].mxu0
    %1684 = vdwg.mxu0
    %1685 = vmatprep.subr.bf16.mxu0 0
    %1686 = vmatpush1.bf16.msra.mxu0 %v1491
    %1687 = vmatprep.subr.bf16.mxu0 0
    %1688 = vmatpush1.bf16.msra.mxu0 %v1492
    %1689 = vmatprep.subr.bf16.mxu0 0
    %1690 = vmatpush1.bf16.msra.mxu0 %v1493
    %1691 = vmatprep.subr.bf16.mxu0 0
    %1692 = vmatpush1.bf16.msra.mxu0 %v1494
    %1693 = vmatprep.subr.bf16.mxu0 0
    %1694 = vmatpush1.bf16.msra.mxu0 %v1495
    %1695 = vmatprep.subr.bf16.mxu0 0
    %1696 = vmatpush1.bf16.msra.mxu0 %v1496
    %1697 = vmatprep.subr.bf16.mxu0 0
    %1698 = vmatpush1.bf16.msra.mxu0 %v1497
    %1699 = vmatprep.subr.bf16.mxu0 0
    %1700 = vmatpush1.bf16.msra.mxu0 %v1498
    %1701 = vmatprep.subr.bf16.mxu0 0
    %1702 = vmatpush1.bf16.msra.mxu0 %v1499
    %1703 = vmatprep.subr.bf16.mxu0 0
    %1704 = vmatpush1.bf16.msra.mxu0 %v1500
    %1705 = vmatprep.subr.bf16.mxu0 0
    %1706 = vmatpush1.bf16.msra.mxu0 %v1501
    %1707 = vmatprep.subr.bf16.mxu0 0
    %1708 = vmatpush1.bf16.msra.mxu0 %v1502
    %1709 = vmatprep.subr.bf16.mxu0 0
    %1710 = vmatpush1.bf16.msra.mxu0 %v1503
    %1711 = vmatprep.subr.bf16.mxu0 0
    %1712 = vmatpush1.bf16.msra.mxu0 %v1504
    %1713 = vmatprep.subr.bf16.mxu0 0
    %1714 = vmatpush1.bf16.msra.mxu0 %v1505
    %1715 = vmatprep.subr.bf16.mxu0 0
    %1716 = vmatpush1.bf16.msra.mxu0 %v1506
    %1717 = vmatprep.mubr.bf16.mxu0 %v1064
    %1718 = vmatmul.mubr.bf16.gmra.mrb[0].mxu0 %v1063
    %v1719 = vpop.f32.mrb[0].mxu0
    %v1720 = vadd.f32 %v1671, %v1719
    %v1721 = vpop.f32.mrb[0].mxu0
    %v1722 = vpop.f32.mrb[0].mxu0
    %v1723 = vadd.f32 %v1674, %v1722
    %v1724 = vpop.f32.mrb[0].mxu0
    %1725 = vmatprep.mubr.bf16.mxu0 %v1072
    %1726 = vmatmul.mubr.bf16.gmra.mrb[0].mxu0 %v1071
    %v1727 = vpop.f32.mrb[0].mxu0
    %v1728 = vadd.f32 %v1679, %v1727
    %v1729 = vpop.f32.mrb[0].mxu0
    %v1730 = vpop.f32.mrb[0].mxu0
    %v1731 = vadd.f32 %v1682, %v1730
    %v1732 = vpop.f32.mrb[0].mxu0
    %1733 = vdwg.mxu0
    %1734 = vmatprep.subr.bf16.mxu0 0
    %1735 = vmatpush1.bf16.msra.mxu0 %v1507
    %1736 = vmatprep.subr.bf16.mxu0 0
    %1737 = vmatpush1.bf16.msra.mxu0 %v1508
    %1738 = vmatprep.subr.bf16.mxu0 0
    %1739 = vmatpush1.bf16.msra.mxu0 %v1509
    %1740 = vmatprep.subr.bf16.mxu0 0
    %1741 = vmatpush1.bf16.msra.mxu0 %v1510
    %1742 = vmatprep.subr.bf16.mxu0 0
    %1743 = vmatpush1.bf16.msra.mxu0 %v1511
    %1744 = vmatprep.subr.bf16.mxu0 0
    %1745 = vmatpush1.bf16.msra.mxu0 %v1512
    %1746 = vmatprep.subr.bf16.mxu0 0
    %1747 = vmatpush1.bf16.msra.mxu0 %v1513
    %1748 = vmatprep.subr.bf16.mxu0 0
    %1749 = vmatpush1.bf16.msra.mxu0 %v1514
    %1750 = vmatprep.subr.bf16.mxu0 0
    %1751 = vmatpush1.bf16.msra.mxu0 %v1515
    %1752 = vmatprep.subr.bf16.mxu0 0
    %1753 = vmatpush1.bf16.msra.mxu0 %v1516
    %1754 = vmatprep.subr.bf16.mxu0 0
    %1755 = vmatpush1.bf16.msra.mxu0 %v1517
    %1756 = vmatprep.subr.bf16.mxu0 0
    %1757 = vmatpush1.bf16.msra.mxu0 %v1518
    %1758 = vmatprep.subr.bf16.mxu0 0
    %1759 = vmatpush1.bf16.msra.mxu0 %v1519
    %1760 = vmatprep.subr.bf16.mxu0 0
    %1761 = vmatpush1.bf16.msra.mxu0 %v1520
    %1762 = vmatprep.subr.bf16.mxu0 0
    %1763 = vmatpush1.bf16.msra.mxu0 %v1521
    %1764 = vmatprep.subr.bf16.mxu0 0
    %1765 = vmatpush1.bf16.msra.mxu0 %v1522
    %1766 = vmatprep.mubr.bf16.mxu0 %v1066
    %1767 = vmatmul.mubr.bf16.gmra.mrb[0].mxu0 %v1065
    %v1768 = vpop.f32.mrb[0].mxu0
    %v1769 = vadd.f32 %v1720, %v1768
    %v1770 = vpop.f32.mrb[0].mxu0
    %v1771 = vpop.f32.mrb[0].mxu0
    %v1772 = vadd.f32 %v1723, %v1771
    %v1773 = vpop.f32.mrb[0].mxu0
    %1774 = vmatprep.mubr.bf16.mxu0 %v1074
    %1775 = vmatmul.mubr.bf16.gmra.mrb[0].mxu0 %v1073
    %v1776 = vpop.f32.mrb[0].mxu0
    %v1777 = vadd.f32 %v1728, %v1776
    %v1778 = vpop.f32.mrb[0].mxu0
    %v1779 = vpop.f32.mrb[0].mxu0
    %v1780 = vadd.f32 %v1731, %v1779
    %v1781 = vpop.f32.mrb[0].mxu0
    %1782 = vdwg.mxu0
    %v1783 = vld [vmem:[%s6] sm:$0x1]
    %v1784 = vld [vmem:[%s7] sm:$0x1]
    %vm1785 = vcmask 261120
    %v1786 = vsel %vm1785, %v1769, 0.0
    %v1787 = vsel %vm1785, %v1772, 0.0
    %v1788 = vadd.f32 %v1786, %v1787
    %v1789 = vsel %vm1785, %v1777, 0.0
    %v1790 = vadd.f32 %v1788, %v1789
    %v1791 = vsel %vm1785, %v1780, 0.0
    %v1792 = vadd.f32 %v1790, %v1791
    %v1793 = vrot.slane %v1792, 4
    %v1794 = vadd.f32 %v1792, %v1793
    %v1795 = vrot.slane %v1794, 2
    %v1796 = vadd.f32 %v1794, %v1795
    %v1797 = vrot.slane %v1796, 1
    %v1798 = vadd.f32 %v1796, %v1797
    %v1799 = vmul.f32 %v1769, %v1769
    %v1800 = vmul.f32 %v1772, %v1772
    %v1801 = vmul.f32 %v1777, %v1777
    %v1802 = vmul.f32 %v1780, %v1780
    %v1803 = vsel %vm1785, %v1799, 0.0
    %v1804 = vsel %vm1785, %v1800, 0.0
    %v1805 = vadd.f32 %v1803, %v1804
    %v1806 = vsel %vm1785, %v1801, 0.0
    %v1807 = vadd.f32 %v1805, %v1806
    %v1808 = vsel %vm1785, %v1802, 0.0
    %v1809 = vadd.f32 %v1807, %v1808
    %v1810 = vrot.slane %v1809, 4
    %v1811 = vadd.f32 %v1809, %v1810
    %v1812 = vrot.slane %v1811, 2
    %v1813 = vadd.f32 %v1811, %v1812
    %v1814 = vrot.slane %v1813, 1
    %v1815 = vadd.f32 %v1813, %v1814
    %v1816 = vmul.f32 %v1798, 0.03125
    %v1817 = vmul.f32 %v1815, 0.03125
    %v1818 = vmul.f32 %v1816, %v1816
    %v1819 = vsub.f32 %v1817, %v1818
    %v1820 = vmax.f32 %v1819, 0.0
    %v1821 = vadd.f32 %v1820, 1e-05
    %v1822 = vrsqrt.pop %v1821
    %v1823 = vmul.f32 %v1783, %v1822
    %v1824 = vmul.f32 %v1816, %v1823
    %v1825 = vsub.f32 %v1784, %v1824
    %v1827 = vlaneseq
    %v1828 = vshrl.u32 %v1827, 7
    %v1829 = vsub.s32 0, %v1828
    %v1830 = vrot.slane %v1823, %v1829
    %v1832 = vmul.f32 %v1769, %v1830
    %v1833 = vmul.f32 %v1772, %v1830
    %v1834 = vmul.f32 %v1777, %v1830
    %v1835 = vmul.f32 %v1780, %v1830
    %v1837 = vlaneseq
    %v1838 = vshrl.u32 %v1837, 7
    %v1839 = vsub.s32 0, %v1838
    %v1840 = vrot.slane %v1825, %v1839
    %v1842 = vadd.f32 %v1832, %v1840
    %v1843 = vadd.f32 %v1833, %v1840
    %v1844 = vadd.f32 %v1834, %v1840
    %v1845 = vadd.f32 %v1835, %v1840
    %vm1846 = vcmp.ge.f32.partialorder %v1842, 0.0
    %vm1847 = vcmp.ge.f32.partialorder %v1843, 0.0
    %vm1848 = vcmp.ge.f32.partialorder %v1844, 0.0
    %vm1849 = vcmp.ge.f32.partialorder %v1845, 0.0
    %v1850 = vmul.f32 %v1842, 0.01
    %v1851 = vmul.f32 %v1843, 0.01
    %v1852 = vmul.f32 %v1844, 0.01
    %v1853 = vmul.f32 %v1845, 0.01
    %v1854 = vsel %vm1846, %v1842, %v1850
    %v1855 = vsel %vm1847, %v1843, %v1851
    %v1856 = vsel %vm1848, %v1844, %v1852
    %v1857 = vsel %vm1849, %v1845, %v1853
    %v1858 = vpack.c.bf16 %v1855, %v1854
    %v1859 = vpack.c.bf16 %v1857, %v1856
    %v1860 = vld [vmem:[%s8] sm:$0xf]
    %v1861 = vld [vmem:[%s8 + $0x4] sm:$0xf]
    %v1862 = vld [vmem:[%s8 + $0x8] sm:$0xf]
    %v1863 = vld [vmem:[%s8 + $0xc] sm:$0xf]
    %v1864 = vld [vmem:[%s8 + $0x10] sm:$0xf]
    %v1865 = vld [vmem:[%s8 + $0x14] sm:$0xf]
    %v1866 = vld [vmem:[%s8 + $0x18] sm:$0xf]
    %v1867 = vld [vmem:[%s8 + $0x1c] sm:$0xf]
    %v1876 = vunpack.c.l.b16 %v1860
    %v1877 = vunpack.c.l.b16 %v1861
    %v1878 = vunpack.c.l.b16 %v1862
    %v1879 = vunpack.c.l.b16 %v1863
    %v1880 = vunpack.c.l.b16 %v1864
    %v1881 = vunpack.c.l.b16 %v1865
    %v1882 = vunpack.c.l.b16 %v1866
    %v1883 = vunpack.c.l.b16 %v1867
    %v1884 = vpack.c.b16 %v1877, %v1876
    %v1885 = vpack.c.b16 %v1879, %v1878
    %v1886 = vpack.c.b16 %v1881, %v1880
    %v1887 = vpack.c.b16 %v1883, %v1882
    %vm1888 = vcmask 130048
    %v1890 = vsel %vm1888, %v1884, 0
    %v1893 = vsel %vm1888, %v1885, 0
    %v1896 = vsel %vm1888, %v1886, 0
    %v1899 = vsel %vm1888, %v1887, 0
    %1901 = vmatprep.subr.bf16.mxu0 0
    %1902 = vmatpush1.bf16.msra.mxu0 %v1858
    %1903 = vmatprep.subr.bf16.mxu0 0
    %1904 = vmatpush1.bf16.msra.mxu0 0
    %1905 = vmatprep.subr.bf16.mxu0 0
    %1906 = vmatpush1.bf16.msra.mxu0 0
    %1907 = vmatprep.subr.bf16.mxu0 0
    %1908 = vmatpush1.bf16.msra.mxu0 0
    %1909 = vmatprep.subr.bf16.mxu0 0
    %1910 = vmatpush1.bf16.msra.mxu0 0
    %1911 = vmatprep.subr.bf16.mxu0 0
    %1912 = vmatpush1.bf16.msra.mxu0 0
    %1913 = vmatprep.subr.bf16.mxu0 0
    %1914 = vmatpush1.bf16.msra.mxu0 0
    %1915 = vmatprep.subr.bf16.mxu0 0
    %1916 = vmatpush1.bf16.msra.mxu0 0
    %1917 = vmatprep.subr.bf16.mxu0 0
    %1918 = vmatpush1.bf16.msra.mxu0 0
    %1919 = vmatprep.subr.bf16.mxu0 0
    %1920 = vmatpush1.bf16.msra.mxu0 0
    %1921 = vmatprep.subr.bf16.mxu0 0
    %1922 = vmatpush1.bf16.msra.mxu0 0
    %1923 = vmatprep.subr.bf16.mxu0 0
    %1924 = vmatpush1.bf16.msra.mxu0 0
    %1925 = vmatprep.subr.bf16.mxu0 0
    %1926 = vmatpush1.bf16.msra.mxu0 0
    %1927 = vmatprep.subr.bf16.mxu0 0
    %1928 = vmatpush1.bf16.msra.mxu0 0
    %1929 = vmatprep.subr.bf16.mxu0 0
    %1930 = vmatpush1.bf16.msra.mxu0 0
    %1931 = vmatprep.subr.bf16.mxu0 0
    %1932 = vmatpush1.bf16.msra.mxu0 0
    %1933 = vmatprep.mubr.bf16.mxu0 0
    %1934 = vmatmul.mubr.bf16.gmra.mrb[0].mxu0 %v1890
    %v1935 = vpop.f32.mrb[0].mxu0
    %v1936 = vadd.f32 0.0, %v1935
    %v1937 = vpop.f32.mrb[0].mxu0
    %v1938 = vpop.f32.mrb[0].mxu0
    %v1939 = vadd.f32 0.0, %v1938
    %v1940 = vpop.f32.mrb[0].mxu0
    %1941 = vmatprep.mubr.bf16.mxu0 0
    %1942 = vmatmul.mubr.bf16.gmra.mrb[0].mxu0 %v1893
    %v1943 = vpop.f32.mrb[0].mxu0
    %v1944 = vadd.f32 0.0, %v1943
    %v1945 = vpop.f32.mrb[0].mxu0
    %v1946 = vpop.f32.mrb[0].mxu0
    %v1947 = vadd.f32 0.0, %v1946
    %v1948 = vpop.f32.mrb[0].mxu0
    %1949 = vmatprep.mubr.bf16.mxu0 0
    %1950 = vmatmul.mubr.bf16.gmra.mrb[0].mxu0 %v1896
    %v1951 = vpop.f32.mrb[0].mxu0
    %v1952 = vadd.f32 0.0, %v1951
    %v1953 = vpop.f32.mrb[0].mxu0
    %v1954 = vpop.f32.mrb[0].mxu0
    %v1955 = vadd.f32 0.0, %v1954
    %v1956 = vpop.f32.mrb[0].mxu0
    %1957 = vmatprep.mubr.bf16.mxu0 0
    %1958 = vmatmul.mubr.bf16.gmra.mrb[0].mxu0 %v1899
    %v1959 = vpop.f32.mrb[0].mxu0
    %v1960 = vadd.f32 0.0, %v1959
    %v1961 = vpop.f32.mrb[0].mxu0
    %v1962 = vpop.f32.mrb[0].mxu0
    %v1963 = vadd.f32 0.0, %v1962
    %v1964 = vpop.f32.mrb[0].mxu0
    %1965 = vdwg.mxu0
    %v1966 = vpack.c.bf16 %v1939, %v1936
    %v1967 = vpack.c.bf16 %v1947, %v1944
    %v1968 = vpack.c.bf16 %v1955, %v1952
    %v1969 = vpack.c.bf16 %v1963, %v1960
    %vm1970 = vcmask 254976
    %1971 = vst.msk [vmem:[#allocation3] sm:$0x3] %vm1970, %v1966
    %v1973 = vunpack.c.l.b16 %v1966
    %v1974 = vpack.c.b16 %v1973, %v1973
    %v1975 = vrot.slane %v1974, 6
    %v1976 = vrot.slane %v1975, 4
    %1977 = vrot.lane.b32.xlu0 %v1976, 32
    %v1978 = vpop.permute.xlu0 %1977
    %vm1980 = vcmask 517376
    %1981 = vst.msk [vmem:[#allocation3] sm:$0x3] %vm1980, %v1978
    %v1982 = vunpack.c.h.b16 %v1966
    %v1983 = vpack.c.b16 %v1982, %v1982
    %1984 = vrot.lane.b32.xlu0 %v1983, 64
    %v1985 = vpop.permute.xlu0 %1984
    %vm1987 = vcmask 779776
    %1988 = vst.msk [vmem:[#allocation3] sm:$0x3] %vm1987, %v1985
    %v1989 = vrot.slane %v1983, 6
    %v1990 = vrot.slane %v1989, 4
    %1991 = vrot.lane.b32.xlu0 %v1990, 96
    %v1992 = vpop.permute.xlu0 %1991
    %vm1994 = vcmask 1042176
    %1995 = vst.msk [vmem:[#allocation3] sm:$0x3] %vm1994, %v1992
    %1996 = vst.msk [vmem:[#allocation3 + $0x4] sm:$0x3] %vm1970, %v1967
    %v1998 = vunpack.c.l.b16 %v1967
    %v1999 = vpack.c.b16 %v1998, %v1998
    %v2000 = vrot.slane %v1999, 6
    %v2001 = vrot.slane %v2000, 4
    %2002 = vrot.lane.b32.xlu0 %v2001, 32
    %v2003 = vpop.permute.xlu0 %2002
    %2005 = vst.msk [vmem:[#allocation3 + $0x4] sm:$0x3] %vm1980, %v2003
    %v2006 = vunpack.c.h.b16 %v1967
    %v2007 = vpack.c.b16 %v2006, %v2006
    %2008 = vrot.lane.b32.xlu0 %v2007, 64
    %v2009 = vpop.permute.xlu0 %2008
    %2011 = vst.msk [vmem:[#allocation3 + $0x4] sm:$0x3] %vm1987, %v2009
    %v2012 = vrot.slane %v2007, 6
    %v2013 = vrot.slane %v2012, 4
    %2014 = vrot.lane.b32.xlu0 %v2013, 96
    %v2015 = vpop.permute.xlu0 %2014
    %2017 = vst.msk [vmem:[#allocation3 + $0x4] sm:$0x3] %vm1994, %v2015
    %2018 = vst.msk [vmem:[#allocation3 + $0x8] sm:$0x3] %vm1970, %v1968
    %v2020 = vunpack.c.l.b16 %v1968
    %v2021 = vpack.c.b16 %v2020, %v2020
    %v2022 = vrot.slane %v2021, 6
    %v2023 = vrot.slane %v2022, 4
    %2024 = vrot.lane.b32.xlu0 %v2023, 32
    %v2025 = vpop.permute.xlu0 %2024
    %2027 = vst.msk [vmem:[#allocation3 + $0x8] sm:$0x3] %vm1980, %v2025
    %v2028 = vunpack.c.h.b16 %v1968
    %v2029 = vpack.c.b16 %v2028, %v2028
    %2030 = vrot.lane.b32.xlu0 %v2029, 64
    %v2031 = vpop.permute.xlu0 %2030
    %2033 = vst.msk [vmem:[#allocation3 + $0x8] sm:$0x3] %vm1987, %v2031
    %v2034 = vrot.slane %v2029, 6
    %v2035 = vrot.slane %v2034, 4
    %2036 = vrot.lane.b32.xlu0 %v2035, 96
    %v2037 = vpop.permute.xlu0 %2036
    %2039 = vst.msk [vmem:[#allocation3 + $0x8] sm:$0x3] %vm1994, %v2037
    %2040 = vst.msk [vmem:[#allocation3 + $0xc] sm:$0x3] %vm1970, %v1969
    %v2042 = vunpack.c.l.b16 %v1969
    %v2043 = vpack.c.b16 %v2042, %v2042
    %v2044 = vrot.slane %v2043, 6
    %v2045 = vrot.slane %v2044, 4
    %2046 = vrot.lane.b32.xlu0 %v2045, 32
    %v2047 = vpop.permute.xlu0 %2046
    %2049 = vst.msk [vmem:[#allocation3 + $0xc] sm:$0x3] %vm1980, %v2047
    %v2050 = vunpack.c.h.b16 %v1969
    %v2051 = vpack.c.b16 %v2050, %v2050
    %2052 = vrot.lane.b32.xlu0 %v2051, 64
    %v2053 = vpop.permute.xlu0 %2052
    %2055 = vst.msk [vmem:[#allocation3 + $0xc] sm:$0x3] %vm1987, %v2053
    %v2056 = vrot.slane %v2051, 6
    %v2057 = vrot.slane %v2056, 4
    %2058 = vrot.lane.b32.xlu0 %v2057, 96
    %v2059 = vpop.permute.xlu0 %2058
    %2061 = vst.msk [vmem:[#allocation3 + $0xc] sm:$0x3] %vm1994, %v2059
    %2062 = vmatprep.subr.bf16.mxu0 0
    %2063 = vmatpush1.bf16.msra.mxu0 %v1859
    %2064 = vmatprep.subr.bf16.mxu0 0
    %2065 = vmatpush1.bf16.msra.mxu0 0
    %2066 = vmatprep.subr.bf16.mxu0 0
    %2067 = vmatpush1.bf16.msra.mxu0 0
    %2068 = vmatprep.subr.bf16.mxu0 0
    %2069 = vmatpush1.bf16.msra.mxu0 0
    %2070 = vmatprep.subr.bf16.mxu0 0
    %2071 = vmatpush1.bf16.msra.mxu0 0
    %2072 = vmatprep.subr.bf16.mxu0 0
    %2073 = vmatpush1.bf16.msra.mxu0 0
    %2074 = vmatprep.subr.bf16.mxu0 0
    %2075 = vmatpush1.bf16.msra.mxu0 0
    %2076 = vmatprep.subr.bf16.mxu0 0
    %2077 = vmatpush1.bf16.msra.mxu0 0
    %2078 = vmatprep.subr.bf16.mxu0 0
    %2079 = vmatpush1.bf16.msra.mxu0 0
    %2080 = vmatprep.subr.bf16.mxu0 0
    %2081 = vmatpush1.bf16.msra.mxu0 0
    %2082 = vmatprep.subr.bf16.mxu0 0
    %2083 = vmatpush1.bf16.msra.mxu0 0
    %2084 = vmatprep.subr.bf16.mxu0 0
    %2085 = vmatpush1.bf16.msra.mxu0 0
    %2086 = vmatprep.subr.bf16.mxu0 0
    %2087 = vmatpush1.bf16.msra.mxu0 0
    %2088 = vmatprep.subr.bf16.mxu0 0
    %2089 = vmatpush1.bf16.msra.mxu0 0
    %2090 = vmatprep.subr.bf16.mxu0 0
    %2091 = vmatpush1.bf16.msra.mxu0 0
    %2092 = vmatprep.subr.bf16.mxu0 0
    %2093 = vmatpush1.bf16.msra.mxu0 0
    %2094 = vmatprep.mubr.bf16.mxu0 0
    %2095 = vmatmul.mubr.bf16.gmra.mrb[0].mxu0 %v1890
    %v2096 = vpop.f32.mrb[0].mxu0
    %v2097 = vadd.f32 0.0, %v2096
    %v2098 = vpop.f32.mrb[0].mxu0
    %v2099 = vpop.f32.mrb[0].mxu0
    %v2100 = vadd.f32 0.0, %v2099
    %v2101 = vpop.f32.mrb[0].mxu0
    %2102 = vmatprep.mubr.bf16.mxu0 0
    %2103 = vmatmul.mubr.bf16.gmra.mrb[0].mxu0 %v1893
    %v2104 = vpop.f32.mrb[0].mxu0
    %v2105 = vadd.f32 0.0, %v2104
    %v2106 = vpop.f32.mrb[0].mxu0
    %v2107 = vpop.f32.mrb[0].mxu0
    %v2108 = vadd.f32 0.0, %v2107
    %v2109 = vpop.f32.mrb[0].mxu0
    %2110 = vmatprep.mubr.bf16.mxu0 0
    %2111 = vmatmul.mubr.bf16.gmra.mrb[0].mxu0 %v1896
    %v2112 = vpop.f32.mrb[0].mxu0
    %v2113 = vadd.f32 0.0, %v2112
    %v2114 = vpop.f32.mrb[0].mxu0
    %v2115 = vpop.f32.mrb[0].mxu0
    %v2116 = vadd.f32 0.0, %v2115
    %v2117 = vpop.f32.mrb[0].mxu0
    %2118 = vmatprep.mubr.bf16.mxu0 0
    %2119 = vmatmul.mubr.bf16.gmra.mrb[0].mxu0 %v1899
    %v2120 = vpop.f32.mrb[0].mxu0
    %v2121 = vadd.f32 0.0, %v2120
    %v2122 = vpop.f32.mrb[0].mxu0
    %v2123 = vpop.f32.mrb[0].mxu0
    %v2124 = vadd.f32 0.0, %v2123
    %v2125 = vpop.f32.mrb[0].mxu0
    %2126 = vdwg.mxu0
    %v2127 = vpack.c.bf16 %v2100, %v2097
    %v2128 = vpack.c.bf16 %v2108, %v2105
    %v2129 = vpack.c.bf16 %v2116, %v2113
    %v2130 = vpack.c.bf16 %v2124, %v2121
    %v2132 = vunpack.c.l.b16 %v2127
    %v2133 = vpack.c.b16 %v2132, %v2132
    %v2134 = vrot.slane %v2133, 6
    %vm2136 = vcmask 257026
    %2137 = vst.msk [vmem:[#allocation3] sm:$0xc] %vm2136, %v2134
    %2138 = vrot.lane.b32.xlu0 %v2133, 32
    %v2139 = vpop.permute.xlu0 %2138
    %vm2141 = vcmask 519426
    %2142 = vst.msk [vmem:[#allocation3] sm:$0xc] %vm2141, %v2139
    %v2143 = vunpack.c.h.b16 %v2127
    %v2144 = vpack.c.b16 %v2143, %v2143
    %v2145 = vrot.slane %v2144, 6
    %2146 = vrot.lane.b32.xlu0 %v2145, 64
    %v2147 = vpop.permute.xlu0 %2146
    %vm2149 = vcmask 781826
    %2150 = vst.msk [vmem:[#allocation3] sm:$0xc] %vm2149, %v2147
    %2151 = vrot.lane.b32.xlu0 %v2144, 96
    %v2152 = vpop.permute.xlu0 %2151
    %vm2154 = vcmask 1044226
    %2155 = vst.msk [vmem:[#allocation3] sm:$0xc] %vm2154, %v2152
    %v2157 = vunpack.c.l.b16 %v2128
    %v2158 = vpack.c.b16 %v2157, %v2157
    %v2159 = vrot.slane %v2158, 6
    %2161 = vst.msk [vmem:[#allocation3 + $0x4] sm:$0xc] %vm2136, %v2159
    %2162 = vrot.lane.b32.xlu0 %v2158, 32
    %v2163 = vpop.permute.xlu0 %2162
    %2165 = vst.msk [vmem:[#allocation3 + $0x4] sm:$0xc] %vm2141, %v2163
    %v2166 = vunpack.c.h.b16 %v2128
    %v2167 = vpack.c.b16 %v2166, %v2166
    %v2168 = vrot.slane %v2167, 6
    %2169 = vrot.lane.b32.xlu0 %v2168, 64
    %v2170 = vpop.permute.xlu0 %2169
    %2172 = vst.msk [vmem:[#allocation3 + $0x4] sm:$0xc] %vm2149, %v2170
    %2173 = vrot.lane.b32.xlu0 %v2167, 96
    %v2174 = vpop.permute.xlu0 %2173
    %2176 = vst.msk [vmem:[#allocation3 + $0x4] sm:$0xc] %vm2154, %v2174
    %v2178 = vunpack.c.l.b16 %v2129
    %v2179 = vpack.c.b16 %v2178, %v2178
    %v2180 = vrot.slane %v2179, 6
    %2182 = vst.msk [vmem:[#allocation3 + $0x8] sm:$0xc] %vm2136, %v2180
    %2183 = vrot.lane.b32.xlu0 %v2179, 32
    %v2184 = vpop.permute.xlu0 %2183
    %2186 = vst.msk [vmem:[#allocation3 + $0x8] sm:$0xc] %vm2141, %v2184
    %v2187 = vunpack.c.h.b16 %v2129
    %v2188 = vpack.c.b16 %v2187, %v2187
    %v2189 = vrot.slane %v2188, 6
    %2190 = vrot.lane.b32.xlu0 %v2189, 64
    %v2191 = vpop.permute.xlu0 %2190
    %2193 = vst.msk [vmem:[#allocation3 + $0x8] sm:$0xc] %vm2149, %v2191
    %2194 = vrot.lane.b32.xlu0 %v2188, 96
    %v2195 = vpop.permute.xlu0 %2194
    %2197 = vst.msk [vmem:[#allocation3 + $0x8] sm:$0xc] %vm2154, %v2195
    %v2199 = vunpack.c.l.b16 %v2130
    %v2200 = vpack.c.b16 %v2199, %v2199
    %v2201 = vrot.slane %v2200, 6
    %2203 = vst.msk [vmem:[#allocation3 + $0xc] sm:$0xc] %vm2136, %v2201
    %2204 = vrot.lane.b32.xlu0 %v2200, 32
    %v2205 = vpop.permute.xlu0 %2204
    %2207 = vst.msk [vmem:[#allocation3 + $0xc] sm:$0xc] %vm2141, %v2205
    %v2208 = vunpack.c.h.b16 %v2130
    %v2209 = vpack.c.b16 %v2208, %v2208
    %v2210 = vrot.slane %v2209, 6
    %2211 = vrot.lane.b32.xlu0 %v2210, 64
    %v2212 = vpop.permute.xlu0 %2211
    %2214 = vst.msk [vmem:[#allocation3 + $0xc] sm:$0xc] %vm2149, %v2212
    %2215 = vrot.lane.b32.xlu0 %v2209, 96
    %v2216 = vpop.permute.xlu0 %2215
    %2218 = vst.msk [vmem:[#allocation3 + $0xc] sm:$0xc] %vm2154, %v2216
    %v2219 = vld [vmem:[#allocation3] sm:$0xff]
    %v2220 = vld [vmem:[#allocation3 + $0x8] sm:$0xff]
    %v2221 = vld [vmem:[%s9] sm:$0xf]
    %v2222 = vld [vmem:[%s9 + $0x4] sm:$0xf]
    %v2223 = vld [vmem:[%s9 + $0x8] sm:$0xf]
    %v2224 = vld [vmem:[%s9 + $0xc] sm:$0xf]
    %v2225 = vld [vmem:[%s9 + $0x10] sm:$0xf]
    %v2226 = vld [vmem:[%s9 + $0x14] sm:$0xf]
    %v2227 = vld [vmem:[%s9 + $0x18] sm:$0xf]
    %v2228 = vld [vmem:[%s9 + $0x1c] sm:$0xf]
    %v2229 = vld [vmem:[%s9 + $0x20] sm:$0xf]
    %v2230 = vld [vmem:[%s9 + $0x24] sm:$0xf]
    %v2231 = vld [vmem:[%s9 + $0x28] sm:$0xf]
    %v2232 = vld [vmem:[%s9 + $0x2c] sm:$0xf]
    %v2233 = vld [vmem:[%s9 + $0x30] sm:$0xf]
    %v2234 = vld [vmem:[%s9 + $0x34] sm:$0xf]
    %v2235 = vld [vmem:[%s9 + $0x38] sm:$0xf]
    %v2236 = vld [vmem:[%s9 + $0x3c] sm:$0xf]
    %v2237 = vld [vmem:[%s9 + $0x40] sm:$0xf]
    %v2238 = vld [vmem:[%s9 + $0x44] sm:$0xf]
    %v2239 = vld [vmem:[%s9 + $0x48] sm:$0xf]
    %v2240 = vld [vmem:[%s9 + $0x4c] sm:$0xf]
    %v2241 = vld [vmem:[%s9 + $0x50] sm:$0xf]
    %v2242 = vld [vmem:[%s9 + $0x54] sm:$0xf]
    %v2243 = vld [vmem:[%s9 + $0x58] sm:$0xf]
    %v2244 = vld [vmem:[%s9 + $0x5c] sm:$0xf]
    %v2245 = vld [vmem:[%s9 + $0x60] sm:$0xf]
    %v2246 = vld [vmem:[%s9 + $0x64] sm:$0xf]
    %v2247 = vld [vmem:[%s9 + $0x68] sm:$0xf]
    %v2248 = vld [vmem:[%s9 + $0x6c] sm:$0xf]
    %v2249 = vld [vmem:[%s9 + $0x70] sm:$0xf]
    %v2250 = vld [vmem:[%s9 + $0x74] sm:$0xf]
    %v2251 = vld [vmem:[%s9 + $0x78] sm:$0xf]
    %v2252 = vld [vmem:[%s9 + $0x7c] sm:$0xf]
    %v2253 = vld [vmem:[%s9 + $0x80] sm:$0xf]
    %v2254 = vld [vmem:[%s9 + $0x84] sm:$0xf]
    %v2255 = vld [vmem:[%s9 + $0x88] sm:$0xf]
    %v2256 = vld [vmem:[%s9 + $0x8c] sm:$0xf]
    %v2257 = vld [vmem:[%s9 + $0x90] sm:$0xf]
    %v2258 = vld [vmem:[%s9 + $0x94] sm:$0xf]
    %v2259 = vld [vmem:[%s9 + $0x98] sm:$0xf]
    %v2260 = vld [vmem:[%s9 + $0x9c] sm:$0xf]
    %v2261 = vld [vmem:[%s9 + $0xa0] sm:$0xf]
    %v2262 = vld [vmem:[%s9 + $0xa4] sm:$0xf]
    %v2263 = vld [vmem:[%s9 + $0xa8] sm:$0xf]
    %v2264 = vld [vmem:[%s9 + $0xac] sm:$0xf]
    %v2265 = vld [vmem:[%s9 + $0xb0] sm:$0xf]
    %v2266 = vld [vmem:[%s9 + $0xb4] sm:$0xf]
    %v2267 = vld [vmem:[%s9 + $0xb8] sm:$0xf]
    %v2268 = vld [vmem:[%s9 + $0xbc] sm:$0xf]
    %v2269 = vld [vmem:[%s9 + $0xc0] sm:$0xf]
    %v2270 = vld [vmem:[%s9 + $0xc4] sm:$0xf]
    %v2271 = vld [vmem:[%s9 + $0xc8] sm:$0xf]
    %v2272 = vld [vmem:[%s9 + $0xcc] sm:$0xf]
    %v2273 = vld [vmem:[%s9 + $0xd0] sm:$0xf]
    %v2274 = vld [vmem:[%s9 + $0xd4] sm:$0xf]
    %v2275 = vld [vmem:[%s9 + $0xd8] sm:$0xf]
    %v2276 = vld [vmem:[%s9 + $0xdc] sm:$0xf]
    %v2277 = vld [vmem:[%s9 + $0xe0] sm:$0xf]
    %v2278 = vld [vmem:[%s9 + $0xe4] sm:$0xf]
    %v2279 = vld [vmem:[%s9 + $0xe8] sm:$0xf]
    %v2280 = vld [vmem:[%s9 + $0xec] sm:$0xf]
    %v2281 = vld [vmem:[%s9 + $0xf0] sm:$0xf]
    %v2282 = vld [vmem:[%s9 + $0xf4] sm:$0xf]
    %v2283 = vld [vmem:[%s9 + $0xf8] sm:$0xf]
    %v2284 = vld [vmem:[%s9 + $0xfc] sm:$0xf]
    %v2287 = vunpack.c.l.b16 %v2219
    %v2288 = vunpack.c.h.b16 %v2219
    %v2289 = vunpack.c.l.b16 %v2220
    %v2290 = vunpack.c.h.b16 %v2220
    %v2291 = vpack.c.b16 %v2287, %v2287
    %v2292 = vpack.c.b16 %v2288, %v2288
    %v2293 = vpack.c.b16 %v2289, %v2289
    %v2294 = vpack.c.b16 %v2290, %v2290
    %v2363 = vunpack.c.l.b16 %v2221
    %v2364 = vunpack.c.l.b16 %v2222
    %v2365 = vunpack.c.l.b16 %v2223
    %v2366 = vunpack.c.l.b16 %v2224
    %v2367 = vunpack.c.l.b16 %v2225
    %v2368 = vunpack.c.l.b16 %v2226
    %v2369 = vunpack.c.l.b16 %v2227
    %v2370 = vunpack.c.l.b16 %v2228
    %v2371 = vunpack.c.l.b16 %v2229
    %v2372 = vunpack.c.l.b16 %v2230
    %v2373 = vunpack.c.l.b16 %v2231
    %v2374 = vunpack.c.l.b16 %v2232
    %v2375 = vunpack.c.l.b16 %v2233
    %v2376 = vunpack.c.l.b16 %v2234
    %v2377 = vunpack.c.l.b16 %v2235
    %v2378 = vunpack.c.l.b16 %v2236
    %v2379 = vunpack.c.l.b16 %v2237
    %v2380 = vunpack.c.l.b16 %v2238
    %v2381 = vunpack.c.l.b16 %v2239
    %v2382 = vunpack.c.l.b16 %v2240
    %v2383 = vunpack.c.l.b16 %v2241
    %v2384 = vunpack.c.l.b16 %v2242
    %v2385 = vunpack.c.l.b16 %v2243
    %v2386 = vunpack.c.l.b16 %v2244
    %v2387 = vunpack.c.l.b16 %v2245
    %v2388 = vunpack.c.l.b16 %v2246
    %v2389 = vunpack.c.l.b16 %v2247
    %v2390 = vunpack.c.l.b16 %v2248
    %v2391 = vunpack.c.l.b16 %v2249
    %v2392 = vunpack.c.l.b16 %v2250
    %v2393 = vunpack.c.l.b16 %v2251
    %v2394 = vunpack.c.l.b16 %v2252
    %v2395 = vunpack.c.l.b16 %v2253
    %v2396 = vunpack.c.l.b16 %v2254
    %v2397 = vunpack.c.l.b16 %v2255
    %v2398 = vunpack.c.l.b16 %v2256
    %v2399 = vunpack.c.l.b16 %v2257
    %v2400 = vunpack.c.l.b16 %v2258
    %v2401 = vunpack.c.l.b16 %v2259
    %v2402 = vunpack.c.l.b16 %v2260
    %v2403 = vunpack.c.l.b16 %v2261
    %v2404 = vunpack.c.l.b16 %v2262
    %v2405 = vunpack.c.l.b16 %v2263
    %v2406 = vunpack.c.l.b16 %v2264
    %v2407 = vunpack.c.l.b16 %v2265
    %v2408 = vunpack.c.l.b16 %v2266
    %v2409 = vunpack.c.l.b16 %v2267
    %v2410 = vunpack.c.l.b16 %v2268
    %v2411 = vunpack.c.l.b16 %v2269
    %v2412 = vunpack.c.l.b16 %v2270
    %v2413 = vunpack.c.l.b16 %v2271
    %v2414 = vunpack.c.l.b16 %v2272
    %v2415 = vunpack.c.l.b16 %v2273
    %v2416 = vunpack.c.l.b16 %v2274
    %v2417 = vunpack.c.l.b16 %v2275
    %v2418 = vunpack.c.l.b16 %v2276
    %v2419 = vunpack.c.l.b16 %v2277
    %v2420 = vunpack.c.l.b16 %v2278
    %v2421 = vunpack.c.l.b16 %v2279
    %v2422 = vunpack.c.l.b16 %v2280
    %v2423 = vunpack.c.l.b16 %v2281
    %v2424 = vunpack.c.l.b16 %v2282
    %v2425 = vunpack.c.l.b16 %v2283
    %v2426 = vunpack.c.l.b16 %v2284
    %v2427 = vpack.c.b16 %v2364, %v2363
    %v2428 = vpack.c.b16 %v2366, %v2365
    %v2429 = vpack.c.b16 %v2368, %v2367
    %v2430 = vpack.c.b16 %v2370, %v2369
    %v2431 = vpack.c.b16 %v2372, %v2371
    %v2432 = vpack.c.b16 %v2374, %v2373
    %v2433 = vpack.c.b16 %v2376, %v2375
    %v2434 = vpack.c.b16 %v2378, %v2377
    %v2435 = vpack.c.b16 %v2380, %v2379
    %v2436 = vpack.c.b16 %v2382, %v2381
    %v2437 = vpack.c.b16 %v2384, %v2383
    %v2438 = vpack.c.b16 %v2386, %v2385
    %v2439 = vpack.c.b16 %v2388, %v2387
    %v2440 = vpack.c.b16 %v2390, %v2389
    %v2441 = vpack.c.b16 %v2392, %v2391
    %v2442 = vpack.c.b16 %v2394, %v2393
    %v2443 = vpack.c.b16 %v2396, %v2395
    %v2444 = vpack.c.b16 %v2398, %v2397
    %v2445 = vpack.c.b16 %v2400, %v2399
    %v2446 = vpack.c.b16 %v2402, %v2401
    %v2447 = vpack.c.b16 %v2404, %v2403
    %v2448 = vpack.c.b16 %v2406, %v2405
    %v2449 = vpack.c.b16 %v2408, %v2407
    %v2450 = vpack.c.b16 %v2410, %v2409
    %v2451 = vpack.c.b16 %v2412, %v2411
    %v2452 = vpack.c.b16 %v2414, %v2413
    %v2453 = vpack.c.b16 %v2416, %v2415
    %v2454 = vpack.c.b16 %v2418, %v2417
    %v2455 = vpack.c.b16 %v2420, %v2419
    %v2456 = vpack.c.b16 %v2422, %v2421
    %v2457 = vpack.c.b16 %v2424, %v2423
    %v2458 = vpack.c.b16 %v2426, %v2425
    %2491 = vmatprep.subr.bf16.mxu0 0
    %2492 = vmatpush1.bf16.msra.mxu0 %v2427
    %2493 = vmatprep.subr.bf16.mxu0 0
    %2494 = vmatpush1.bf16.msra.mxu0 %v2428
    %2495 = vmatprep.subr.bf16.mxu0 0
    %2496 = vmatpush1.bf16.msra.mxu0 %v2429
    %2497 = vmatprep.subr.bf16.mxu0 0
    %2498 = vmatpush1.bf16.msra.mxu0 %v2430
    %2499 = vmatprep.subr.bf16.mxu0 0
    %2500 = vmatpush1.bf16.msra.mxu0 %v2431
    %2501 = vmatprep.subr.bf16.mxu0 0
    %2502 = vmatpush1.bf16.msra.mxu0 %v2432
    %2503 = vmatprep.subr.bf16.mxu0 0
    %2504 = vmatpush1.bf16.msra.mxu0 %v2433
    %2505 = vmatprep.subr.bf16.mxu0 0
    %2506 = vmatpush1.bf16.msra.mxu0 %v2434
    %2507 = vmatprep.subr.bf16.mxu0 0
    %2508 = vmatpush1.bf16.msra.mxu0 %v2435
    %2509 = vmatprep.subr.bf16.mxu0 0
    %2510 = vmatpush1.bf16.msra.mxu0 %v2436
    %2511 = vmatprep.subr.bf16.mxu0 0
    %2512 = vmatpush1.bf16.msra.mxu0 %v2437
    %2513 = vmatprep.subr.bf16.mxu0 0
    %2514 = vmatpush1.bf16.msra.mxu0 %v2438
    %2515 = vmatprep.subr.bf16.mxu0 0
    %2516 = vmatpush1.bf16.msra.mxu0 %v2439
    %2517 = vmatprep.subr.bf16.mxu0 0
    %2518 = vmatpush1.bf16.msra.mxu0 %v2440
    %2519 = vmatprep.subr.bf16.mxu0 0
    %2520 = vmatpush1.bf16.msra.mxu0 %v2441
    %2521 = vmatprep.subr.bf16.mxu0 0
    %2522 = vmatpush1.bf16.msra.mxu0 %v2442
    %2523 = vmatprep.mubr.bf16.mxu0 %v2292
    %2524 = vmatmul.mubr.bf16.gmra.mrb[0].mxu0 %v2291
    %v2525 = vpop.f32.mrb[0].mxu0
    %v2526 = vadd.f32 0.0, %v2525
    %v2527 = vpop.f32.mrb[0].mxu0
    %v2528 = vpop.f32.mrb[0].mxu0
    %v2529 = vpop.f32.mrb[0].mxu0
    %2530 = vdwg.mxu0
    %2531 = vmatprep.subr.bf16.mxu0 0
    %2532 = vmatpush1.bf16.msra.mxu0 %v2443
    %2533 = vmatprep.subr.bf16.mxu0 0
    %2534 = vmatpush1.bf16.msra.mxu0 %v2444
    %2535 = vmatprep.subr.bf16.mxu0 0
    %2536 = vmatpush1.bf16.msra.mxu0 %v2445
    %2537 = vmatprep.subr.bf16.mxu0 0
    %2538 = vmatpush1.bf16.msra.mxu0 %v2446
    %2539 = vmatprep.subr.bf16.mxu0 0
    %2540 = vmatpush1.bf16.msra.mxu0 %v2447
    %2541 = vmatprep.subr.bf16.mxu0 0
    %2542 = vmatpush1.bf16.msra.mxu0 %v2448
    %2543 = vmatprep.subr.bf16.mxu0 0
    %2544 = vmatpush1.bf16.msra.mxu0 %v2449
    %2545 = vmatprep.subr.bf16.mxu0 0
    %2546 = vmatpush1.bf16.msra.mxu0 %v2450
    %2547 = vmatprep.subr.bf16.mxu0 0
    %2548 = vmatpush1.bf16.msra.mxu0 %v2451
    %2549 = vmatprep.subr.bf16.mxu0 0
    %2550 = vmatpush1.bf16.msra.mxu0 %v2452
    %2551 = vmatprep.subr.bf16.mxu0 0
    %2552 = vmatpush1.bf16.msra.mxu0 %v2453
    %2553 = vmatprep.subr.bf16.mxu0 0
    %2554 = vmatpush1.bf16.msra.mxu0 %v2454
    %2555 = vmatprep.subr.bf16.mxu0 0
    %2556 = vmatpush1.bf16.msra.mxu0 %v2455
    %2557 = vmatprep.subr.bf16.mxu0 0
    %2558 = vmatpush1.bf16.msra.mxu0 %v2456
    %2559 = vmatprep.subr.bf16.mxu0 0
    %2560 = vmatpush1.bf16.msra.mxu0 %v2457
    %2561 = vmatprep.subr.bf16.mxu0 0
    %2562 = vmatpush1.bf16.msra.mxu0 %v2458
    %2563 = vmatprep.mubr.bf16.mxu0 %v2294
    %2564 = vmatmul.mubr.bf16.gmra.mrb[0].mxu0 %v2293
    %v2565 = vpop.f32.mrb[0].mxu0
    %v2566 = vadd.f32 %v2526, %v2565
    %v2567 = vpop.f32.mrb[0].mxu0
    %v2568 = vpop.f32.mrb[0].mxu0
    %v2569 = vpop.f32.mrb[0].mxu0
    %2570 = vdwg.mxu0
    %v2571 = vld [vmem:[%s10] sm:$0x1]
    %v2572 = vld [vmem:[%s11] sm:$0x1]
    %v2573 = vrot.slane %v2566, 4
    %v2574 = vadd.f32 %v2566, %v2573
    %v2575 = vrot.slane %v2574, 2
    %v2576 = vadd.f32 %v2574, %v2575
    %v2577 = vrot.slane %v2576, 1
    %v2578 = vadd.f32 %v2576, %v2577
    %v2579 = vmul.f32 %v2566, %v2566
    %v2580 = vrot.slane %v2579, 4
    %v2581 = vadd.f32 %v2579, %v2580
    %v2582 = vrot.slane %v2581, 2
    %v2583 = vadd.f32 %v2581, %v2582
    %v2584 = vrot.slane %v2583, 1
    %v2585 = vadd.f32 %v2583, %v2584
    %v2586 = vmul.f32 %v2578, 0.125
    %v2587 = vmul.f32 %v2585, 0.125
    %v2588 = vmul.f32 %v2586, %v2586
    %v2589 = vsub.f32 %v2587, %v2588
    %v2590 = vmax.f32 %v2589, 0.0
    %v2591 = vadd.f32 %v2590, 1e-05
    %v2592 = vrsqrt.pop %v2591
    %v2593 = vmul.f32 %v2571, %v2592
    %v2594 = vmul.f32 %v2586, %v2593
    %v2595 = vsub.f32 %v2572, %v2594
    %v2597 = vlaneseq
    %v2598 = vshrl.u32 %v2597, 7
    %v2599 = vsub.s32 0, %v2598
    %v2600 = vrot.slane %v2593, %v2599
    %v2602 = vmul.f32 %v2566, %v2600
    %v2604 = vlaneseq
    %v2605 = vshrl.u32 %v2604, 7
    %v2606 = vsub.s32 0, %v2605
    %v2607 = vrot.slane %v2595, %v2606
    %v2609 = vadd.f32 %v2602, %v2607
    %vm2610 = vcmp.ge.f32.partialorder %v2609, 0.0
    %v2611 = vmul.f32 %v2609, 0.01
    %v2612 = vsel %vm2610, %v2609, %v2611
    %2613 = vst [vmem:[#allocation4] sm:$0xff] %v2612
    // Predicated region
    $region50: #{dcgan_sn_discriminator.1} parent=1 // pred_check
      _
    $region51: #{dcgan_sn_discriminator.1} parent=1 // pred_check_branch
      %2615 = sbr.rel (0) target = $region53
    $region52: #{dcgan_sn_discriminator.1} parent=1 // pred_region
      %s2617 = ssub.s32 128, 128
      %2618 = vsyncadd [#allocation5], %s2617
      %s2620 = sshll.u32 [#allocation4], 4
      %s2621 = int_to_ptr.vmem [resolvable:$true] %s2620
      %2623 = dma.vmem_to_hbm [thread:$0]  %s2621, 128, %s12, [#allocation5]
    $region53: #{dcgan_sn_discriminator.1} parent=1 // pred_fallthru
      _
    // Predicated region
    $region54: #{dcgan_sn_discriminator.1} parent=1 // pred_check
      _
    $region55: #{dcgan_sn_discriminator.1} parent=1 // pred_check_branch
      %2625 = sbr.rel (0) target = $region57
    $region56: #{dcgan_sn_discriminator.1} parent=1 // pred_region
      %2626 = dma.done [#allocation5], 128
    $region57: #{dcgan_sn_discriminator.1} parent=1 // pred_fallthru
      _
    %2627 = vsyncpa [#allocation5], 1

</llo_original>
